<compile_context>
chip_gen: v7x
topology: tpu7x:2x2x1
jax: 0.10.0
libtpu: 0.0.40
codegen_flags: <defaults>
</compile_context>

<pallas_src>
import functools

import jax
import jax.numpy as jnp
from jax.experimental import pallas as pl
from jax.experimental.pallas import tpu as pltpu


def seq2seq_kernel(x_ref,
                   wih_e_ref, whh_e_ref, bgx_e_ref, bghn_e_ref,
                   wih_d_ref, wcomb_d_ref, bgx_d_ref, bghn_d_ref, bfold_ref,
                   wreg_ref, breg_ref,
                   out_ref, h_scratch, *, input_len, target_len, batch):
    """x_ref: (L*B, F) time-major rows (row = t*B + b). out_ref: (target_len*B, Fp).

    Fused-gate GRU cell math (PyTorch gate order r, z, n), gate blocks padded to Hp:
      gx = x @ Wih_f + b_gx        (b_gx already contains b_hr/b_hz folded in)
      gh = h @ Whh_f
      r = sigmoid(gx_r + gh_r); z = sigmoid(gx_z + gh_z)
      n = tanh(gx_n + r * (gh_n + b_hn))
      h' = n + z * (h - n)
    """
    B = batch
    Hp = whh_e_ref.shape[0]          # padded hidden width (multiple of 128)

    def gru_gates(gx, gh, bghn_b, h):
        r = jax.nn.sigmoid(gx[:, 0:Hp] + gh[:, 0:Hp])
        z = jax.nn.sigmoid(gx[:, Hp:2 * Hp] + gh[:, Hp:2 * Hp])
        n = jnp.tanh(gx[:, 2 * Hp:3 * Hp] + r * (gh[:, 2 * Hp:3 * Hp] + bghn_b))
        return n + z * (h - n)       # == (1-z)*n + z*h with one fewer VPU op

    # ---- Hoisted bias broadcasts (JAX does not CSE broadcast_in_dim). ----
    bghn_e_b = jnp.broadcast_to(bghn_e_ref[...], (B, Hp))
    bghn_d_b = jnp.broadcast_to(bghn_d_ref[...], (B, Hp))
    bfold_b = jnp.broadcast_to(bfold_ref[...], (B, 3 * Hp))

    # ---- Off-critical-path work: all encoder input-side projections in ONE wide
    # matmul, plus the decoder's step-0 input projection (depends only on X). ----
    gx_enc = jnp.dot(x_ref[0:input_len * B, :], wih_e_ref[...],
                     preferred_element_type=jnp.float32) + bgx_e_ref[...]
    dec_in = x_ref[(input_len - 1) * B:input_len * B, :]       # source_seq[:, -1, :]
    gx0 = jnp.dot(dec_in, wih_d_ref[...],
                  preferred_element_type=jnp.float32) + bgx_d_ref[...]

    # ---- Encoder recurrence: only the hidden-side matmul is serial. ----
    # TODO(synk): for non-toy input_len/target_len switch these unrolled Python
    #             loops to lax.fori_loop over a VMEM-resident gx_enc scratch.
    h = jnp.zeros((B, Hp), jnp.float32)
    for t in range(input_len):
        gh = jnp.dot(h, whh_e_ref[...], preferred_element_type=jnp.float32)
        h = gru_gates(gx_enc[t * B:(t + 1) * B, :], gh, bghn_e_b, h)

    # ---- Decoder: autoregressive loop (eval mode => teacher forcing prob == 0).
    # One fused matmul per step: h_{i-1} @ [Whh_d | Wfold] gives both
    #   gh_i  = h_{i-1} @ Whh_d            (cols 0:3Hp)
    #   gx_i  = h_{i-1} @ Wfold + bfold    (cols 3Hp:6Hp, i >= 1; i == 0 uses gx0)
    # where Wfold = Wreg @ Wih_d folds the regression Linear out of the chain. ----
    # TODO(synk): torch.rand()-based teacher forcing during training is stochastic
    #             host-side control flow; only the deterministic eval path is implemented.
    for i in range(target_len):
        hw = jnp.dot(h, wcomb_d_ref[...], preferred_element_type=jnp.float32)
        gh = hw[:, 0:3 * Hp]
        gx = gx0 if i == 0 else hw[:, 3 * Hp:6 * Hp] + bfold_b
        h = gru_gates(gx, gh, bghn_d_b, h)
        h_scratch[i * B:(i + 1) * B, :] = h

    # Batched regression over all decoder hidden states + one lane-dense write.
    out_ref[...] = jnp.dot(h_scratch[...], wreg_ref[...],
                           preferred_element_type=jnp.float32) + breg_ref[...]


def encoder_decoder_forward(X, params, *, input_len, target_len):
    B, L, F = X.shape
    assert L == input_len + target_len
    H = params["whh_e"].shape[-1]
    Hp = ((H + 127) // 128) * 128            # pad every gate block to 128 lanes
    Fp = ((F + 127) // 128) * 128            # lane-dense output width

    def pad_c(a, w):                         # zero-pad last dim to width w
        return jnp.pad(a, ((0, 0), (0, w - a.shape[-1])))

    def pad_r(a, h):                         # zero-pad first dim to height h
        return jnp.pad(a, ((0, h - a.shape[0]), (0, 0)))

    def fuse_w(w):    # (3, In, H) gate-stacked -> (In, 3*Hp), columns r | z | n
        return jnp.concatenate([pad_c(w[0], Hp), pad_c(w[1], Hp), pad_c(w[2], Hp)],
                               axis=1)

    def fuse_bias(bih, bhh):
        # r/z hidden-side biases folded into the input-side bias; the n-gate
        # hidden bias must stay separate because of the r * (W_hn h + b_hn) term.
        return jnp.concatenate([pad_c(bih[0] + bhh[0], Hp),
                                pad_c(bih[1] + bhh[1], Hp),
                                pad_c(bih[2], Hp)], axis=1)

    # Encoder weights (gate-fused, 128-padded).
    wih_e_f = fuse_w(params["wih_e"])                       # (F, 3Hp)
    whh_e_f = pad_r(fuse_w(params["whh_e"]), Hp)            # (Hp, 3Hp)
    bgx_e = fuse_bias(params["bih_e"], params["bhh_e"])     # (1, 3Hp)
    bghn_e = pad_c(params["bhh_e"][2], Hp)                  # (1, Hp)

    # Decoder weights.
    wih_d_f = fuse_w(params["wih_d"])                       # (F, 3Hp)
    whh_d_f = pad_r(fuse_w(params["whh_d"]), Hp)            # (Hp, 3Hp)
    bgx_d = fuse_bias(params["bih_d"], params["bhh_d"])     # (1, 3Hp)
    bghn_d = pad_c(params["bhh_d"][2], Hp)                  # (1, Hp)

    wreg, breg = params["wreg"], params["breg"]             # (H, F), (1, F)
    # Fold the per-step regression Linear out of the autoregressive chain and
    # concatenate it with Whh_d so the decoder does ONE matmul per step.
    wfold = pad_r(jnp.dot(wreg, wih_d_f), Hp)               # (Hp, 3Hp)
    bfold = jnp.dot(breg, wih_d_f) + bgx_d                  # (1, 3Hp)
    wcomb_d = jnp.concatenate([whh_d_f, wfold], axis=1)     # (Hp, 6Hp)

    # Lane-dense regression head for the final batched output matmul.
    wreg_p = pad_c(pad_r(wreg, Hp), Fp)                     # (Hp, Fp)
    breg_p = pad_c(breg, Fp)                                # (1, Fp)

    # Pad batch to a sublane multiple (8) and lay X out time-major 2-D so every
    # in-kernel slice is a contiguous, sublane-aligned row block.
    B_pad = max(8, ((B + 7) // 8) * 8)
    Xp = jnp.pad(X, ((0, B_pad - B), (0, 0), (0, 0)))
    X2d = jnp.transpose(Xp, (1, 0, 2)).reshape(L * B_pad, F)   # row = t*B_pad + b

    kernel = functools.partial(seq2seq_kernel, input_len=input_len,
                               target_len=target_len, batch=B_pad)
    args = (X2d,
            wih_e_f, whh_e_f, bgx_e, bghn_e,
            wih_d_f, wcomb_d, bgx_d, bghn_d, bfold,
            wreg_p, breg_p)
    out2d = pl.pallas_call(
        kernel,
        out_shape=jax.ShapeDtypeStruct((target_len * B_pad, Fp), jnp.float32),
        in_specs=[pl.BlockSpec(memory_space=pltpu.MemorySpace.VMEM) for _ in args],
        out_specs=pl.BlockSpec(memory_space=pltpu.MemorySpace.VMEM),
        scratch_shapes=[pltpu.VMEM((target_len * B_pad, Hp), jnp.float32)],
        compiler_params=pltpu.CompilerParams(vmem_limit_bytes=32 * 1024 * 1024),
    )(*args)
    out = out2d.reshape(target_len, B_pad, Fp).transpose(1, 0, 2)   # (B_pad, T, Fp)
    return out[:B, :, :F]


def init_params(key, n_features, hidden_dim):
    """Deterministic synthetic parameters, PyTorch-style uniform(-1/sqrt(H), 1/sqrt(H))."""
    F, H = n_features, hidden_dim
    bound = 1.0 / float(jnp.sqrt(jnp.float32(H)))
    keys = jax.random.split(key, 10)

    def u(k, shape):
        return jax.random.uniform(k, shape, jnp.float32, -bound, bound)

    return dict(
        # encoder GRU
        wih_e=u(keys[0], (3, F, H)),
        whh_e=u(keys[1], (3, H, H)),
        bih_e=u(keys[2], (3, 1, H)),
        bhh_e=u(keys[3], (3, 1, H)),
        # decoder GRU
        wih_d=u(keys[4], (3, F, H)),
        whh_d=u(keys[5], (3, H, H)),
        bih_d=u(keys[6], (3, 1, H)),
        bhh_d=u(keys[7], (3, 1, H)),
        # decoder regression Linear(H -> F)
        wreg=u(keys[8], (H, F)),
        breg=u(keys[9], (1, F)),
    )


def reference_forward(X, params, *, input_len, target_len):
    """Pure-JAX reference of the same forward (for correctness check), unfused math."""
    B, L, F = X.shape
    H = params["whh_e"].shape[-1]

    def gru(x, h, wih, whh, bih, bhh):
        r = jax.nn.sigmoid(x @ wih[0] + bih[0] + h @ whh[0] + bhh[0])
        z = jax.nn.sigmoid(x @ wih[1] + bih[1] + h @ whh[1] + bhh[1])
        n = jnp.tanh(x @ wih[2] + bih[2] + r * (h @ whh[2] + bhh[2]))
        return (1.0 - z) * n + z * h

    h = jnp.zeros((B, H), jnp.float32)
    for t in range(input_len):
        h = gru(X[:, t, :], h, params["wih_e"], params["whh_e"],
                params["bih_e"], params["bhh_e"])
    dec_in = X[:, input_len - 1, :]
    outs = []
    for _ in range(target_len):
        h = gru(dec_in, h, params["wih_d"], params["whh_d"],
                params["bih_d"], params["bhh_d"])
        out = h @ params["wreg"] + params["breg"]
        outs.append(out)
        dec_in = out
    return jnp.stack(outs, axis=1)


if __name__ == "__main__":
    B, F, H = 2, 4, 32
    input_len, target_len = 8, 8

    key = jax.random.PRNGKey(0)
    kx, kp = jax.random.split(key)
    X = jax.random.normal(kx, (B, input_len + target_len, F), dtype=jnp.float32)
    params = init_params(kp, F, H)

    out = encoder_decoder_forward(X, params, input_len=input_len, target_len=target_len)
    out = jax.block_until_ready(out)

    ref = reference_forward(X, params, input_len=input_len, target_len=target_len)
    assert out.shape == (B, target_len, F), out.shape
    # The Wreg fold (Wreg @ Wih_d precomputed, concatenated with Whh_d) re-associates
    # f32 matmuls, so allow a slightly looser tolerance than exact-order f32 while
    # still catching semantic bugs.  Zero-padded gate columns / hidden lanes stay
    # exactly zero and do not change the math.
    err = jnp.max(jnp.abs(out - ref))
    assert jnp.allclose(out, ref, rtol=1e-4, atol=1e-4), f"mismatch vs reference, max abs err {err}"

    print("KERNEL_OK")
</pallas_src>

<mosaic_0001>
module attributes {stable_mosaic.version = 11 : i64} {
  func.func @seq2seq_kernel(%arg0: memref<128x4xf32, #tpu.memory_space<vmem>>, %arg1: memref<4x384xf32, #tpu.memory_space<vmem>>, %arg2: memref<128x384xf32, #tpu.memory_space<vmem>>, %arg3: memref<1x384xf32, #tpu.memory_space<vmem>>, %arg4: memref<1x128xf32, #tpu.memory_space<vmem>>, %arg5: memref<4x384xf32, #tpu.memory_space<vmem>>, %arg6: memref<128x768xf32, #tpu.memory_space<vmem>>, %arg7: memref<1x384xf32, #tpu.memory_space<vmem>>, %arg8: memref<1x128xf32, #tpu.memory_space<vmem>>, %arg9: memref<1x384xf32, #tpu.memory_space<vmem>>, %arg10: memref<128x128xf32, #tpu.memory_space<vmem>>, %arg11: memref<1x128xf32, #tpu.memory_space<vmem>>, %arg12: memref<64x128xf32, #tpu.memory_space<vmem>>, %arg13: memref<64x128xf32, #tpu.memory_space<vmem>>) attributes {dimension_semantics = [], scalar_prefetch = 0 : i64, scratch_operands = 1 : i64, tpu.core_type = #tpu.core_type<tc>} {
    %c0 = arith.constant 0 : index
    %c0_0 = arith.constant 0 : index
    %0 = vector.load %arg4[%c0, %c0_0] : memref<1x128xf32, #tpu.memory_space<vmem>>, vector<1x128xf32>
    %1 = vector.shape_cast %0 : vector<1x128xf32> to vector<1x128xf32>
    %2 = vector.broadcast %1 : vector<1x128xf32> to vector<8x128xf32>
    %c0_1 = arith.constant 0 : index
    %c0_2 = arith.constant 0 : index
    %3 = vector.load %arg8[%c0_1, %c0_2] : memref<1x128xf32, #tpu.memory_space<vmem>>, vector<1x128xf32>
    %4 = vector.shape_cast %3 : vector<1x128xf32> to vector<1x128xf32>
    %5 = vector.broadcast %4 : vector<1x128xf32> to vector<8x128xf32>
    %c0_3 = arith.constant 0 : index
    %c0_4 = arith.constant 0 : index
    %6 = vector.load %arg9[%c0_3, %c0_4] : memref<1x384xf32, #tpu.memory_space<vmem>>, vector<1x384xf32>
    %7 = vector.shape_cast %6 : vector<1x384xf32> to vector<1x384xf32>
    %8 = vector.broadcast %7 : vector<1x384xf32> to vector<8x384xf32>
    %c0_5 = arith.constant 0 : index
    %c0_6 = arith.constant 0 : index
    %9 = vector.load %arg0[%c0_5, %c0_6] : memref<128x4xf32, #tpu.memory_space<vmem>>, vector<64x4xf32>
    %c0_7 = arith.constant 0 : index
    %c0_8 = arith.constant 0 : index
    %10 = vector.load %arg1[%c0_7, %c0_8] : memref<4x384xf32, #tpu.memory_space<vmem>>, vector<4x384xf32>
    %cst = arith.constant dense<0.000000e+00> : vector<64x384xf32>
    %11 = tpu.matmul %9, %10, %cst {dimension_numbers = #tpu.dot_dimension_numbers<[1], [0], [0], [1], [0, 0, 1, 1], [], []>} : vector<64x4xf32>, vector<4x384xf32>, vector<64x384xf32> -> vector<64x384xf32>
    %c0_9 = arith.constant 0 : index
    %c0_10 = arith.constant 0 : index
    %12 = vector.load %arg3[%c0_9, %c0_10] : memref<1x384xf32, #tpu.memory_space<vmem>>, vector<1x384xf32>
    %13 = vector.broadcast %12 : vector<1x384xf32> to vector<64x384xf32>
    %14 = arith.addf %11, %13 : vector<64x384xf32>
    %c56 = arith.constant 56 : index
    %c0_11 = arith.constant 0 : index
    %15 = vector.load %arg0[%c56, %c0_11] : memref<128x4xf32, #tpu.memory_space<vmem>>, vector<8x4xf32>
    %c0_12 = arith.constant 0 : index
    %c0_13 = arith.constant 0 : index
    %16 = vector.load %arg5[%c0_12, %c0_13] : memref<4x384xf32, #tpu.memory_space<vmem>>, vector<4x384xf32>
    %cst_14 = arith.constant dense<0.000000e+00> : vector<8x384xf32>
    %17 = tpu.matmul %15, %16, %cst_14 {dimension_numbers = #tpu.dot_dimension_numbers<[1], [0], [0], [1], [0, 0, 1, 1], [], []>} : vector<8x4xf32>, vector<4x384xf32>, vector<8x384xf32> -> vector<8x384xf32>
    %c0_15 = arith.constant 0 : index
    %c0_16 = arith.constant 0 : index
    %18 = vector.load %arg7[%c0_15, %c0_16] : memref<1x384xf32, #tpu.memory_space<vmem>>, vector<1x384xf32>
    %19 = vector.broadcast %18 : vector<1x384xf32> to vector<8x384xf32>
    %20 = arith.addf %17, %19 : vector<8x384xf32>
    %cst_17 = arith.constant 0.000000e+00 : f32
    %21 = vector.broadcast %cst_17 : f32 to vector<8x128xf32>
    %c0_18 = arith.constant 0 : index
    %c0_19 = arith.constant 0 : index
    %22 = vector.load %arg2[%c0_18, %c0_19] : memref<128x384xf32, #tpu.memory_space<vmem>>, vector<128x384xf32>
    %cst_20 = arith.constant dense<0.000000e+00> : vector<8x384xf32>
    %23 = tpu.matmul %21, %22, %cst_20 {dimension_numbers = #tpu.dot_dimension_numbers<[1], [0], [0], [1], [0, 0, 1, 1], [], []>} : vector<8x128xf32>, vector<128x384xf32>, vector<8x384xf32> -> vector<8x384xf32>
    %24 = vector.extract_strided_slice %14 {offsets = [0, 0], sizes = [8, 384], strides = [1, 1]} : vector<64x384xf32> to vector<8x384xf32>
    %25 = vector.extract_strided_slice %24 {offsets = [0, 0], sizes = [8, 128], strides = [1, 1]} : vector<8x384xf32> to vector<8x128xf32>
    %26 = vector.extract_strided_slice %23 {offsets = [0, 0], sizes = [8, 128], strides = [1, 1]} : vector<8x384xf32> to vector<8x128xf32>
    %27 = arith.addf %25, %26 : vector<8x128xf32>
    %28 = arith.negf %27 : vector<8x128xf32>
    %29 = math.exp %28 : vector<8x128xf32>
    %cst_21 = arith.constant 1.000000e+00 : f32
    %30 = vector.broadcast %cst_21 : f32 to vector<8x128xf32>
    %31 = arith.addf %30, %29 : vector<8x128xf32>
    %32 = arith.divf %30, %31 : vector<8x128xf32>
    %33 = vector.extract_strided_slice %24 {offsets = [0, 128], sizes = [8, 128], strides = [1, 1]} : vector<8x384xf32> to vector<8x128xf32>
    %34 = vector.extract_strided_slice %23 {offsets = [0, 128], sizes = [8, 128], strides = [1, 1]} : vector<8x384xf32> to vector<8x128xf32>
    %35 = arith.addf %33, %34 : vector<8x128xf32>
    %36 = arith.negf %35 : vector<8x128xf32>
    %37 = math.exp %36 : vector<8x128xf32>
    %cst_22 = arith.constant 1.000000e+00 : f32
    %38 = vector.broadcast %cst_22 : f32 to vector<8x128xf32>
    %39 = arith.addf %38, %37 : vector<8x128xf32>
    %40 = arith.divf %38, %39 : vector<8x128xf32>
    %41 = vector.extract_strided_slice %24 {offsets = [0, 256], sizes = [8, 128], strides = [1, 1]} : vector<8x384xf32> to vector<8x128xf32>
    %42 = vector.extract_strided_slice %23 {offsets = [0, 256], sizes = [8, 128], strides = [1, 1]} : vector<8x384xf32> to vector<8x128xf32>
    %43 = arith.addf %42, %2 : vector<8x128xf32>
    %44 = arith.mulf %32, %43 : vector<8x128xf32>
    %45 = arith.addf %41, %44 : vector<8x128xf32>
    %46 = math.tanh %45 : vector<8x128xf32>
    %47 = arith.subf %21, %46 : vector<8x128xf32>
    %48 = arith.mulf %40, %47 : vector<8x128xf32>
    %49 = arith.addf %46, %48 : vector<8x128xf32>
    %c0_23 = arith.constant 0 : index
    %c0_24 = arith.constant 0 : index
    %50 = vector.load %arg2[%c0_23, %c0_24] : memref<128x384xf32, #tpu.memory_space<vmem>>, vector<128x384xf32>
    %cst_25 = arith.constant dense<0.000000e+00> : vector<8x384xf32>
    %51 = tpu.matmul %49, %50, %cst_25 {dimension_numbers = #tpu.dot_dimension_numbers<[1], [0], [0], [1], [0, 0, 1, 1], [], []>} : vector<8x128xf32>, vector<128x384xf32>, vector<8x384xf32> -> vector<8x384xf32>
    %52 = vector.extract_strided_slice %14 {offsets = [8, 0], sizes = [8, 384], strides = [1, 1]} : vector<64x384xf32> to vector<8x384xf32>
    %53 = vector.extract_strided_slice %52 {offsets = [0, 0], sizes = [8, 128], strides = [1, 1]} : vector<8x384xf32> to vector<8x128xf32>
    %54 = vector.extract_strided_slice %51 {offsets = [0, 0], sizes = [8, 128], strides = [1, 1]} : vector<8x384xf32> to vector<8x128xf32>
    %55 = arith.addf %53, %54 : vector<8x128xf32>
    %56 = arith.negf %55 : vector<8x128xf32>
    %57 = math.exp %56 : vector<8x128xf32>
    %cst_26 = arith.constant 1.000000e+00 : f32
    %58 = vector.broadcast %cst_26 : f32 to vector<8x128xf32>
    %59 = arith.addf %58, %57 : vector<8x128xf32>
    %60 = arith.divf %58, %59 : vector<8x128xf32>
    %61 = vector.extract_strided_slice %52 {offsets = [0, 128], sizes = [8, 128], strides = [1, 1]} : vector<8x384xf32> to vector<8x128xf32>
    %62 = vector.extract_strided_slice %51 {offsets = [0, 128], sizes = [8, 128], strides = [1, 1]} : vector<8x384xf32> to vector<8x128xf32>
    %63 = arith.addf %61, %62 : vector<8x128xf32>
    %64 = arith.negf %63 : vector<8x128xf32>
    %65 = math.exp %64 : vector<8x128xf32>
    %cst_27 = arith.constant 1.000000e+00 : f32
    %66 = vector.broadcast %cst_27 : f32 to vector<8x128xf32>
    %67 = arith.addf %66, %65 : vector<8x128xf32>
    %68 = arith.divf %66, %67 : vector<8x128xf32>
    %69 = vector.extract_strided_slice %52 {offsets = [0, 256], sizes = [8, 128], strides = [1, 1]} : vector<8x384xf32> to vector<8x128xf32>
    %70 = vector.extract_strided_slice %51 {offsets = [0, 256], sizes = [8, 128], strides = [1, 1]} : vector<8x384xf32> to vector<8x128xf32>
    %71 = arith.addf %70, %2 : vector<8x128xf32>
    %72 = arith.mulf %60, %71 : vector<8x128xf32>
    %73 = arith.addf %69, %72 : vector<8x128xf32>
    %74 = math.tanh %73 : vector<8x128xf32>
    %75 = arith.subf %49, %74 : vector<8x128xf32>
    %76 = arith.mulf %68, %75 : vector<8x128xf32>
    %77 = arith.addf %74, %76 : vector<8x128xf32>
    %c0_28 = arith.constant 0 : index
    %c0_29 = arith.constant 0 : index
    %78 = vector.load %arg2[%c0_28, %c0_29] : memref<128x384xf32, #tpu.memory_space<vmem>>, vector<128x384xf32>
    %cst_30 = arith.constant dense<0.000000e+00> : vector<8x384xf32>
    %79 = tpu.matmul %77, %78, %cst_30 {dimension_numbers = #tpu.dot_dimension_numbers<[1], [0], [0], [1], [0, 0, 1, 1], [], []>} : vector<8x128xf32>, vector<128x384xf32>, vector<8x384xf32> -> vector<8x384xf32>
    %80 = vector.extract_strided_slice %14 {offsets = [16, 0], sizes = [8, 384], strides = [1, 1]} : vector<64x384xf32> to vector<8x384xf32>
    %81 = vector.extract_strided_slice %80 {offsets = [0, 0], sizes = [8, 128], strides = [1, 1]} : vector<8x384xf32> to vector<8x128xf32>
    %82 = vector.extract_strided_slice %79 {offsets = [0, 0], sizes = [8, 128], strides = [1, 1]} : vector<8x384xf32> to vector<8x128xf32>
    %83 = arith.addf %81, %82 : vector<8x128xf32>
    %84 = arith.negf %83 : vector<8x128xf32>
    %85 = math.exp %84 : vector<8x128xf32>
    %cst_31 = arith.constant 1.000000e+00 : f32
    %86 = vector.broadcast %cst_31 : f32 to vector<8x128xf32>
    %87 = arith.addf %86, %85 : vector<8x128xf32>
    %88 = arith.divf %86, %87 : vector<8x128xf32>
    %89 = vector.extract_strided_slice %80 {offsets = [0, 128], sizes = [8, 128], strides = [1, 1]} : vector<8x384xf32> to vector<8x128xf32>
    %90 = vector.extract_strided_slice %79 {offsets = [0, 128], sizes = [8, 128], strides = [1, 1]} : vector<8x384xf32> to vector<8x128xf32>
    %91 = arith.addf %89, %90 : vector<8x128xf32>
    %92 = arith.negf %91 : vector<8x128xf32>
    %93 = math.exp %92 : vector<8x128xf32>
    %cst_32 = arith.constant 1.000000e+00 : f32
    %94 = vector.broadcast %cst_32 : f32 to vector<8x128xf32>
    %95 = arith.addf %94, %93 : vector<8x128xf32>
    %96 = arith.divf %94, %95 : vector<8x128xf32>
    %97 = vector.extract_strided_slice %80 {offsets = [0, 256], sizes = [8, 128], strides = [1, 1]} : vector<8x384xf32> to vector<8x128xf32>
    %98 = vector.extract_strided_slice %79 {offsets = [0, 256], sizes = [8, 128], strides = [1, 1]} : vector<8x384xf32> to vector<8x128xf32>
    %99 = arith.addf %98, %2 : vector<8x128xf32>
    %100 = arith.mulf %88, %99 : vector<8x128xf32>
    %101 = arith.addf %97, %100 : vector<8x128xf32>
    %102 = math.tanh %101 : vector<8x128xf32>
    %103 = arith.subf %77, %102 : vector<8x128xf32>
    %104 = arith.mulf %96, %103 : vector<8x128xf32>
    %105 = arith.addf %102, %104 : vector<8x128xf32>
    %c0_33 = arith.constant 0 : index
    %c0_34 = arith.constant 0 : index
    %106 = vector.load %arg2[%c0_33, %c0_34] : memref<128x384xf32, #tpu.memory_space<vmem>>, vector<128x384xf32>
    %cst_35 = arith.constant dense<0.000000e+00> : vector<8x384xf32>
    %107 = tpu.matmul %105, %106, %cst_35 {dimension_numbers = #tpu.dot_dimension_numbers<[1], [0], [0], [1], [0, 0, 1, 1], [], []>} : vector<8x128xf32>, vector<128x384xf32>, vector<8x384xf32> -> vector<8x384xf32>
    %108 = vector.extract_strided_slice %14 {offsets = [24, 0], sizes = [8, 384], strides = [1, 1]} : vector<64x384xf32> to vector<8x384xf32>
    %109 = vector.extract_strided_slice %108 {offsets = [0, 0], sizes = [8, 128], strides = [1, 1]} : vector<8x384xf32> to vector<8x128xf32>
    %110 = vector.extract_strided_slice %107 {offsets = [0, 0], sizes = [8, 128], strides = [1, 1]} : vector<8x384xf32> to vector<8x128xf32>
    %111 = arith.addf %109, %110 : vector<8x128xf32>
    %112 = arith.negf %111 : vector<8x128xf32>
    %113 = math.exp %112 : vector<8x128xf32>
    %cst_36 = arith.constant 1.000000e+00 : f32
    %114 = vector.broadcast %cst_36 : f32 to vector<8x128xf32>
    %115 = arith.addf %114, %113 : vector<8x128xf32>
    %116 = arith.divf %114, %115 : vector<8x128xf32>
    %117 = vector.extract_strided_slice %108 {offsets = [0, 128], sizes = [8, 128], strides = [1, 1]} : vector<8x384xf32> to vector<8x128xf32>
    %118 = vector.extract_strided_slice %107 {offsets = [0, 128], sizes = [8, 128], strides = [1, 1]} : vector<8x384xf32> to vector<8x128xf32>
    %119 = arith.addf %117, %118 : vector<8x128xf32>
    %120 = arith.negf %119 : vector<8x128xf32>
    %121 = math.exp %120 : vector<8x128xf32>
    %cst_37 = arith.constant 1.000000e+00 : f32
    %122 = vector.broadcast %cst_37 : f32 to vector<8x128xf32>
    %123 = arith.addf %122, %121 : vector<8x128xf32>
    %124 = arith.divf %122, %123 : vector<8x128xf32>
    %125 = vector.extract_strided_slice %108 {offsets = [0, 256], sizes = [8, 128], strides = [1, 1]} : vector<8x384xf32> to vector<8x128xf32>
    %126 = vector.extract_strided_slice %107 {offsets = [0, 256], sizes = [8, 128], strides = [1, 1]} : vector<8x384xf32> to vector<8x128xf32>
    %127 = arith.addf %126, %2 : vector<8x128xf32>
    %128 = arith.mulf %116, %127 : vector<8x128xf32>
    %129 = arith.addf %125, %128 : vector<8x128xf32>
    %130 = math.tanh %129 : vector<8x128xf32>
    %131 = arith.subf %105, %130 : vector<8x128xf32>
    %132 = arith.mulf %124, %131 : vector<8x128xf32>
    %133 = arith.addf %130, %132 : vector<8x128xf32>
    %c0_38 = arith.constant 0 : index
    %c0_39 = arith.constant 0 : index
    %134 = vector.load %arg2[%c0_38, %c0_39] : memref<128x384xf32, #tpu.memory_space<vmem>>, vector<128x384xf32>
    %cst_40 = arith.constant dense<0.000000e+00> : vector<8x384xf32>
    %135 = tpu.matmul %133, %134, %cst_40 {dimension_numbers = #tpu.dot_dimension_numbers<[1], [0], [0], [1], [0, 0, 1, 1], [], []>} : vector<8x128xf32>, vector<128x384xf32>, vector<8x384xf32> -> vector<8x384xf32>
    %136 = vector.extract_strided_slice %14 {offsets = [32, 0], sizes = [8, 384], strides = [1, 1]} : vector<64x384xf32> to vector<8x384xf32>
    %137 = vector.extract_strided_slice %136 {offsets = [0, 0], sizes = [8, 128], strides = [1, 1]} : vector<8x384xf32> to vector<8x128xf32>
    %138 = vector.extract_strided_slice %135 {offsets = [0, 0], sizes = [8, 128], strides = [1, 1]} : vector<8x384xf32> to vector<8x128xf32>
    %139 = arith.addf %137, %138 : vector<8x128xf32>
    %140 = arith.negf %139 : vector<8x128xf32>
    %141 = math.exp %140 : vector<8x128xf32>
    %cst_41 = arith.constant 1.000000e+00 : f32
    %142 = vector.broadcast %cst_41 : f32 to vector<8x128xf32>
    %143 = arith.addf %142, %141 : vector<8x128xf32>
    %144 = arith.divf %142, %143 : vector<8x128xf32>
    %145 = vector.extract_strided_slice %136 {offsets = [0, 128], sizes = [8, 128], strides = [1, 1]} : vector<8x384xf32> to vector<8x128xf32>
    %146 = vector.extract_strided_slice %135 {offsets = [0, 128], sizes = [8, 128], strides = [1, 1]} : vector<8x384xf32> to vector<8x128xf32>
    %147 = arith.addf %145, %146 : vector<8x128xf32>
    %148 = arith.negf %147 : vector<8x128xf32>
    %149 = math.exp %148 : vector<8x128xf32>
    %cst_42 = arith.constant 1.000000e+00 : f32
    %150 = vector.broadcast %cst_42 : f32 to vector<8x128xf32>
    %151 = arith.addf %150, %149 : vector<8x128xf32>
    %152 = arith.divf %150, %151 : vector<8x128xf32>
    %153 = vector.extract_strided_slice %136 {offsets = [0, 256], sizes = [8, 128], strides = [1, 1]} : vector<8x384xf32> to vector<8x128xf32>
    %154 = vector.extract_strided_slice %135 {offsets = [0, 256], sizes = [8, 128], strides = [1, 1]} : vector<8x384xf32> to vector<8x128xf32>
    %155 = arith.addf %154, %2 : vector<8x128xf32>
    %156 = arith.mulf %144, %155 : vector<8x128xf32>
    %157 = arith.addf %153, %156 : vector<8x128xf32>
    %158 = math.tanh %157 : vector<8x128xf32>
    %159 = arith.subf %133, %158 : vector<8x128xf32>
    %160 = arith.mulf %152, %159 : vector<8x128xf32>
    %161 = arith.addf %158, %160 : vector<8x128xf32>
    %c0_43 = arith.constant 0 : index
    %c0_44 = arith.constant 0 : index
    %162 = vector.load %arg2[%c0_43, %c0_44] : memref<128x384xf32, #tpu.memory_space<vmem>>, vector<128x384xf32>
    %cst_45 = arith.constant dense<0.000000e+00> : vector<8x384xf32>
    %163 = tpu.matmul %161, %162, %cst_45 {dimension_numbers = #tpu.dot_dimension_numbers<[1], [0], [0], [1], [0, 0, 1, 1], [], []>} : vector<8x128xf32>, vector<128x384xf32>, vector<8x384xf32> -> vector<8x384xf32>
    %164 = vector.extract_strided_slice %14 {offsets = [40, 0], sizes = [8, 384], strides = [1, 1]} : vector<64x384xf32> to vector<8x384xf32>
    %165 = vector.extract_strided_slice %164 {offsets = [0, 0], sizes = [8, 128], strides = [1, 1]} : vector<8x384xf32> to vector<8x128xf32>
    %166 = vector.extract_strided_slice %163 {offsets = [0, 0], sizes = [8, 128], strides = [1, 1]} : vector<8x384xf32> to vector<8x128xf32>
    %167 = arith.addf %165, %166 : vector<8x128xf32>
    %168 = arith.negf %167 : vector<8x128xf32>
    %169 = math.exp %168 : vector<8x128xf32>
    %cst_46 = arith.constant 1.000000e+00 : f32
    %170 = vector.broadcast %cst_46 : f32 to vector<8x128xf32>
    %171 = arith.addf %170, %169 : vector<8x128xf32>
    %172 = arith.divf %170, %171 : vector<8x128xf32>
    %173 = vector.extract_strided_slice %164 {offsets = [0, 128], sizes = [8, 128], strides = [1, 1]} : vector<8x384xf32> to vector<8x128xf32>
    %174 = vector.extract_strided_slice %163 {offsets = [0, 128], sizes = [8, 128], strides = [1, 1]} : vector<8x384xf32> to vector<8x128xf32>
    %175 = arith.addf %173, %174 : vector<8x128xf32>
    %176 = arith.negf %175 : vector<8x128xf32>
    %177 = math.exp %176 : vector<8x128xf32>
    %cst_47 = arith.constant 1.000000e+00 : f32
    %178 = vector.broadcast %cst_47 : f32 to vector<8x128xf32>
    %179 = arith.addf %178, %177 : vector<8x128xf32>
    %180 = arith.divf %178, %179 : vector<8x128xf32>
    %181 = vector.extract_strided_slice %164 {offsets = [0, 256], sizes = [8, 128], strides = [1, 1]} : vector<8x384xf32> to vector<8x128xf32>
    %182 = vector.extract_strided_slice %163 {offsets = [0, 256], sizes = [8, 128], strides = [1, 1]} : vector<8x384xf32> to vector<8x128xf32>
    %183 = arith.addf %182, %2 : vector<8x128xf32>
    %184 = arith.mulf %172, %183 : vector<8x128xf32>
    %185 = arith.addf %181, %184 : vector<8x128xf32>
    %186 = math.tanh %185 : vector<8x128xf32>
    %187 = arith.subf %161, %186 : vector<8x128xf32>
    %188 = arith.mulf %180, %187 : vector<8x128xf32>
    %189 = arith.addf %186, %188 : vector<8x128xf32>
    %c0_48 = arith.constant 0 : index
    %c0_49 = arith.constant 0 : index
    %190 = vector.load %arg2[%c0_48, %c0_49] : memref<128x384xf32, #tpu.memory_space<vmem>>, vector<128x384xf32>
    %cst_50 = arith.constant dense<0.000000e+00> : vector<8x384xf32>
    %191 = tpu.matmul %189, %190, %cst_50 {dimension_numbers = #tpu.dot_dimension_numbers<[1], [0], [0], [1], [0, 0, 1, 1], [], []>} : vector<8x128xf32>, vector<128x384xf32>, vector<8x384xf32> -> vector<8x384xf32>
    %192 = vector.extract_strided_slice %14 {offsets = [48, 0], sizes = [8, 384], strides = [1, 1]} : vector<64x384xf32> to vector<8x384xf32>
    %193 = vector.extract_strided_slice %192 {offsets = [0, 0], sizes = [8, 128], strides = [1, 1]} : vector<8x384xf32> to vector<8x128xf32>
    %194 = vector.extract_strided_slice %191 {offsets = [0, 0], sizes = [8, 128], strides = [1, 1]} : vector<8x384xf32> to vector<8x128xf32>
    %195 = arith.addf %193, %194 : vector<8x128xf32>
    %196 = arith.negf %195 : vector<8x128xf32>
    %197 = math.exp %196 : vector<8x128xf32>
    %cst_51 = arith.constant 1.000000e+00 : f32
    %198 = vector.broadcast %cst_51 : f32 to vector<8x128xf32>
    %199 = arith.addf %198, %197 : vector<8x128xf32>
    %200 = arith.divf %198, %199 : vector<8x128xf32>
    %201 = vector.extract_strided_slice %192 {offsets = [0, 128], sizes = [8, 128], strides = [1, 1]} : vector<8x384xf32> to vector<8x128xf32>
    %202 = vector.extract_strided_slice %191 {offsets = [0, 128], sizes = [8, 128], strides = [1, 1]} : vector<8x384xf32> to vector<8x128xf32>
    %203 = arith.addf %201, %202 : vector<8x128xf32>
    %204 = arith.negf %203 : vector<8x128xf32>
    %205 = math.exp %204 : vector<8x128xf32>
    %cst_52 = arith.constant 1.000000e+00 : f32
    %206 = vector.broadcast %cst_52 : f32 to vector<8x128xf32>
    %207 = arith.addf %206, %205 : vector<8x128xf32>
    %208 = arith.divf %206, %207 : vector<8x128xf32>
    %209 = vector.extract_strided_slice %192 {offsets = [0, 256], sizes = [8, 128], strides = [1, 1]} : vector<8x384xf32> to vector<8x128xf32>
    %210 = vector.extract_strided_slice %191 {offsets = [0, 256], sizes = [8, 128], strides = [1, 1]} : vector<8x384xf32> to vector<8x128xf32>
    %211 = arith.addf %210, %2 : vector<8x128xf32>
    %212 = arith.mulf %200, %211 : vector<8x128xf32>
    %213 = arith.addf %209, %212 : vector<8x128xf32>
    %214 = math.tanh %213 : vector<8x128xf32>
    %215 = arith.subf %189, %214 : vector<8x128xf32>
    %216 = arith.mulf %208, %215 : vector<8x128xf32>
    %217 = arith.addf %214, %216 : vector<8x128xf32>
    %c0_53 = arith.constant 0 : index
    %c0_54 = arith.constant 0 : index
    %218 = vector.load %arg2[%c0_53, %c0_54] : memref<128x384xf32, #tpu.memory_space<vmem>>, vector<128x384xf32>
    %cst_55 = arith.constant dense<0.000000e+00> : vector<8x384xf32>
    %219 = tpu.matmul %217, %218, %cst_55 {dimension_numbers = #tpu.dot_dimension_numbers<[1], [0], [0], [1], [0, 0, 1, 1], [], []>} : vector<8x128xf32>, vector<128x384xf32>, vector<8x384xf32> -> vector<8x384xf32>
    %220 = vector.extract_strided_slice %14 {offsets = [56, 0], sizes = [8, 384], strides = [1, 1]} : vector<64x384xf32> to vector<8x384xf32>
    %221 = vector.extract_strided_slice %220 {offsets = [0, 0], sizes = [8, 128], strides = [1, 1]} : vector<8x384xf32> to vector<8x128xf32>
    %222 = vector.extract_strided_slice %219 {offsets = [0, 0], sizes = [8, 128], strides = [1, 1]} : vector<8x384xf32> to vector<8x128xf32>
    %223 = arith.addf %221, %222 : vector<8x128xf32>
    %224 = arith.negf %223 : vector<8x128xf32>
    %225 = math.exp %224 : vector<8x128xf32>
    %cst_56 = arith.constant 1.000000e+00 : f32
    %226 = vector.broadcast %cst_56 : f32 to vector<8x128xf32>
    %227 = arith.addf %226, %225 : vector<8x128xf32>
    %228 = arith.divf %226, %227 : vector<8x128xf32>
    %229 = vector.extract_strided_slice %220 {offsets = [0, 128], sizes = [8, 128], strides = [1, 1]} : vector<8x384xf32> to vector<8x128xf32>
    %230 = vector.extract_strided_slice %219 {offsets = [0, 128], sizes = [8, 128], strides = [1, 1]} : vector<8x384xf32> to vector<8x128xf32>
    %231 = arith.addf %229, %230 : vector<8x128xf32>
    %232 = arith.negf %231 : vector<8x128xf32>
    %233 = math.exp %232 : vector<8x128xf32>
    %cst_57 = arith.constant 1.000000e+00 : f32
    %234 = vector.broadcast %cst_57 : f32 to vector<8x128xf32>
    %235 = arith.addf %234, %233 : vector<8x128xf32>
    %236 = arith.divf %234, %235 : vector<8x128xf32>
    %237 = vector.extract_strided_slice %220 {offsets = [0, 256], sizes = [8, 128], strides = [1, 1]} : vector<8x384xf32> to vector<8x128xf32>
    %238 = vector.extract_strided_slice %219 {offsets = [0, 256], sizes = [8, 128], strides = [1, 1]} : vector<8x384xf32> to vector<8x128xf32>
    %239 = arith.addf %238, %2 : vector<8x128xf32>
    %240 = arith.mulf %228, %239 : vector<8x128xf32>
    %241 = arith.addf %237, %240 : vector<8x128xf32>
    %242 = math.tanh %241 : vector<8x128xf32>
    %243 = arith.subf %217, %242 : vector<8x128xf32>
    %244 = arith.mulf %236, %243 : vector<8x128xf32>
    %245 = arith.addf %242, %244 : vector<8x128xf32>
    %c0_58 = arith.constant 0 : index
    %c0_59 = arith.constant 0 : index
    %246 = vector.load %arg6[%c0_58, %c0_59] : memref<128x768xf32, #tpu.memory_space<vmem>>, vector<128x768xf32>
    %cst_60 = arith.constant dense<0.000000e+00> : vector<8x768xf32>
    %247 = tpu.matmul %245, %246, %cst_60 {dimension_numbers = #tpu.dot_dimension_numbers<[1], [0], [0], [1], [0, 0, 1, 1], [], []>} : vector<8x128xf32>, vector<128x768xf32>, vector<8x768xf32> -> vector<8x768xf32>
    %248 = vector.extract_strided_slice %247 {offsets = [0, 0], sizes = [8, 384], strides = [1, 1]} : vector<8x768xf32> to vector<8x384xf32>
    %249 = vector.extract_strided_slice %20 {offsets = [0, 0], sizes = [8, 128], strides = [1, 1]} : vector<8x384xf32> to vector<8x128xf32>
    %250 = vector.extract_strided_slice %248 {offsets = [0, 0], sizes = [8, 128], strides = [1, 1]} : vector<8x384xf32> to vector<8x128xf32>
    %251 = arith.addf %249, %250 : vector<8x128xf32>
    %252 = arith.negf %251 : vector<8x128xf32>
    %253 = math.exp %252 : vector<8x128xf32>
    %cst_61 = arith.constant 1.000000e+00 : f32
    %254 = vector.broadcast %cst_61 : f32 to vector<8x128xf32>
    %255 = arith.addf %254, %253 : vector<8x128xf32>
    %256 = arith.divf %254, %255 : vector<8x128xf32>
    %257 = vector.extract_strided_slice %20 {offsets = [0, 128], sizes = [8, 128], strides = [1, 1]} : vector<8x384xf32> to vector<8x128xf32>
    %258 = vector.extract_strided_slice %248 {offsets = [0, 128], sizes = [8, 128], strides = [1, 1]} : vector<8x384xf32> to vector<8x128xf32>
    %259 = arith.addf %257, %258 : vector<8x128xf32>
    %260 = arith.negf %259 : vector<8x128xf32>
    %261 = math.exp %260 : vector<8x128xf32>
    %cst_62 = arith.constant 1.000000e+00 : f32
    %262 = vector.broadcast %cst_62 : f32 to vector<8x128xf32>
    %263 = arith.addf %262, %261 : vector<8x128xf32>
    %264 = arith.divf %262, %263 : vector<8x128xf32>
    %265 = vector.extract_strided_slice %20 {offsets = [0, 256], sizes = [8, 128], strides = [1, 1]} : vector<8x384xf32> to vector<8x128xf32>
    %266 = vector.extract_strided_slice %248 {offsets = [0, 256], sizes = [8, 128], strides = [1, 1]} : vector<8x384xf32> to vector<8x128xf32>
    %267 = arith.addf %266, %5 : vector<8x128xf32>
    %268 = arith.mulf %256, %267 : vector<8x128xf32>
    %269 = arith.addf %265, %268 : vector<8x128xf32>
    %270 = math.tanh %269 : vector<8x128xf32>
    %271 = arith.subf %245, %270 : vector<8x128xf32>
    %272 = arith.mulf %264, %271 : vector<8x128xf32>
    %273 = arith.addf %270, %272 : vector<8x128xf32>
    %c0_63 = arith.constant 0 : index
    %c0_64 = arith.constant 0 : index
    %274 = vector.load %arg13[%c0_63, %c0_64] : memref<64x128xf32, #tpu.memory_space<vmem>>, vector<8x128xf32>
    tpu.vector_store %arg13[%c0_63, %c0_64], %273 {strides = array<i32>} : memref<64x128xf32, #tpu.memory_space<vmem>>, vector<8x128xf32>,
    %c0_65 = arith.constant 0 : index
    %c0_66 = arith.constant 0 : index
    %275 = vector.load %arg6[%c0_65, %c0_66] : memref<128x768xf32, #tpu.memory_space<vmem>>, vector<128x768xf32>
    %cst_67 = arith.constant dense<0.000000e+00> : vector<8x768xf32>
    %276 = tpu.matmul %273, %275, %cst_67 {dimension_numbers = #tpu.dot_dimension_numbers<[1], [0], [0], [1], [0, 0, 1, 1], [], []>} : vector<8x128xf32>, vector<128x768xf32>, vector<8x768xf32> -> vector<8x768xf32>
    %277 = vector.extract_strided_slice %276 {offsets = [0, 0], sizes = [8, 384], strides = [1, 1]} : vector<8x768xf32> to vector<8x384xf32>
    %278 = vector.extract_strided_slice %276 {offsets = [0, 384], sizes = [8, 384], strides = [1, 1]} : vector<8x768xf32> to vector<8x384xf32>
    %279 = arith.addf %278, %8 : vector<8x384xf32>
    %280 = vector.extract_strided_slice %279 {offsets = [0, 0], sizes = [8, 128], strides = [1, 1]} : vector<8x384xf32> to vector<8x128xf32>
    %281 = vector.extract_strided_slice %277 {offsets = [0, 0], sizes = [8, 128], strides = [1, 1]} : vector<8x384xf32> to vector<8x128xf32>
    %282 = arith.addf %280, %281 : vector<8x128xf32>
    %283 = arith.negf %282 : vector<8x128xf32>
    %284 = math.exp %283 : vector<8x128xf32>
    %cst_68 = arith.constant 1.000000e+00 : f32
    %285 = vector.broadcast %cst_68 : f32 to vector<8x128xf32>
    %286 = arith.addf %285, %284 : vector<8x128xf32>
    %287 = arith.divf %285, %286 : vector<8x128xf32>
    %288 = vector.extract_strided_slice %279 {offsets = [0, 128], sizes = [8, 128], strides = [1, 1]} : vector<8x384xf32> to vector<8x128xf32>
    %289 = vector.extract_strided_slice %277 {offsets = [0, 128], sizes = [8, 128], strides = [1, 1]} : vector<8x384xf32> to vector<8x128xf32>
    %290 = arith.addf %288, %289 : vector<8x128xf32>
    %291 = arith.negf %290 : vector<8x128xf32>
    %292 = math.exp %291 : vector<8x128xf32>
    %cst_69 = arith.constant 1.000000e+00 : f32
    %293 = vector.broadcast %cst_69 : f32 to vector<8x128xf32>
    %294 = arith.addf %293, %292 : vector<8x128xf32>
    %295 = arith.divf %293, %294 : vector<8x128xf32>
    %296 = vector.extract_strided_slice %279 {offsets = [0, 256], sizes = [8, 128], strides = [1, 1]} : vector<8x384xf32> to vector<8x128xf32>
    %297 = vector.extract_strided_slice %277 {offsets = [0, 256], sizes = [8, 128], strides = [1, 1]} : vector<8x384xf32> to vector<8x128xf32>
    %298 = arith.addf %297, %5 : vector<8x128xf32>
    %299 = arith.mulf %287, %298 : vector<8x128xf32>
    %300 = arith.addf %296, %299 : vector<8x128xf32>
    %301 = math.tanh %300 : vector<8x128xf32>
    %302 = arith.subf %273, %301 : vector<8x128xf32>
    %303 = arith.mulf %295, %302 : vector<8x128xf32>
    %304 = arith.addf %301, %303 : vector<8x128xf32>
    %c8 = arith.constant 8 : index
    %c0_70 = arith.constant 0 : index
    %305 = vector.load %arg13[%c8, %c0_70] : memref<64x128xf32, #tpu.memory_space<vmem>>, vector<8x128xf32>
    tpu.vector_store %arg13[%c8, %c0_70], %304 {strides = array<i32>} : memref<64x128xf32, #tpu.memory_space<vmem>>, vector<8x128xf32>,
    %c0_71 = arith.constant 0 : index
    %c0_72 = arith.constant 0 : index
    %306 = vector.load %arg6[%c0_71, %c0_72] : memref<128x768xf32, #tpu.memory_space<vmem>>, vector<128x768xf32>
    %cst_73 = arith.constant dense<0.000000e+00> : vector<8x768xf32>
    %307 = tpu.matmul %304, %306, %cst_73 {dimension_numbers = #tpu.dot_dimension_numbers<[1], [0], [0], [1], [0, 0, 1, 1], [], []>} : vector<8x128xf32>, vector<128x768xf32>, vector<8x768xf32> -> vector<8x768xf32>
    %308 = vector.extract_strided_slice %307 {offsets = [0, 0], sizes = [8, 384], strides = [1, 1]} : vector<8x768xf32> to vector<8x384xf32>
    %309 = vector.extract_strided_slice %307 {offsets = [0, 384], sizes = [8, 384], strides = [1, 1]} : vector<8x768xf32> to vector<8x384xf32>
    %310 = arith.addf %309, %8 : vector<8x384xf32>
    %311 = vector.extract_strided_slice %310 {offsets = [0, 0], sizes = [8, 128], strides = [1, 1]} : vector<8x384xf32> to vector<8x128xf32>
    %312 = vector.extract_strided_slice %308 {offsets = [0, 0], sizes = [8, 128], strides = [1, 1]} : vector<8x384xf32> to vector<8x128xf32>
    %313 = arith.addf %311, %312 : vector<8x128xf32>
    %314 = arith.negf %313 : vector<8x128xf32>
    %315 = math.exp %314 : vector<8x128xf32>
    %cst_74 = arith.constant 1.000000e+00 : f32
    %316 = vector.broadcast %cst_74 : f32 to vector<8x128xf32>
    %317 = arith.addf %316, %315 : vector<8x128xf32>
    %318 = arith.divf %316, %317 : vector<8x128xf32>
    %319 = vector.extract_strided_slice %310 {offsets = [0, 128], sizes = [8, 128], strides = [1, 1]} : vector<8x384xf32> to vector<8x128xf32>
    %320 = vector.extract_strided_slice %308 {offsets = [0, 128], sizes = [8, 128], strides = [1, 1]} : vector<8x384xf32> to vector<8x128xf32>
    %321 = arith.addf %319, %320 : vector<8x128xf32>
    %322 = arith.negf %321 : vector<8x128xf32>
    %323 = math.exp %322 : vector<8x128xf32>
    %cst_75 = arith.constant 1.000000e+00 : f32
    %324 = vector.broadcast %cst_75 : f32 to vector<8x128xf32>
    %325 = arith.addf %324, %323 : vector<8x128xf32>
    %326 = arith.divf %324, %325 : vector<8x128xf32>
    %327 = vector.extract_strided_slice %310 {offsets = [0, 256], sizes = [8, 128], strides = [1, 1]} : vector<8x384xf32> to vector<8x128xf32>
    %328 = vector.extract_strided_slice %308 {offsets = [0, 256], sizes = [8, 128], strides = [1, 1]} : vector<8x384xf32> to vector<8x128xf32>
    %329 = arith.addf %328, %5 : vector<8x128xf32>
    %330 = arith.mulf %318, %329 : vector<8x128xf32>
    %331 = arith.addf %327, %330 : vector<8x128xf32>
    %332 = math.tanh %331 : vector<8x128xf32>
    %333 = arith.subf %304, %332 : vector<8x128xf32>
    %334 = arith.mulf %326, %333 : vector<8x128xf32>
    %335 = arith.addf %332, %334 : vector<8x128xf32>
    %c16 = arith.constant 16 : index
    %c0_76 = arith.constant 0 : index
    %336 = vector.load %arg13[%c16, %c0_76] : memref<64x128xf32, #tpu.memory_space<vmem>>, vector<8x128xf32>
    tpu.vector_store %arg13[%c16, %c0_76], %335 {strides = array<i32>} : memref<64x128xf32, #tpu.memory_space<vmem>>, vector<8x128xf32>,
    %c0_77 = arith.constant 0 : index
    %c0_78 = arith.constant 0 : index
    %337 = vector.load %arg6[%c0_77, %c0_78] : memref<128x768xf32, #tpu.memory_space<vmem>>, vector<128x768xf32>
    %cst_79 = arith.constant dense<0.000000e+00> : vector<8x768xf32>
    %338 = tpu.matmul %335, %337, %cst_79 {dimension_numbers = #tpu.dot_dimension_numbers<[1], [0], [0], [1], [0, 0, 1, 1], [], []>} : vector<8x128xf32>, vector<128x768xf32>, vector<8x768xf32> -> vector<8x768xf32>
    %339 = vector.extract_strided_slice %338 {offsets = [0, 0], sizes = [8, 384], strides = [1, 1]} : vector<8x768xf32> to vector<8x384xf32>
    %340 = vector.extract_strided_slice %338 {offsets = [0, 384], sizes = [8, 384], strides = [1, 1]} : vector<8x768xf32> to vector<8x384xf32>
    %341 = arith.addf %340, %8 : vector<8x384xf32>
    %342 = vector.extract_strided_slice %341 {offsets = [0, 0], sizes = [8, 128], strides = [1, 1]} : vector<8x384xf32> to vector<8x128xf32>
    %343 = vector.extract_strided_slice %339 {offsets = [0, 0], sizes = [8, 128], strides = [1, 1]} : vector<8x384xf32> to vector<8x128xf32>
    %344 = arith.addf %342, %343 : vector<8x128xf32>
    %345 = arith.negf %344 : vector<8x128xf32>
    %346 = math.exp %345 : vector<8x128xf32>
    %cst_80 = arith.constant 1.000000e+00 : f32
    %347 = vector.broadcast %cst_80 : f32 to vector<8x128xf32>
    %348 = arith.addf %347, %346 : vector<8x128xf32>
    %349 = arith.divf %347, %348 : vector<8x128xf32>
    %350 = vector.extract_strided_slice %341 {offsets = [0, 128], sizes = [8, 128], strides = [1, 1]} : vector<8x384xf32> to vector<8x128xf32>
    %351 = vector.extract_strided_slice %339 {offsets = [0, 128], sizes = [8, 128], strides = [1, 1]} : vector<8x384xf32> to vector<8x128xf32>
    %352 = arith.addf %350, %351 : vector<8x128xf32>
    %353 = arith.negf %352 : vector<8x128xf32>
    %354 = math.exp %353 : vector<8x128xf32>
    %cst_81 = arith.constant 1.000000e+00 : f32
    %355 = vector.broadcast %cst_81 : f32 to vector<8x128xf32>
    %356 = arith.addf %355, %354 : vector<8x128xf32>
    %357 = arith.divf %355, %356 : vector<8x128xf32>
    %358 = vector.extract_strided_slice %341 {offsets = [0, 256], sizes = [8, 128], strides = [1, 1]} : vector<8x384xf32> to vector<8x128xf32>
    %359 = vector.extract_strided_slice %339 {offsets = [0, 256], sizes = [8, 128], strides = [1, 1]} : vector<8x384xf32> to vector<8x128xf32>
    %360 = arith.addf %359, %5 : vector<8x128xf32>
    %361 = arith.mulf %349, %360 : vector<8x128xf32>
    %362 = arith.addf %358, %361 : vector<8x128xf32>
    %363 = math.tanh %362 : vector<8x128xf32>
    %364 = arith.subf %335, %363 : vector<8x128xf32>
    %365 = arith.mulf %357, %364 : vector<8x128xf32>
    %366 = arith.addf %363, %365 : vector<8x128xf32>
    %c24 = arith.constant 24 : index
    %c0_82 = arith.constant 0 : index
    %367 = vector.load %arg13[%c24, %c0_82] : memref<64x128xf32, #tpu.memory_space<vmem>>, vector<8x128xf32>
    tpu.vector_store %arg13[%c24, %c0_82], %366 {strides = array<i32>} : memref<64x128xf32, #tpu.memory_space<vmem>>, vector<8x128xf32>,
    %c0_83 = arith.constant 0 : index
    %c0_84 = arith.constant 0 : index
    %368 = vector.load %arg6[%c0_83, %c0_84] : memref<128x768xf32, #tpu.memory_space<vmem>>, vector<128x768xf32>
    %cst_85 = arith.constant dense<0.000000e+00> : vector<8x768xf32>
    %369 = tpu.matmul %366, %368, %cst_85 {dimension_numbers = #tpu.dot_dimension_numbers<[1], [0], [0], [1], [0, 0, 1, 1], [], []>} : vector<8x128xf32>, vector<128x768xf32>, vector<8x768xf32> -> vector<8x768xf32>
    %370 = vector.extract_strided_slice %369 {offsets = [0, 0], sizes = [8, 384], strides = [1, 1]} : vector<8x768xf32> to vector<8x384xf32>
    %371 = vector.extract_strided_slice %369 {offsets = [0, 384], sizes = [8, 384], strides = [1, 1]} : vector<8x768xf32> to vector<8x384xf32>
    %372 = arith.addf %371, %8 : vector<8x384xf32>
    %373 = vector.extract_strided_slice %372 {offsets = [0, 0], sizes = [8, 128], strides = [1, 1]} : vector<8x384xf32> to vector<8x128xf32>
    %374 = vector.extract_strided_slice %370 {offsets = [0, 0], sizes = [8, 128], strides = [1, 1]} : vector<8x384xf32> to vector<8x128xf32>
    %375 = arith.addf %373, %374 : vector<8x128xf32>
    %376 = arith.negf %375 : vector<8x128xf32>
    %377 = math.exp %376 : vector<8x128xf32>
    %cst_86 = arith.constant 1.000000e+00 : f32
    %378 = vector.broadcast %cst_86 : f32 to vector<8x128xf32>
    %379 = arith.addf %378, %377 : vector<8x128xf32>
    %380 = arith.divf %378, %379 : vector<8x128xf32>
    %381 = vector.extract_strided_slice %372 {offsets = [0, 128], sizes = [8, 128], strides = [1, 1]} : vector<8x384xf32> to vector<8x128xf32>
    %382 = vector.extract_strided_slice %370 {offsets = [0, 128], sizes = [8, 128], strides = [1, 1]} : vector<8x384xf32> to vector<8x128xf32>
    %383 = arith.addf %381, %382 : vector<8x128xf32>
    %384 = arith.negf %383 : vector<8x128xf32>
    %385 = math.exp %384 : vector<8x128xf32>
    %cst_87 = arith.constant 1.000000e+00 : f32
    %386 = vector.broadcast %cst_87 : f32 to vector<8x128xf32>
    %387 = arith.addf %386, %385 : vector<8x128xf32>
    %388 = arith.divf %386, %387 : vector<8x128xf32>
    %389 = vector.extract_strided_slice %372 {offsets = [0, 256], sizes = [8, 128], strides = [1, 1]} : vector<8x384xf32> to vector<8x128xf32>
    %390 = vector.extract_strided_slice %370 {offsets = [0, 256], sizes = [8, 128], strides = [1, 1]} : vector<8x384xf32> to vector<8x128xf32>
    %391 = arith.addf %390, %5 : vector<8x128xf32>
    %392 = arith.mulf %380, %391 : vector<8x128xf32>
    %393 = arith.addf %389, %392 : vector<8x128xf32>
    %394 = math.tanh %393 : vector<8x128xf32>
    %395 = arith.subf %366, %394 : vector<8x128xf32>
    %396 = arith.mulf %388, %395 : vector<8x128xf32>
    %397 = arith.addf %394, %396 : vector<8x128xf32>
    %c32 = arith.constant 32 : index
    %c0_88 = arith.constant 0 : index
    %398 = vector.load %arg13[%c32, %c0_88] : memref<64x128xf32, #tpu.memory_space<vmem>>, vector<8x128xf32>
    tpu.vector_store %arg13[%c32, %c0_88], %397 {strides = array<i32>} : memref<64x128xf32, #tpu.memory_space<vmem>>, vector<8x128xf32>,
    %c0_89 = arith.constant 0 : index
    %c0_90 = arith.constant 0 : index
    %399 = vector.load %arg6[%c0_89, %c0_90] : memref<128x768xf32, #tpu.memory_space<vmem>>, vector<128x768xf32>
    %cst_91 = arith.constant dense<0.000000e+00> : vector<8x768xf32>
    %400 = tpu.matmul %397, %399, %cst_91 {dimension_numbers = #tpu.dot_dimension_numbers<[1], [0], [0], [1], [0, 0, 1, 1], [], []>} : vector<8x128xf32>, vector<128x768xf32>, vector<8x768xf32> -> vector<8x768xf32>
    %401 = vector.extract_strided_slice %400 {offsets = [0, 0], sizes = [8, 384], strides = [1, 1]} : vector<8x768xf32> to vector<8x384xf32>
    %402 = vector.extract_strided_slice %400 {offsets = [0, 384], sizes = [8, 384], strides = [1, 1]} : vector<8x768xf32> to vector<8x384xf32>
    %403 = arith.addf %402, %8 : vector<8x384xf32>
    %404 = vector.extract_strided_slice %403 {offsets = [0, 0], sizes = [8, 128], strides = [1, 1]} : vector<8x384xf32> to vector<8x128xf32>
    %405 = vector.extract_strided_slice %401 {offsets = [0, 0], sizes = [8, 128], strides = [1, 1]} : vector<8x384xf32> to vector<8x128xf32>
    %406 = arith.addf %404, %405 : vector<8x128xf32>
    %407 = arith.negf %406 : vector<8x128xf32>
    %408 = math.exp %407 : vector<8x128xf32>
    %cst_92 = arith.constant 1.000000e+00 : f32
    %409 = vector.broadcast %cst_92 : f32 to vector<8x128xf32>
    %410 = arith.addf %409, %408 : vector<8x128xf32>
    %411 = arith.divf %409, %410 : vector<8x128xf32>
    %412 = vector.extract_strided_slice %403 {offsets = [0, 128], sizes = [8, 128], strides = [1, 1]} : vector<8x384xf32> to vector<8x128xf32>
    %413 = vector.extract_strided_slice %401 {offsets = [0, 128], sizes = [8, 128], strides = [1, 1]} : vector<8x384xf32> to vector<8x128xf32>
    %414 = arith.addf %412, %413 : vector<8x128xf32>
    %415 = arith.negf %414 : vector<8x128xf32>
    %416 = math.exp %415 : vector<8x128xf32>
    %cst_93 = arith.constant 1.000000e+00 : f32
    %417 = vector.broadcast %cst_93 : f32 to vector<8x128xf32>
    %418 = arith.addf %417, %416 : vector<8x128xf32>
    %419 = arith.divf %417, %418 : vector<8x128xf32>
    %420 = vector.extract_strided_slice %403 {offsets = [0, 256], sizes = [8, 128], strides = [1, 1]} : vector<8x384xf32> to vector<8x128xf32>
    %421 = vector.extract_strided_slice %401 {offsets = [0, 256], sizes = [8, 128], strides = [1, 1]} : vector<8x384xf32> to vector<8x128xf32>
    %422 = arith.addf %421, %5 : vector<8x128xf32>
    %423 = arith.mulf %411, %422 : vector<8x128xf32>
    %424 = arith.addf %420, %423 : vector<8x128xf32>
    %425 = math.tanh %424 : vector<8x128xf32>
    %426 = arith.subf %397, %425 : vector<8x128xf32>
    %427 = arith.mulf %419, %426 : vector<8x128xf32>
    %428 = arith.addf %425, %427 : vector<8x128xf32>
    %c40 = arith.constant 40 : index
    %c0_94 = arith.constant 0 : index
    %429 = vector.load %arg13[%c40, %c0_94] : memref<64x128xf32, #tpu.memory_space<vmem>>, vector<8x128xf32>
    tpu.vector_store %arg13[%c40, %c0_94], %428 {strides = array<i32>} : memref<64x128xf32, #tpu.memory_space<vmem>>, vector<8x128xf32>,
    %c0_95 = arith.constant 0 : index
    %c0_96 = arith.constant 0 : index
    %430 = vector.load %arg6[%c0_95, %c0_96] : memref<128x768xf32, #tpu.memory_space<vmem>>, vector<128x768xf32>
    %cst_97 = arith.constant dense<0.000000e+00> : vector<8x768xf32>
    %431 = tpu.matmul %428, %430, %cst_97 {dimension_numbers = #tpu.dot_dimension_numbers<[1], [0], [0], [1], [0, 0, 1, 1], [], []>} : vector<8x128xf32>, vector<128x768xf32>, vector<8x768xf32> -> vector<8x768xf32>
    %432 = vector.extract_strided_slice %431 {offsets = [0, 0], sizes = [8, 384], strides = [1, 1]} : vector<8x768xf32> to vector<8x384xf32>
    %433 = vector.extract_strided_slice %431 {offsets = [0, 384], sizes = [8, 384], strides = [1, 1]} : vector<8x768xf32> to vector<8x384xf32>
    %434 = arith.addf %433, %8 : vector<8x384xf32>
    %435 = vector.extract_strided_slice %434 {offsets = [0, 0], sizes = [8, 128], strides = [1, 1]} : vector<8x384xf32> to vector<8x128xf32>
    %436 = vector.extract_strided_slice %432 {offsets = [0, 0], sizes = [8, 128], strides = [1, 1]} : vector<8x384xf32> to vector<8x128xf32>
    %437 = arith.addf %435, %436 : vector<8x128xf32>
    %438 = arith.negf %437 : vector<8x128xf32>
    %439 = math.exp %438 : vector<8x128xf32>
    %cst_98 = arith.constant 1.000000e+00 : f32
    %440 = vector.broadcast %cst_98 : f32 to vector<8x128xf32>
    %441 = arith.addf %440, %439 : vector<8x128xf32>
    %442 = arith.divf %440, %441 : vector<8x128xf32>
    %443 = vector.extract_strided_slice %434 {offsets = [0, 128], sizes = [8, 128], strides = [1, 1]} : vector<8x384xf32> to vector<8x128xf32>
    %444 = vector.extract_strided_slice %432 {offsets = [0, 128], sizes = [8, 128], strides = [1, 1]} : vector<8x384xf32> to vector<8x128xf32>
    %445 = arith.addf %443, %444 : vector<8x128xf32>
    %446 = arith.negf %445 : vector<8x128xf32>
    %447 = math.exp %446 : vector<8x128xf32>
    %cst_99 = arith.constant 1.000000e+00 : f32
    %448 = vector.broadcast %cst_99 : f32 to vector<8x128xf32>
    %449 = arith.addf %448, %447 : vector<8x128xf32>
    %450 = arith.divf %448, %449 : vector<8x128xf32>
    %451 = vector.extract_strided_slice %434 {offsets = [0, 256], sizes = [8, 128], strides = [1, 1]} : vector<8x384xf32> to vector<8x128xf32>
    %452 = vector.extract_strided_slice %432 {offsets = [0, 256], sizes = [8, 128], strides = [1, 1]} : vector<8x384xf32> to vector<8x128xf32>
    %453 = arith.addf %452, %5 : vector<8x128xf32>
    %454 = arith.mulf %442, %453 : vector<8x128xf32>
    %455 = arith.addf %451, %454 : vector<8x128xf32>
    %456 = math.tanh %455 : vector<8x128xf32>
    %457 = arith.subf %428, %456 : vector<8x128xf32>
    %458 = arith.mulf %450, %457 : vector<8x128xf32>
    %459 = arith.addf %456, %458 : vector<8x128xf32>
    %c48 = arith.constant 48 : index
    %c0_100 = arith.constant 0 : index
    %460 = vector.load %arg13[%c48, %c0_100] : memref<64x128xf32, #tpu.memory_space<vmem>>, vector<8x128xf32>
    tpu.vector_store %arg13[%c48, %c0_100], %459 {strides = array<i32>} : memref<64x128xf32, #tpu.memory_space<vmem>>, vector<8x128xf32>,
    %c0_101 = arith.constant 0 : index
    %c0_102 = arith.constant 0 : index
    %461 = vector.load %arg6[%c0_101, %c0_102] : memref<128x768xf32, #tpu.memory_space<vmem>>, vector<128x768xf32>
    %cst_103 = arith.constant dense<0.000000e+00> : vector<8x768xf32>
    %462 = tpu.matmul %459, %461, %cst_103 {dimension_numbers = #tpu.dot_dimension_numbers<[1], [0], [0], [1], [0, 0, 1, 1], [], []>} : vector<8x128xf32>, vector<128x768xf32>, vector<8x768xf32> -> vector<8x768xf32>
    %463 = vector.extract_strided_slice %462 {offsets = [0, 0], sizes = [8, 384], strides = [1, 1]} : vector<8x768xf32> to vector<8x384xf32>
    %464 = vector.extract_strided_slice %462 {offsets = [0, 384], sizes = [8, 384], strides = [1, 1]} : vector<8x768xf32> to vector<8x384xf32>
    %465 = arith.addf %464, %8 : vector<8x384xf32>
    %466 = vector.extract_strided_slice %465 {offsets = [0, 0], sizes = [8, 128], strides = [1, 1]} : vector<8x384xf32> to vector<8x128xf32>
    %467 = vector.extract_strided_slice %463 {offsets = [0, 0], sizes = [8, 128], strides = [1, 1]} : vector<8x384xf32> to vector<8x128xf32>
    %468 = arith.addf %466, %467 : vector<8x128xf32>
    %469 = arith.negf %468 : vector<8x128xf32>
    %470 = math.exp %469 : vector<8x128xf32>
    %cst_104 = arith.constant 1.000000e+00 : f32
    %471 = vector.broadcast %cst_104 : f32 to vector<8x128xf32>
    %472 = arith.addf %471, %470 : vector<8x128xf32>
    %473 = arith.divf %471, %472 : vector<8x128xf32>
    %474 = vector.extract_strided_slice %465 {offsets = [0, 128], sizes = [8, 128], strides = [1, 1]} : vector<8x384xf32> to vector<8x128xf32>
    %475 = vector.extract_strided_slice %463 {offsets = [0, 128], sizes = [8, 128], strides = [1, 1]} : vector<8x384xf32> to vector<8x128xf32>
    %476 = arith.addf %474, %475 : vector<8x128xf32>
    %477 = arith.negf %476 : vector<8x128xf32>
    %478 = math.exp %477 : vector<8x128xf32>
    %cst_105 = arith.constant 1.000000e+00 : f32
    %479 = vector.broadcast %cst_105 : f32 to vector<8x128xf32>
    %480 = arith.addf %479, %478 : vector<8x128xf32>
    %481 = arith.divf %479, %480 : vector<8x128xf32>
    %482 = vector.extract_strided_slice %465 {offsets = [0, 256], sizes = [8, 128], strides = [1, 1]} : vector<8x384xf32> to vector<8x128xf32>
    %483 = vector.extract_strided_slice %463 {offsets = [0, 256], sizes = [8, 128], strides = [1, 1]} : vector<8x384xf32> to vector<8x128xf32>
    %484 = arith.addf %483, %5 : vector<8x128xf32>
    %485 = arith.mulf %473, %484 : vector<8x128xf32>
    %486 = arith.addf %482, %485 : vector<8x128xf32>
    %487 = math.tanh %486 : vector<8x128xf32>
    %488 = arith.subf %459, %487 : vector<8x128xf32>
    %489 = arith.mulf %481, %488 : vector<8x128xf32>
    %490 = arith.addf %487, %489 : vector<8x128xf32>
    %c56_106 = arith.constant 56 : index
    %c0_107 = arith.constant 0 : index
    %491 = vector.load %arg13[%c56_106, %c0_107] : memref<64x128xf32, #tpu.memory_space<vmem>>, vector<8x128xf32>
    tpu.vector_store %arg13[%c56_106, %c0_107], %490 {strides = array<i32>} : memref<64x128xf32, #tpu.memory_space<vmem>>, vector<8x128xf32>,
    %c0_108 = arith.constant 0 : index
    %c0_109 = arith.constant 0 : index
    %492 = vector.load %arg13[%c0_108, %c0_109] : memref<64x128xf32, #tpu.memory_space<vmem>>, vector<64x128xf32>
    %c0_110 = arith.constant 0 : index
    %c0_111 = arith.constant 0 : index
    %493 = vector.load %arg10[%c0_110, %c0_111] : memref<128x128xf32, #tpu.memory_space<vmem>>, vector<128x128xf32>
    %cst_112 = arith.constant dense<0.000000e+00> : vector<64x128xf32>
    %494 = tpu.matmul %492, %493, %cst_112 {dimension_numbers = #tpu.dot_dimension_numbers<[1], [0], [0], [1], [0, 0, 1, 1], [], []>} : vector<64x128xf32>, vector<128x128xf32>, vector<64x128xf32> -> vector<64x128xf32>
    %c0_113 = arith.constant 0 : index
    %c0_114 = arith.constant 0 : index
    %495 = vector.load %arg11[%c0_113, %c0_114] : memref<1x128xf32, #tpu.memory_space<vmem>>, vector<1x128xf32>
    %496 = vector.broadcast %495 : vector<1x128xf32> to vector<64x128xf32>
    %497 = arith.addf %494, %496 : vector<64x128xf32>
    %c0_115 = arith.constant 0 : index
    %c0_116 = arith.constant 0 : index
    %498 = vector.load %arg12[%c0_115, %c0_116] : memref<64x128xf32, #tpu.memory_space<vmem>>, vector<64x128xf32>
    tpu.vector_store %arg12[%c0_115, %c0_116], %497 {strides = array<i32>} : memref<64x128xf32, #tpu.memory_space<vmem>>, vector<64x128xf32>,
    return
  }
}

</mosaic_0001>

<llo_original>
// kernel: tpu_custom_call.1
$region0: #{tpu_custom_call.1}
  #allocation0 [shape = 'u32[]', space=smem, size = 0x4, offset = 0x4, fixed_abs, tag = 'smem constant byte address 0x4 - core index']
  #allocation1 [shape = 'u32[144,128]{1,0:T(1,128)}', space=vmem, size = 0x12000, scoped, tag = 'internal scratch']
  #allocation2 [shape = 'f32[64,128]{1,0:T(8,128)}', space=vmem, size = 0x8000, scoped, tag = 'scratch operand']
  %s0 = inlined_call_operand.vmem [shape: f32[128,4], index: 0, kind: input, shape index: {}]
  %s1 = inlined_call_operand.vmem [shape: f32[4,384], index: 1, kind: input, shape index: {}]
  %s2 = inlined_call_operand.hbm [shape: f32[128,384], index: 2, kind: input, shape index: {}]
  %s3 = inlined_call_operand.vmem [shape: f32[1,384], index: 3, kind: input, shape index: {}]
  %s4 = inlined_call_operand.vmem [shape: f32[1,128], index: 4, kind: input, shape index: {}]
  %s5 = inlined_call_operand.vmem [shape: f32[4,384], index: 5, kind: input, shape index: {}]
  %s6 = inlined_call_operand.hbm [shape: f32[128,768], index: 6, kind: input, shape index: {}]
  %s7 = inlined_call_operand.vmem [shape: f32[1,384], index: 7, kind: input, shape index: {}]
  %s8 = inlined_call_operand.vmem [shape: f32[1,128], index: 8, kind: input, shape index: {}]
  %s9 = inlined_call_operand.vmem [shape: f32[1,384], index: 9, kind: input, shape index: {}]
  %s10 = inlined_call_operand.vmem [shape: f32[128,128], index: 10, kind: input, shape index: {}]
  %s11 = inlined_call_operand.vmem [shape: f32[1,128], index: 11, kind: input, shape index: {}]
  %s12 = inlined_call_operand.hbm [shape: f32[64,128], index: 12, kind: output, shape index: {}]
  %s13 = sld [smem:[#allocation0]]
  $region66: #{tpu_custom_call.1} parent=0
    _
  %s15 = ssub.s32 1, %s13
  %s16 = scalar_select 0, %s15, %s13
  $region1: #{tpu_custom_call.1} parent=0
    #allocation3 [shape = 'u8[196608]{0}', space=vmem, size = 0x30000, scoped, tag = 'input window, operand 2, single buffered']
    #allocation4 [shape = 's32[1]{0}', space=sflag, size = 0x4, scoped, tag = 'scoped memory for tpu_custom_call.1']
    #allocation5 [shape = 's32[1]{0}', space=sflag, size = 0x4, scoped, tag = 'scoped memory for tpu_custom_call.1']
    #allocation6 [shape = 'u8[393216]{0}', space=vmem, size = 0x60000, scoped, tag = 'input window, operand 6, single buffered']
    #allocation7 [shape = 's32[1]{0}', space=sflag, size = 0x4, scoped, tag = 'scoped memory for tpu_custom_call.1']
    #allocation8 [shape = 'u8[32768]{0}', space=vmem, size = 0x8000, scoped, tag = 'output window, operand 0, single buffered']
    %17 = vsyncpa [#allocation4], 0
    %18 = vsyncpa [#allocation7], 0
    %19 = vsyncpa [#allocation5], 0
    // Predicated region
    $region2: #{tpu_custom_call.1} parent=1 // pred_check
      _
    $region3: #{tpu_custom_call.1} parent=1 // pred_check_branch
      %21 = sbr.rel (0) target = $region5
    $region4: #{tpu_custom_call.1} parent=1 // pred_region
      _
    $region5: #{tpu_custom_call.1} parent=1 // pred_fallthru
      _
    // Predicated region
    $region6: #{tpu_custom_call.1} parent=1 // pred_check
      _
    $region7: #{tpu_custom_call.1} parent=1 // pred_check_branch
      %23 = sbr.rel (0) target = $region9
    $region8: #{tpu_custom_call.1} parent=1 // pred_region
      _
    $region9: #{tpu_custom_call.1} parent=1 // pred_fallthru
      _
    // Predicated region
    $region10: #{tpu_custom_call.1} parent=1 // pred_check
      _
    $region11: #{tpu_custom_call.1} parent=1 // pred_check_branch
      %25 = sbr.rel (0) target = $region13
    $region12: #{tpu_custom_call.1} parent=1 // pred_region
      %s27 = ssub.s32 6144, 6144
      %28 = vsyncadd [#allocation4], %s27
      %s29 = sshll.u32 [#allocation3], 4
      %s30 = int_to_ptr.vmem [resolvable:$true] %s29
      %35 = dma.hbm_to_vmem [thread:$0]  %s2, 6144, %s30, [#allocation4], 384, 384, 24
    $region13: #{tpu_custom_call.1} parent=1 // pred_fallthru
      _
    // Predicated region
    $region14: #{tpu_custom_call.1} parent=1 // pred_check
      _
    $region15: #{tpu_custom_call.1} parent=1 // pred_check_branch
      %37 = sbr.rel (0) target = $region17
    $region16: #{tpu_custom_call.1} parent=1 // pred_region
      _
    $region17: #{tpu_custom_call.1} parent=1 // pred_fallthru
      _
    // Predicated region
    $region18: #{tpu_custom_call.1} parent=1 // pred_check
      _
    $region19: #{tpu_custom_call.1} parent=1 // pred_check_branch
      %39 = sbr.rel (0) target = $region21
    $region20: #{tpu_custom_call.1} parent=1 // pred_region
      _
    $region21: #{tpu_custom_call.1} parent=1 // pred_fallthru
      _
    // Predicated region
    $region22: #{tpu_custom_call.1} parent=1 // pred_check
      _
    $region23: #{tpu_custom_call.1} parent=1 // pred_check_branch
      %41 = sbr.rel (0) target = $region25
    $region24: #{tpu_custom_call.1} parent=1 // pred_region
      _
    $region25: #{tpu_custom_call.1} parent=1 // pred_fallthru
      _
    // Predicated region
    $region26: #{tpu_custom_call.1} parent=1 // pred_check
      _
    $region27: #{tpu_custom_call.1} parent=1 // pred_check_branch
      %43 = sbr.rel (0) target = $region29
    $region28: #{tpu_custom_call.1} parent=1 // pred_region
      %s45 = ssub.s32 12288, 12288
      %46 = vsyncadd [#allocation7], %s45
      %s47 = sshll.u32 [#allocation6], 4
      %s48 = int_to_ptr.vmem [resolvable:$true] %s47
      %53 = dma.hbm_to_vmem [thread:$0]  %s6, 12288, %s48, [#allocation7], 768, 768, 48
    $region29: #{tpu_custom_call.1} parent=1 // pred_fallthru
      _
    // Predicated region
    $region30: #{tpu_custom_call.1} parent=1 // pred_check
      _
    $region31: #{tpu_custom_call.1} parent=1 // pred_check_branch
      %55 = sbr.rel (0) target = $region33
    $region32: #{tpu_custom_call.1} parent=1 // pred_region
      _
    $region33: #{tpu_custom_call.1} parent=1 // pred_fallthru
      _
    // Predicated region
    $region34: #{tpu_custom_call.1} parent=1 // pred_check
      _
    $region35: #{tpu_custom_call.1} parent=1 // pred_check_branch
      %57 = sbr.rel (0) target = $region37
    $region36: #{tpu_custom_call.1} parent=1 // pred_region
      _
    $region37: #{tpu_custom_call.1} parent=1 // pred_fallthru
      _
    // Predicated region
    $region38: #{tpu_custom_call.1} parent=1 // pred_check
      _
    $region39: #{tpu_custom_call.1} parent=1 // pred_check_branch
      %59 = sbr.rel (0) target = $region41
    $region40: #{tpu_custom_call.1} parent=1 // pred_region
      _
    $region41: #{tpu_custom_call.1} parent=1 // pred_fallthru
      _
    // Predicated region
    $region42: #{tpu_custom_call.1} parent=1 // pred_check
      _
    $region43: #{tpu_custom_call.1} parent=1 // pred_check_branch
      %61 = sbr.rel (0) target = $region45
    $region44: #{tpu_custom_call.1} parent=1 // pred_region
      _
    $region45: #{tpu_custom_call.1} parent=1 // pred_fallthru
      _
    // Predicated region
    $region46: #{tpu_custom_call.1} parent=1 // pred_check
      _
    $region47: #{tpu_custom_call.1} parent=1 // pred_check_branch
      %63 = sbr.rel (0) target = $region49
    $region48: #{tpu_custom_call.1} parent=1 // pred_region
      _
    $region49: #{tpu_custom_call.1} parent=1 // pred_fallthru
      _
    // Predicated region
    $region50: #{tpu_custom_call.1} parent=1 // pred_check
      _
    $region51: #{tpu_custom_call.1} parent=1 // pred_check_branch
      %65 = sbr.rel (0) target = $region53
    $region52: #{tpu_custom_call.1} parent=1 // pred_region
      %66 = dma.done [#allocation4], 6144
    $region53: #{tpu_custom_call.1} parent=1 // pred_fallthru
      _
    // Predicated region
    $region54: #{tpu_custom_call.1} parent=1 // pred_check
      _
    $region55: #{tpu_custom_call.1} parent=1 // pred_check_branch
      %68 = sbr.rel (0) target = $region57
    $region56: #{tpu_custom_call.1} parent=1 // pred_region
      %69 = dma.done [#allocation7], 12288
    $region57: #{tpu_custom_call.1} parent=1 // pred_fallthru
      _
    %v70 = vld [vmem:[%s4] sm:$0x1]
    %v72 = vlaneseq
    %v73 = vshrl.u32 %v72, 7
    %v74 = vsub.s32 0, %v73
    %v75 = vrot.slane %v70, %v74
    %v77 = vld [vmem:[%s8] sm:$0x1]
    %v79 = vlaneseq
    %v80 = vshrl.u32 %v79, 7
    %v81 = vsub.s32 0, %v80
    %v82 = vrot.slane %v77, %v81
    %v84 = vld [vmem:[%s9] sm:$0x7]
    %v86 = vlaneseq
    %v87 = vshrl.u32 %v86, 7
    %v88 = vsub.s32 0, %v87
    %v89 = vrot.slane %v84, %v88
    %v90 = vlaneseq
    %v91 = vshrl.u32 %v90, 7
    %v92 = vsub.s32 1, %v91
    %v93 = vrot.slane %v84, %v92
    %v94 = vlaneseq
    %v95 = vshrl.u32 %v94, 7
    %v96 = vsub.s32 2, %v95
    %v97 = vrot.slane %v84, %v96
    %v101 = vld [vmem:[%s0] sm:$0xff]
    %v102 = vld [vmem:[%s0 + $0x8] sm:$0xff]
    %v103 = vld [vmem:[%s0 + $0x10] sm:$0xff]
    %v104 = vld [vmem:[%s0 + $0x18] sm:$0xff]
    %v105 = vld [vmem:[%s0 + $0x20] sm:$0xff]
    %v106 = vld [vmem:[%s0 + $0x28] sm:$0xff]
    %v107 = vld [vmem:[%s0 + $0x30] sm:$0xff]
    %v108 = vld [vmem:[%s0 + $0x38] sm:$0xff]
    %v109 = vld [vmem:[%s1] sm:$0xff]
    %v110 = vld [vmem:[%s1 + $0x8] sm:$0xf]
    %v111 = vld [vmem:[%s3] sm:$0x7]
    %v113 = vlaneseq
    %v114 = vshrl.u32 %v113, 7
    %v115 = vsub.s32 0, %v114
    %v116 = vrot.slane %v111, %v115
    %v117 = vlaneseq
    %v118 = vshrl.u32 %v117, 7
    %v119 = vsub.s32 1, %v118
    %v120 = vrot.slane %v111, %v119
    %v121 = vlaneseq
    %v122 = vshrl.u32 %v121, 7
    %v123 = vsub.s32 2, %v122
    %v124 = vrot.slane %v111, %v123
    %v130 = vcombine.high %v109, %v109
    %vm131 = vcmask 31744
    %v133 = vsel %vm131, %v101, 0
    %v136 = vsel %vm131, %v102, 0
    %v139 = vsel %vm131, %v103, 0
    %v142 = vsel %vm131, %v104, 0
    %v145 = vsel %vm131, %v105, 0
    %v148 = vsel %vm131, %v106, 0
    %v151 = vsel %vm131, %v107, 0
    %v154 = vsel %vm131, %v108, 0
    %vm156 = vcmask 1043456
    %v157 = vsel %vm156, %v109, 0
    %v159 = vsel %vm156, %v130, 0
    %v161 = vsel %vm156, %v110, 0
    %163 = vmatprep.subr.mxu0 %v159
    %164 = vmatpush1.msra.mxu0 %v157
    %165 = vmatprep.subr.mxu0 0.0
    %166 = vmatpush1.msra.mxu0 0.0
    %167 = vmatprep.subr.mxu0 0.0
    %168 = vmatpush1.msra.mxu0 0.0
    %169 = vmatprep.subr.mxu0 0.0
    %170 = vmatpush1.msra.mxu0 0.0
    %171 = vmatprep.subr.mxu0 0.0
    %172 = vmatpush1.msra.mxu0 0.0
    %173 = vmatprep.subr.mxu0 0.0
    %174 = vmatpush1.msra.mxu0 0.0
    %175 = vmatprep.subr.mxu0 0.0
    %176 = vmatpush1.msra.mxu0 0.0
    %177 = vmatprep.subr.mxu0 0.0
    %178 = vmatpush1.msra.mxu0 0.0
    %179 = vmatprep.subr.mxu0 0.0
    %180 = vmatpush1.msra.mxu0 0.0
    %181 = vmatprep.subr.mxu0 0.0
    %182 = vmatpush1.msra.mxu0 0.0
    %183 = vmatprep.subr.mxu0 0.0
    %184 = vmatpush1.msra.mxu0 0.0
    %185 = vmatprep.subr.mxu0 0.0
    %186 = vmatpush1.msra.mxu0 0.0
    %187 = vmatprep.subr.mxu0 0.0
    %188 = vmatpush1.msra.mxu0 0.0
    %189 = vmatprep.subr.mxu0 0.0
    %190 = vmatpush1.msra.mxu0 0.0
    %191 = vmatprep.subr.mxu0 0.0
    %192 = vmatpush1.msra.mxu0 0.0
    %193 = vmatprep.subr.mxu0 0.0
    %194 = vmatpush1.msra.mxu0 0.0
    %195 = vmatprep.subr.mxu0 0.0
    %196 = vmatpush1.msra.mxu0 0.0
    %197 = vmatprep.subr.mxu0 0.0
    %198 = vmatpush1.msra.mxu0 0.0
    %199 = vmatprep.subr.mxu0 0.0
    %200 = vmatpush1.msra.mxu0 0.0
    %201 = vmatprep.subr.mxu0 0.0
    %202 = vmatpush1.msra.mxu0 0.0
    %203 = vmatprep.subr.mxu0 0.0
    %204 = vmatpush1.msra.mxu0 0.0
    %205 = vmatprep.subr.mxu0 0.0
    %206 = vmatpush1.msra.mxu0 0.0
    %207 = vmatprep.subr.mxu0 0.0
    %208 = vmatpush1.msra.mxu0 0.0
    %209 = vmatprep.subr.mxu0 0.0
    %210 = vmatpush1.msra.mxu0 0.0
    %211 = vmatprep.subr.mxu0 0.0
    %212 = vmatpush1.msra.mxu0 0.0
    %213 = vmatprep.subr.mxu0 0.0
    %214 = vmatpush1.msra.mxu0 0.0
    %215 = vmatprep.subr.mxu0 0.0
    %216 = vmatpush1.msra.mxu0 0.0
    %217 = vmatprep.subr.mxu0 0.0
    %218 = vmatpush1.msra.mxu0 0.0
    %219 = vmatprep.subr.mxu0 0.0
    %220 = vmatpush1.msra.mxu0 0.0
    %221 = vmatprep.subr.mxu0 0.0
    %222 = vmatpush1.msra.mxu0 0.0
    %223 = vmatprep.subr.mxu0 0.0
    %224 = vmatpush1.msra.mxu0 0.0
    %225 = vmatprep.subr.mxu0 0.0
    %226 = vmatpush1.msra.mxu0 0.0
    %227 = vmatprep.mubr.f32.mxu0 0.0
    %228 = vmatmul.mubr.f32.gmra.mrb[0].mxu0 %v133
    %v229 = vpop.f32.mrb[0].mxu0
    %v230 = vadd.f32 %v116, %v229
    %v231 = vpop.f32.mrb[0].mxu0
    %v232 = vadd.f32 %v120, %v231
    %233 = vmatprep.mubr.f32.mxu0 0.0
    %234 = vmatmul.mubr.f32.gmra.mrb[0].mxu0 %v136
    %v235 = vpop.f32.mrb[0].mxu0
    %v236 = vadd.f32 %v116, %v235
    %v237 = vpop.f32.mrb[0].mxu0
    %v238 = vadd.f32 %v120, %v237
    %239 = vmatprep.mubr.f32.mxu0 0.0
    %240 = vmatmul.mubr.f32.gmra.mrb[0].mxu0 %v139
    %v241 = vpop.f32.mrb[0].mxu0
    %v242 = vadd.f32 %v116, %v241
    %v243 = vpop.f32.mrb[0].mxu0
    %v244 = vadd.f32 %v120, %v243
    %245 = vmatprep.mubr.f32.mxu0 0.0
    %246 = vmatmul.mubr.f32.gmra.mrb[0].mxu0 %v142
    %v247 = vpop.f32.mrb[0].mxu0
    %v248 = vadd.f32 %v116, %v247
    %v249 = vpop.f32.mrb[0].mxu0
    %v250 = vadd.f32 %v120, %v249
    %251 = vmatprep.mubr.f32.mxu0 0.0
    %252 = vmatmul.mubr.f32.gmra.mrb[0].mxu0 %v145
    %v253 = vpop.f32.mrb[0].mxu0
    %v254 = vadd.f32 %v116, %v253
    %v255 = vpop.f32.mrb[0].mxu0
    %v256 = vadd.f32 %v120, %v255
    %257 = vmatprep.mubr.f32.mxu0 0.0
    %258 = vmatmul.mubr.f32.gmra.mrb[0].mxu0 %v148
    %v259 = vpop.f32.mrb[0].mxu0
    %v260 = vadd.f32 %v116, %v259
    %v261 = vpop.f32.mrb[0].mxu0
    %v262 = vadd.f32 %v120, %v261
    %263 = vmatprep.mubr.f32.mxu0 0.0
    %264 = vmatmul.mubr.f32.gmra.mrb[0].mxu0 %v151
    %v265 = vpop.f32.mrb[0].mxu0
    %v266 = vadd.f32 %v116, %v265
    %v267 = vpop.f32.mrb[0].mxu0
    %v268 = vadd.f32 %v120, %v267
    %269 = vmatprep.mubr.f32.mxu0 0.0
    %270 = vmatmul.mubr.f32.gmra.mrb[0].mxu0 %v154
    %v271 = vpop.f32.mrb[0].mxu0
    %v272 = vadd.f32 %v116, %v271
    %v273 = vpop.f32.mrb[0].mxu0
    %v274 = vadd.f32 %v120, %v273
    %275 = vdwg.mxu0
    %276 = vmatprep.subr.mxu0 0.0
    %277 = vmatpush1.msra.mxu0 %v161
    %278 = vmatprep.subr.mxu0 0.0
    %279 = vmatpush1.msra.mxu0 0.0
    %280 = vmatprep.subr.mxu0 0.0
    %281 = vmatpush1.msra.mxu0 0.0
    %282 = vmatprep.subr.mxu0 0.0
    %283 = vmatpush1.msra.mxu0 0.0
    %284 = vmatprep.subr.mxu0 0.0
    %285 = vmatpush1.msra.mxu0 0.0
    %286 = vmatprep.subr.mxu0 0.0
    %287 = vmatpush1.msra.mxu0 0.0
    %288 = vmatprep.subr.mxu0 0.0
    %289 = vmatpush1.msra.mxu0 0.0
    %290 = vmatprep.subr.mxu0 0.0
    %291 = vmatpush1.msra.mxu0 0.0
    %292 = vmatprep.subr.mxu0 0.0
    %293 = vmatpush1.msra.mxu0 0.0
    %294 = vmatprep.subr.mxu0 0.0
    %295 = vmatpush1.msra.mxu0 0.0
    %296 = vmatprep.subr.mxu0 0.0
    %297 = vmatpush1.msra.mxu0 0.0
    %298 = vmatprep.subr.mxu0 0.0
    %299 = vmatpush1.msra.mxu0 0.0
    %300 = vmatprep.subr.mxu0 0.0
    %301 = vmatpush1.msra.mxu0 0.0
    %302 = vmatprep.subr.mxu0 0.0
    %303 = vmatpush1.msra.mxu0 0.0
    %304 = vmatprep.subr.mxu0 0.0
    %305 = vmatpush1.msra.mxu0 0.0
    %306 = vmatprep.subr.mxu0 0.0
    %307 = vmatpush1.msra.mxu0 0.0
    %308 = vmatprep.subr.mxu0 0.0
    %309 = vmatpush1.msra.mxu0 0.0
    %310 = vmatprep.subr.mxu0 0.0
    %311 = vmatpush1.msra.mxu0 0.0
    %312 = vmatprep.subr.mxu0 0.0
    %313 = vmatpush1.msra.mxu0 0.0
    %314 = vmatprep.subr.mxu0 0.0
    %315 = vmatpush1.msra.mxu0 0.0
    %316 = vmatprep.subr.mxu0 0.0
    %317 = vmatpush1.msra.mxu0 0.0
    %318 = vmatprep.subr.mxu0 0.0
    %319 = vmatpush1.msra.mxu0 0.0
    %320 = vmatprep.subr.mxu0 0.0
    %321 = vmatpush1.msra.mxu0 0.0
    %322 = vmatprep.subr.mxu0 0.0
    %323 = vmatpush1.msra.mxu0 0.0
    %324 = vmatprep.subr.mxu0 0.0
    %325 = vmatpush1.msra.mxu0 0.0
    %326 = vmatprep.subr.mxu0 0.0
    %327 = vmatpush1.msra.mxu0 0.0
    %328 = vmatprep.subr.mxu0 0.0
    %329 = vmatpush1.msra.mxu0 0.0
    %330 = vmatprep.subr.mxu0 0.0
    %331 = vmatpush1.msra.mxu0 0.0
    %332 = vmatprep.subr.mxu0 0.0
    %333 = vmatpush1.msra.mxu0 0.0
    %334 = vmatprep.subr.mxu0 0.0
    %335 = vmatpush1.msra.mxu0 0.0
    %336 = vmatprep.subr.mxu0 0.0
    %337 = vmatpush1.msra.mxu0 0.0
    %338 = vmatprep.subr.mxu0 0.0
    %339 = vmatpush1.msra.mxu0 0.0
    %340 = vmatprep.mubr.f32.mxu0 0.0
    %341 = vmatmul.mubr.f32.gmra.mrb[0].mxu0 %v133
    %v342 = vpop.f32.mrb[0].mxu0
    %v343 = vadd.f32 %v124, %v342
    %v344 = vpop.f32.mrb[0].mxu0
    %345 = vmatprep.mubr.f32.mxu0 0.0
    %346 = vmatmul.mubr.f32.gmra.mrb[0].mxu0 %v136
    %v347 = vpop.f32.mrb[0].mxu0
    %v348 = vadd.f32 %v124, %v347
    %v349 = vpop.f32.mrb[0].mxu0
    %350 = vmatprep.mubr.f32.mxu0 0.0
    %351 = vmatmul.mubr.f32.gmra.mrb[0].mxu0 %v139
    %v352 = vpop.f32.mrb[0].mxu0
    %v353 = vadd.f32 %v124, %v352
    %v354 = vpop.f32.mrb[0].mxu0
    %355 = vmatprep.mubr.f32.mxu0 0.0
    %356 = vmatmul.mubr.f32.gmra.mrb[0].mxu0 %v142
    %v357 = vpop.f32.mrb[0].mxu0
    %v358 = vadd.f32 %v124, %v357
    %v359 = vpop.f32.mrb[0].mxu0
    %360 = vmatprep.mubr.f32.mxu0 0.0
    %361 = vmatmul.mubr.f32.gmra.mrb[0].mxu0 %v145
    %v362 = vpop.f32.mrb[0].mxu0
    %v363 = vadd.f32 %v124, %v362
    %v364 = vpop.f32.mrb[0].mxu0
    %365 = vmatprep.mubr.f32.mxu0 0.0
    %366 = vmatmul.mubr.f32.gmra.mrb[0].mxu0 %v148
    %v367 = vpop.f32.mrb[0].mxu0
    %v368 = vadd.f32 %v124, %v367
    %v369 = vpop.f32.mrb[0].mxu0
    %370 = vmatprep.mubr.f32.mxu0 0.0
    %371 = vmatmul.mubr.f32.gmra.mrb[0].mxu0 %v151
    %v372 = vpop.f32.mrb[0].mxu0
    %v373 = vadd.f32 %v124, %v372
    %v374 = vpop.f32.mrb[0].mxu0
    %375 = vmatprep.mubr.f32.mxu0 0.0
    %376 = vmatmul.mubr.f32.gmra.mrb[0].mxu0 %v154
    %v377 = vpop.f32.mrb[0].mxu0
    %v378 = vadd.f32 %v124, %v377
    %v379 = vpop.f32.mrb[0].mxu0
    %380 = vdwg.mxu0
    %v381 = vld [vmem:[%s0 + $0x38] sm:$0xff]
    %v382 = vld [vmem:[%s5] sm:$0xff]
    %v383 = vld [vmem:[%s5 + $0x8] sm:$0xf]
    %v384 = vld [vmem:[%s7] sm:$0x7]
    %v386 = vlaneseq
    %v387 = vshrl.u32 %v386, 7
    %v388 = vsub.s32 0, %v387
    %v389 = vrot.slane %v384, %v388
    %v390 = vlaneseq
    %v391 = vshrl.u32 %v390, 7
    %v392 = vsub.s32 1, %v391
    %v393 = vrot.slane %v384, %v392
    %v394 = vlaneseq
    %v395 = vshrl.u32 %v394, 7
    %v396 = vsub.s32 2, %v395
    %v397 = vrot.slane %v384, %v396
    %v403 = vcombine.high %v382, %v382
    %v405 = vsel %vm131, %v381, 0
    %v407 = vsel %vm156, %v382, 0
    %v409 = vsel %vm156, %v403, 0
    %v411 = vsel %vm156, %v383, 0
    %413 = vmatprep.subr.mxu0 %v409
    %414 = vmatpush1.msra.mxu0 %v407
    %415 = vmatprep.subr.mxu0 0.0
    %416 = vmatpush1.msra.mxu0 0.0
    %417 = vmatprep.subr.mxu0 0.0
    %418 = vmatpush1.msra.mxu0 0.0
    %419 = vmatprep.subr.mxu0 0.0
    %420 = vmatpush1.msra.mxu0 0.0
    %421 = vmatprep.subr.mxu0 0.0
    %422 = vmatpush1.msra.mxu0 0.0
    %423 = vmatprep.subr.mxu0 0.0
    %424 = vmatpush1.msra.mxu0 0.0
    %425 = vmatprep.subr.mxu0 0.0
    %426 = vmatpush1.msra.mxu0 0.0
    %427 = vmatprep.subr.mxu0 0.0
    %428 = vmatpush1.msra.mxu0 0.0
    %429 = vmatprep.subr.mxu0 0.0
    %430 = vmatpush1.msra.mxu0 0.0
    %431 = vmatprep.subr.mxu0 0.0
    %432 = vmatpush1.msra.mxu0 0.0
    %433 = vmatprep.subr.mxu0 0.0
    %434 = vmatpush1.msra.mxu0 0.0
    %435 = vmatprep.subr.mxu0 0.0
    %436 = vmatpush1.msra.mxu0 0.0
    %437 = vmatprep.subr.mxu0 0.0
    %438 = vmatpush1.msra.mxu0 0.0
    %439 = vmatprep.subr.mxu0 0.0
    %440 = vmatpush1.msra.mxu0 0.0
    %441 = vmatprep.subr.mxu0 0.0
    %442 = vmatpush1.msra.mxu0 0.0
    %443 = vmatprep.subr.mxu0 0.0
    %444 = vmatpush1.msra.mxu0 0.0
    %445 = vmatprep.subr.mxu0 0.0
    %446 = vmatpush1.msra.mxu0 0.0
    %447 = vmatprep.subr.mxu0 0.0
    %448 = vmatpush1.msra.mxu0 0.0
    %449 = vmatprep.subr.mxu0 0.0
    %450 = vmatpush1.msra.mxu0 0.0
    %451 = vmatprep.subr.mxu0 0.0
    %452 = vmatpush1.msra.mxu0 0.0
    %453 = vmatprep.subr.mxu0 0.0
    %454 = vmatpush1.msra.mxu0 0.0
    %455 = vmatprep.subr.mxu0 0.0
    %456 = vmatpush1.msra.mxu0 0.0
    %457 = vmatprep.subr.mxu0 0.0
    %458 = vmatpush1.msra.mxu0 0.0
    %459 = vmatprep.subr.mxu0 0.0
    %460 = vmatpush1.msra.mxu0 0.0
    %461 = vmatprep.subr.mxu0 0.0
    %462 = vmatpush1.msra.mxu0 0.0
    %463 = vmatprep.subr.mxu0 0.0
    %464 = vmatpush1.msra.mxu0 0.0
    %465 = vmatprep.subr.mxu0 0.0
    %466 = vmatpush1.msra.mxu0 0.0
    %467 = vmatprep.subr.mxu0 0.0
    %468 = vmatpush1.msra.mxu0 0.0
    %469 = vmatprep.subr.mxu0 0.0
    %470 = vmatpush1.msra.mxu0 0.0
    %471 = vmatprep.subr.mxu0 0.0
    %472 = vmatpush1.msra.mxu0 0.0
    %473 = vmatprep.subr.mxu0 0.0
    %474 = vmatpush1.msra.mxu0 0.0
    %475 = vmatprep.subr.mxu0 0.0
    %476 = vmatpush1.msra.mxu0 0.0
    %477 = vmatprep.mubr.f32.mxu0 0.0
    %478 = vmatmul.mubr.f32.gmra.mrb[0].mxu0 %v405
    %v479 = vpop.f32.mrb[0].mxu0
    %v480 = vadd.f32 %v389, %v479
    %v481 = vpop.f32.mrb[0].mxu0
    %v482 = vadd.f32 %v393, %v481
    %483 = vdwg.mxu0
    %484 = vmatprep.subr.mxu0 0.0
    %485 = vmatpush1.msra.mxu0 %v411
    %486 = vmatprep.subr.mxu0 0.0
    %487 = vmatpush1.msra.mxu0 0.0
    %488 = vmatprep.subr.mxu0 0.0
    %489 = vmatpush1.msra.mxu0 0.0
    %490 = vmatprep.subr.mxu0 0.0
    %491 = vmatpush1.msra.mxu0 0.0
    %492 = vmatprep.subr.mxu0 0.0
    %493 = vmatpush1.msra.mxu0 0.0
    %494 = vmatprep.subr.mxu0 0.0
    %495 = vmatpush1.msra.mxu0 0.0
    %496 = vmatprep.subr.mxu0 0.0
    %497 = vmatpush1.msra.mxu0 0.0
    %498 = vmatprep.subr.mxu0 0.0
    %499 = vmatpush1.msra.mxu0 0.0
    %500 = vmatprep.subr.mxu0 0.0
    %501 = vmatpush1.msra.mxu0 0.0
    %502 = vmatprep.subr.mxu0 0.0
    %503 = vmatpush1.msra.mxu0 0.0
    %504 = vmatprep.subr.mxu0 0.0
    %505 = vmatpush1.msra.mxu0 0.0
    %506 = vmatprep.subr.mxu0 0.0
    %507 = vmatpush1.msra.mxu0 0.0
    %508 = vmatprep.subr.mxu0 0.0
    %509 = vmatpush1.msra.mxu0 0.0
    %510 = vmatprep.subr.mxu0 0.0
    %511 = vmatpush1.msra.mxu0 0.0
    %512 = vmatprep.subr.mxu0 0.0
    %513 = vmatpush1.msra.mxu0 0.0
    %514 = vmatprep.subr.mxu0 0.0
    %515 = vmatpush1.msra.mxu0 0.0
    %516 = vmatprep.subr.mxu0 0.0
    %517 = vmatpush1.msra.mxu0 0.0
    %518 = vmatprep.subr.mxu0 0.0
    %519 = vmatpush1.msra.mxu0 0.0
    %520 = vmatprep.subr.mxu0 0.0
    %521 = vmatpush1.msra.mxu0 0.0
    %522 = vmatprep.subr.mxu0 0.0
    %523 = vmatpush1.msra.mxu0 0.0
    %524 = vmatprep.subr.mxu0 0.0
    %525 = vmatpush1.msra.mxu0 0.0
    %526 = vmatprep.subr.mxu0 0.0
    %527 = vmatpush1.msra.mxu0 0.0
    %528 = vmatprep.subr.mxu0 0.0
    %529 = vmatpush1.msra.mxu0 0.0
    %530 = vmatprep.subr.mxu0 0.0
    %531 = vmatpush1.msra.mxu0 0.0
    %532 = vmatprep.subr.mxu0 0.0
    %533 = vmatpush1.msra.mxu0 0.0
    %534 = vmatprep.subr.mxu0 0.0
    %535 = vmatpush1.msra.mxu0 0.0
    %536 = vmatprep.subr.mxu0 0.0
    %537 = vmatpush1.msra.mxu0 0.0
    %538 = vmatprep.subr.mxu0 0.0
    %539 = vmatpush1.msra.mxu0 0.0
    %540 = vmatprep.subr.mxu0 0.0
    %541 = vmatpush1.msra.mxu0 0.0
    %542 = vmatprep.subr.mxu0 0.0
    %543 = vmatpush1.msra.mxu0 0.0
    %544 = vmatprep.subr.mxu0 0.0
    %545 = vmatpush1.msra.mxu0 0.0
    %546 = vmatprep.subr.mxu0 0.0
    %547 = vmatpush1.msra.mxu0 0.0
    %548 = vmatprep.mubr.f32.mxu0 0.0
    %549 = vmatmul.mubr.f32.gmra.mrb[0].mxu0 %v405
    %v550 = vpop.f32.mrb[0].mxu0
    %v551 = vadd.f32 %v397, %v550
    %v552 = vpop.f32.mrb[0].mxu0
    %553 = vdwg.mxu0
    %v554 = vld [vmem:[#allocation3] sm:$0xff]
    %v555 = vld [vmem:[#allocation3 + $0x8] sm:$0xff]
    %v556 = vld [vmem:[#allocation3 + $0x10] sm:$0xff]
    %v557 = vld [vmem:[#allocation3 + $0x18] sm:$0xff]
    %v558 = vld [vmem:[#allocation3 + $0x20] sm:$0xff]
    %v559 = vld [vmem:[#allocation3 + $0x28] sm:$0xff]
    %v560 = vld [vmem:[#allocation3 + $0x30] sm:$0xff]
    %v561 = vld [vmem:[#allocation3 + $0x38] sm:$0xff]
    %v562 = vld [vmem:[#allocation3 + $0x40] sm:$0xff]
    %v563 = vld [vmem:[#allocation3 + $0x48] sm:$0xff]
    %v564 = vld [vmem:[#allocation3 + $0x50] sm:$0xff]
    %v565 = vld [vmem:[#allocation3 + $0x58] sm:$0xff]
    %v566 = vld [vmem:[#allocation3 + $0x60] sm:$0xff]
    %v567 = vld [vmem:[#allocation3 + $0x68] sm:$0xff]
    %v568 = vld [vmem:[#allocation3 + $0x70] sm:$0xff]
    %v569 = vld [vmem:[#allocation3 + $0x78] sm:$0xff]
    %v570 = vld [vmem:[#allocation3 + $0x80] sm:$0xff]
    %v571 = vld [vmem:[#allocation3 + $0x88] sm:$0xff]
    %v572 = vld [vmem:[#allocation3 + $0x90] sm:$0xff]
    %v573 = vld [vmem:[#allocation3 + $0x98] sm:$0xff]
    %v574 = vld [vmem:[#allocation3 + $0xa0] sm:$0xff]
    %v575 = vld [vmem:[#allocation3 + $0xa8] sm:$0xff]
    %v576 = vld [vmem:[#allocation3 + $0xb0] sm:$0xff]
    %v577 = vld [vmem:[#allocation3 + $0xb8] sm:$0xff]
    %v578 = vld [vmem:[#allocation3 + $0xc0] sm:$0xff]
    %v579 = vld [vmem:[#allocation3 + $0xc8] sm:$0xff]
    %v580 = vld [vmem:[#allocation3 + $0xd0] sm:$0xff]
    %v581 = vld [vmem:[#allocation3 + $0xd8] sm:$0xff]
    %v582 = vld [vmem:[#allocation3 + $0xe0] sm:$0xff]
    %v583 = vld [vmem:[#allocation3 + $0xe8] sm:$0xff]
    %v584 = vld [vmem:[#allocation3 + $0xf0] sm:$0xff]
    %v585 = vld [vmem:[#allocation3 + $0xf8] sm:$0xff]
    %v586 = vld [vmem:[#allocation3 + $0x100] sm:$0xff]
    %v587 = vld [vmem:[#allocation3 + $0x108] sm:$0xff]
    %v588 = vld [vmem:[#allocation3 + $0x110] sm:$0xff]
    %v589 = vld [vmem:[#allocation3 + $0x118] sm:$0xff]
    %v590 = vld [vmem:[#allocation3 + $0x120] sm:$0xff]
    %v591 = vld [vmem:[#allocation3 + $0x128] sm:$0xff]
    %v592 = vld [vmem:[#allocation3 + $0x130] sm:$0xff]
    %v593 = vld [vmem:[#allocation3 + $0x138] sm:$0xff]
    %v594 = vld [vmem:[#allocation3 + $0x140] sm:$0xff]
    %v595 = vld [vmem:[#allocation3 + $0x148] sm:$0xff]
    %v596 = vld [vmem:[#allocation3 + $0x150] sm:$0xff]
    %v597 = vld [vmem:[#allocation3 + $0x158] sm:$0xff]
    %v598 = vld [vmem:[#allocation3 + $0x160] sm:$0xff]
    %v599 = vld [vmem:[#allocation3 + $0x168] sm:$0xff]
    %v600 = vld [vmem:[#allocation3 + $0x170] sm:$0xff]
    %v601 = vld [vmem:[#allocation3 + $0x178] sm:$0xff]
    %602 = vmatprep.subr.mxu0 %v555
    %603 = vmatpush1.msra.mxu0 %v554
    %604 = vmatprep.subr.mxu0 %v558
    %605 = vmatpush1.msra.mxu0 %v557
    %606 = vmatprep.subr.mxu0 %v561
    %607 = vmatpush1.msra.mxu0 %v560
    %608 = vmatprep.subr.mxu0 %v564
    %609 = vmatpush1.msra.mxu0 %v563
    %610 = vmatprep.subr.mxu0 %v567
    %611 = vmatpush1.msra.mxu0 %v566
    %612 = vmatprep.subr.mxu0 %v570
    %613 = vmatpush1.msra.mxu0 %v569
    %614 = vmatprep.subr.mxu0 %v573
    %615 = vmatpush1.msra.mxu0 %v572
    %616 = vmatprep.subr.mxu0 %v576
    %617 = vmatpush1.msra.mxu0 %v575
    %618 = vmatprep.subr.mxu0 %v579
    %619 = vmatpush1.msra.mxu0 %v578
    %620 = vmatprep.subr.mxu0 %v582
    %621 = vmatpush1.msra.mxu0 %v581
    %622 = vmatprep.subr.mxu0 %v585
    %623 = vmatpush1.msra.mxu0 %v584
    %624 = vmatprep.subr.mxu0 %v588
    %625 = vmatpush1.msra.mxu0 %v587
    %626 = vmatprep.subr.mxu0 %v591
    %627 = vmatpush1.msra.mxu0 %v590
    %628 = vmatprep.subr.mxu0 %v594
    %629 = vmatpush1.msra.mxu0 %v593
    %630 = vmatprep.subr.mxu0 %v597
    %631 = vmatpush1.msra.mxu0 %v596
    %632 = vmatprep.subr.mxu0 %v600
    %633 = vmatpush1.msra.mxu0 %v599
    %634 = vmatprep.subr.mxu0 0.0
    %635 = vmatpush1.msra.mxu0 0.0
    %636 = vmatprep.subr.mxu0 0.0
    %637 = vmatpush1.msra.mxu0 0.0
    %638 = vmatprep.subr.mxu0 0.0
    %639 = vmatpush1.msra.mxu0 0.0
    %640 = vmatprep.subr.mxu0 0.0
    %641 = vmatpush1.msra.mxu0 0.0
    %642 = vmatprep.subr.mxu0 0.0
    %643 = vmatpush1.msra.mxu0 0.0
    %644 = vmatprep.subr.mxu0 0.0
    %645 = vmatpush1.msra.mxu0 0.0
    %646 = vmatprep.subr.mxu0 0.0
    %647 = vmatpush1.msra.mxu0 0.0
    %648 = vmatprep.subr.mxu0 0.0
    %649 = vmatpush1.msra.mxu0 0.0
    %650 = vmatprep.subr.mxu0 0.0
    %651 = vmatpush1.msra.mxu0 0.0
    %652 = vmatprep.subr.mxu0 0.0
    %653 = vmatpush1.msra.mxu0 0.0
    %654 = vmatprep.subr.mxu0 0.0
    %655 = vmatpush1.msra.mxu0 0.0
    %656 = vmatprep.subr.mxu0 0.0
    %657 = vmatpush1.msra.mxu0 0.0
    %658 = vmatprep.subr.mxu0 0.0
    %659 = vmatpush1.msra.mxu0 0.0
    %660 = vmatprep.subr.mxu0 0.0
    %661 = vmatpush1.msra.mxu0 0.0
    %662 = vmatprep.subr.mxu0 0.0
    %663 = vmatpush1.msra.mxu0 0.0
    %664 = vmatprep.subr.mxu0 0.0
    %665 = vmatpush1.msra.mxu0 0.0
    %666 = vmatprep.mubr.f32.mxu0 0.0
    %667 = vmatmul.mubr.f32.gmra.mrb[0].mxu0 0.0
    %v668 = vpop.f32.mrb[0].mxu0
    %v669 = vadd.f32 0.0, %v668
    %v670 = vpop.f32.mrb[0].mxu0
    %v671 = vadd.f32 0.0, %v670
    %672 = vdwg.mxu0
    %673 = vmatprep.subr.mxu0 0.0
    %674 = vmatpush1.msra.mxu0 %v556
    %675 = vmatprep.subr.mxu0 0.0
    %676 = vmatpush1.msra.mxu0 %v559
    %677 = vmatprep.subr.mxu0 0.0
    %678 = vmatpush1.msra.mxu0 %v562
    %679 = vmatprep.subr.mxu0 0.0
    %680 = vmatpush1.msra.mxu0 %v565
    %681 = vmatprep.subr.mxu0 0.0
    %682 = vmatpush1.msra.mxu0 %v568
    %683 = vmatprep.subr.mxu0 0.0
    %684 = vmatpush1.msra.mxu0 %v571
    %685 = vmatprep.subr.mxu0 0.0
    %686 = vmatpush1.msra.mxu0 %v574
    %687 = vmatprep.subr.mxu0 0.0
    %688 = vmatpush1.msra.mxu0 %v577
    %689 = vmatprep.subr.mxu0 0.0
    %690 = vmatpush1.msra.mxu0 %v580
    %691 = vmatprep.subr.mxu0 0.0
    %692 = vmatpush1.msra.mxu0 %v583
    %693 = vmatprep.subr.mxu0 0.0
    %694 = vmatpush1.msra.mxu0 %v586
    %695 = vmatprep.subr.mxu0 0.0
    %696 = vmatpush1.msra.mxu0 %v589
    %697 = vmatprep.subr.mxu0 0.0
    %698 = vmatpush1.msra.mxu0 %v592
    %699 = vmatprep.subr.mxu0 0.0
    %700 = vmatpush1.msra.mxu0 %v595
    %701 = vmatprep.subr.mxu0 0.0
    %702 = vmatpush1.msra.mxu0 %v598
    %703 = vmatprep.subr.mxu0 0.0
    %704 = vmatpush1.msra.mxu0 %v601
    %705 = vmatprep.subr.mxu0 0.0
    %706 = vmatpush1.msra.mxu0 0.0
    %707 = vmatprep.subr.mxu0 0.0
    %708 = vmatpush1.msra.mxu0 0.0
    %709 = vmatprep.subr.mxu0 0.0
    %710 = vmatpush1.msra.mxu0 0.0
    %711 = vmatprep.subr.mxu0 0.0
    %712 = vmatpush1.msra.mxu0 0.0
    %713 = vmatprep.subr.mxu0 0.0
    %714 = vmatpush1.msra.mxu0 0.0
    %715 = vmatprep.subr.mxu0 0.0
    %716 = vmatpush1.msra.mxu0 0.0
    %717 = vmatprep.subr.mxu0 0.0
    %718 = vmatpush1.msra.mxu0 0.0
    %719 = vmatprep.subr.mxu0 0.0
    %720 = vmatpush1.msra.mxu0 0.0
    %721 = vmatprep.subr.mxu0 0.0
    %722 = vmatpush1.msra.mxu0 0.0
    %723 = vmatprep.subr.mxu0 0.0
    %724 = vmatpush1.msra.mxu0 0.0
    %725 = vmatprep.subr.mxu0 0.0
    %726 = vmatpush1.msra.mxu0 0.0
    %727 = vmatprep.subr.mxu0 0.0
    %728 = vmatpush1.msra.mxu0 0.0
    %729 = vmatprep.subr.mxu0 0.0
    %730 = vmatpush1.msra.mxu0 0.0
    %731 = vmatprep.subr.mxu0 0.0
    %732 = vmatpush1.msra.mxu0 0.0
    %733 = vmatprep.subr.mxu0 0.0
    %734 = vmatpush1.msra.mxu0 0.0
    %735 = vmatprep.subr.mxu0 0.0
    %736 = vmatpush1.msra.mxu0 0.0
    %737 = vmatprep.mubr.f32.mxu0 0.0
    %738 = vmatmul.mubr.f32.gmra.mrb[0].mxu0 0.0
    %v739 = vpop.f32.mrb[0].mxu0
    %v740 = vadd.f32 0.0, %v739
    %v741 = vpop.f32.mrb[0].mxu0
    %742 = vdwg.mxu0
    %v743 = vadd.f32 %v230, %v669
    %v744 = vxor.u32 %v743, 2147483648
    %v745 = vmul.f32 %v744, 1.442695
    %v746 = vpow.pop %v745
    %v747 = vadd.f32 %v746, 1.0
    %v748 = vrcp.pop %v747
    %v749 = vmul.f32 1.0, %v748
    %v750 = vadd.f32 %v232, %v671
    %v751 = vxor.u32 %v750, 2147483648
    %v752 = vmul.f32 %v751, 1.442695
    %v753 = vpow.pop %v752
    %v754 = vadd.f32 %v753, 1.0
    %v755 = vrcp.pop %v754
    %v756 = vmul.f32 1.0, %v755
    %v757 = vadd.f32 %v740, %v75
    %v758 = vmul.f32 %v749, %v757
    %v759 = vadd.f32 %v343, %v758
    %v760 = vtanh.pop %v759
    %v761 = vsub.f32 0.0, %v760
    %v762 = vmul.f32 %v756, %v761
    %v763 = vadd.f32 %v760, %v762
    %764 = vmatprep.subr.mxu0 %v555
    %765 = vmatpush1.msra.mxu0 %v554
    %766 = vmatprep.subr.mxu0 %v558
    %767 = vmatpush1.msra.mxu0 %v557
    %768 = vmatprep.subr.mxu0 %v561
    %769 = vmatpush1.msra.mxu0 %v560
    %770 = vmatprep.subr.mxu0 %v564
    %771 = vmatpush1.msra.mxu0 %v563
    %772 = vmatprep.subr.mxu0 %v567
    %773 = vmatpush1.msra.mxu0 %v566
    %774 = vmatprep.subr.mxu0 %v570
    %775 = vmatpush1.msra.mxu0 %v569
    %776 = vmatprep.subr.mxu0 %v573
    %777 = vmatpush1.msra.mxu0 %v572
    %778 = vmatprep.subr.mxu0 %v576
    %779 = vmatpush1.msra.mxu0 %v575
    %780 = vmatprep.subr.mxu0 %v579
    %781 = vmatpush1.msra.mxu0 %v578
    %782 = vmatprep.subr.mxu0 %v582
    %783 = vmatpush1.msra.mxu0 %v581
    %784 = vmatprep.subr.mxu0 %v585
    %785 = vmatpush1.msra.mxu0 %v584
    %786 = vmatprep.subr.mxu0 %v588
    %787 = vmatpush1.msra.mxu0 %v587
    %788 = vmatprep.subr.mxu0 %v591
    %789 = vmatpush1.msra.mxu0 %v590
    %790 = vmatprep.subr.mxu0 %v594
    %791 = vmatpush1.msra.mxu0 %v593
    %792 = vmatprep.subr.mxu0 %v597
    %793 = vmatpush1.msra.mxu0 %v596
    %794 = vmatprep.subr.mxu0 %v600
    %795 = vmatpush1.msra.mxu0 %v599
    %796 = vmatprep.subr.mxu0 0.0
    %797 = vmatpush1.msra.mxu0 0.0
    %798 = vmatprep.subr.mxu0 0.0
    %799 = vmatpush1.msra.mxu0 0.0
    %800 = vmatprep.subr.mxu0 0.0
    %801 = vmatpush1.msra.mxu0 0.0
    %802 = vmatprep.subr.mxu0 0.0
    %803 = vmatpush1.msra.mxu0 0.0
    %804 = vmatprep.subr.mxu0 0.0
    %805 = vmatpush1.msra.mxu0 0.0
    %806 = vmatprep.subr.mxu0 0.0
    %807 = vmatpush1.msra.mxu0 0.0
    %808 = vmatprep.subr.mxu0 0.0
    %809 = vmatpush1.msra.mxu0 0.0
    %810 = vmatprep.subr.mxu0 0.0
    %811 = vmatpush1.msra.mxu0 0.0
    %812 = vmatprep.subr.mxu0 0.0
    %813 = vmatpush1.msra.mxu0 0.0
    %814 = vmatprep.subr.mxu0 0.0
    %815 = vmatpush1.msra.mxu0 0.0
    %816 = vmatprep.subr.mxu0 0.0
    %817 = vmatpush1.msra.mxu0 0.0
    %818 = vmatprep.subr.mxu0 0.0
    %819 = vmatpush1.msra.mxu0 0.0
    %820 = vmatprep.subr.mxu0 0.0
    %821 = vmatpush1.msra.mxu0 0.0
    %822 = vmatprep.subr.mxu0 0.0
    %823 = vmatpush1.msra.mxu0 0.0
    %824 = vmatprep.subr.mxu0 0.0
    %825 = vmatpush1.msra.mxu0 0.0
    %826 = vmatprep.subr.mxu0 0.0
    %827 = vmatpush1.msra.mxu0 0.0
    %828 = vmatprep.mubr.f32.mxu0 0.0
    %829 = vmatmul.mubr.f32.gmra.mrb[0].mxu0 %v763
    %v830 = vpop.f32.mrb[0].mxu0
    %v831 = vadd.f32 0.0, %v830
    %v832 = vpop.f32.mrb[0].mxu0
    %v833 = vadd.f32 0.0, %v832
    %834 = vdwg.mxu0
    %835 = vmatprep.subr.mxu0 0.0
    %836 = vmatpush1.msra.mxu0 %v556
    %837 = vmatprep.subr.mxu0 0.0
    %838 = vmatpush1.msra.mxu0 %v559
    %839 = vmatprep.subr.mxu0 0.0
    %840 = vmatpush1.msra.mxu0 %v562
    %841 = vmatprep.subr.mxu0 0.0
    %842 = vmatpush1.msra.mxu0 %v565
    %843 = vmatprep.subr.mxu0 0.0
    %844 = vmatpush1.msra.mxu0 %v568
    %845 = vmatprep.subr.mxu0 0.0
    %846 = vmatpush1.msra.mxu0 %v571
    %847 = vmatprep.subr.mxu0 0.0
    %848 = vmatpush1.msra.mxu0 %v574
    %849 = vmatprep.subr.mxu0 0.0
    %850 = vmatpush1.msra.mxu0 %v577
    %851 = vmatprep.subr.mxu0 0.0
    %852 = vmatpush1.msra.mxu0 %v580
    %853 = vmatprep.subr.mxu0 0.0
    %854 = vmatpush1.msra.mxu0 %v583
    %855 = vmatprep.subr.mxu0 0.0
    %856 = vmatpush1.msra.mxu0 %v586
    %857 = vmatprep.subr.mxu0 0.0
    %858 = vmatpush1.msra.mxu0 %v589
    %859 = vmatprep.subr.mxu0 0.0
    %860 = vmatpush1.msra.mxu0 %v592
    %861 = vmatprep.subr.mxu0 0.0
    %862 = vmatpush1.msra.mxu0 %v595
    %863 = vmatprep.subr.mxu0 0.0
    %864 = vmatpush1.msra.mxu0 %v598
    %865 = vmatprep.subr.mxu0 0.0
    %866 = vmatpush1.msra.mxu0 %v601
    %867 = vmatprep.subr.mxu0 0.0
    %868 = vmatpush1.msra.mxu0 0.0
    %869 = vmatprep.subr.mxu0 0.0
    %870 = vmatpush1.msra.mxu0 0.0
    %871 = vmatprep.subr.mxu0 0.0
    %872 = vmatpush1.msra.mxu0 0.0
    %873 = vmatprep.subr.mxu0 0.0
    %874 = vmatpush1.msra.mxu0 0.0
    %875 = vmatprep.subr.mxu0 0.0
    %876 = vmatpush1.msra.mxu0 0.0
    %877 = vmatprep.subr.mxu0 0.0
    %878 = vmatpush1.msra.mxu0 0.0
    %879 = vmatprep.subr.mxu0 0.0
    %880 = vmatpush1.msra.mxu0 0.0
    %881 = vmatprep.subr.mxu0 0.0
    %882 = vmatpush1.msra.mxu0 0.0
    %883 = vmatprep.subr.mxu0 0.0
    %884 = vmatpush1.msra.mxu0 0.0
    %885 = vmatprep.subr.mxu0 0.0
    %886 = vmatpush1.msra.mxu0 0.0
    %887 = vmatprep.subr.mxu0 0.0
    %888 = vmatpush1.msra.mxu0 0.0
    %889 = vmatprep.subr.mxu0 0.0
    %890 = vmatpush1.msra.mxu0 0.0
    %891 = vmatprep.subr.mxu0 0.0
    %892 = vmatpush1.msra.mxu0 0.0
    %893 = vmatprep.subr.mxu0 0.0
    %894 = vmatpush1.msra.mxu0 0.0
    %895 = vmatprep.subr.mxu0 0.0
    %896 = vmatpush1.msra.mxu0 0.0
    %897 = vmatprep.subr.mxu0 0.0
    %898 = vmatpush1.msra.mxu0 0.0
    %899 = vmatprep.mubr.f32.mxu0 0.0
    %900 = vmatmul.mubr.f32.gmra.mrb[0].mxu0 %v763
    %v901 = vpop.f32.mrb[0].mxu0
    %v902 = vadd.f32 0.0, %v901
    %v903 = vpop.f32.mrb[0].mxu0
    %904 = vdwg.mxu0
    %v905 = vadd.f32 %v236, %v831
    %v906 = vxor.u32 %v905, 2147483648
    %v907 = vmul.f32 %v906, 1.442695
    %v908 = vpow.pop %v907
    %v909 = vadd.f32 %v908, 1.0
    %v910 = vrcp.pop %v909
    %v911 = vmul.f32 1.0, %v910
    %v912 = vadd.f32 %v238, %v833
    %v913 = vxor.u32 %v912, 2147483648
    %v914 = vmul.f32 %v913, 1.442695
    %v915 = vpow.pop %v914
    %v916 = vadd.f32 %v915, 1.0
    %v917 = vrcp.pop %v916
    %v918 = vmul.f32 1.0, %v917
    %v919 = vadd.f32 %v902, %v75
    %v920 = vmul.f32 %v911, %v919
    %v921 = vadd.f32 %v348, %v920
    %v922 = vtanh.pop %v921
    %v923 = vsub.f32 %v763, %v922
    %v924 = vmul.f32 %v918, %v923
    %v925 = vadd.f32 %v922, %v924
    %926 = vmatprep.subr.mxu0 %v555
    %927 = vmatpush1.msra.mxu0 %v554
    %928 = vmatprep.subr.mxu0 %v558
    %929 = vmatpush1.msra.mxu0 %v557
    %930 = vmatprep.subr.mxu0 %v561
    %931 = vmatpush1.msra.mxu0 %v560
    %932 = vmatprep.subr.mxu0 %v564
    %933 = vmatpush1.msra.mxu0 %v563
    %934 = vmatprep.subr.mxu0 %v567
    %935 = vmatpush1.msra.mxu0 %v566
    %936 = vmatprep.subr.mxu0 %v570
    %937 = vmatpush1.msra.mxu0 %v569
    %938 = vmatprep.subr.mxu0 %v573
    %939 = vmatpush1.msra.mxu0 %v572
    %940 = vmatprep.subr.mxu0 %v576
    %941 = vmatpush1.msra.mxu0 %v575
    %942 = vmatprep.subr.mxu0 %v579
    %943 = vmatpush1.msra.mxu0 %v578
    %944 = vmatprep.subr.mxu0 %v582
    %945 = vmatpush1.msra.mxu0 %v581
    %946 = vmatprep.subr.mxu0 %v585
    %947 = vmatpush1.msra.mxu0 %v584
    %948 = vmatprep.subr.mxu0 %v588
    %949 = vmatpush1.msra.mxu0 %v587
    %950 = vmatprep.subr.mxu0 %v591
    %951 = vmatpush1.msra.mxu0 %v590
    %952 = vmatprep.subr.mxu0 %v594
    %953 = vmatpush1.msra.mxu0 %v593
    %954 = vmatprep.subr.mxu0 %v597
    %955 = vmatpush1.msra.mxu0 %v596
    %956 = vmatprep.subr.mxu0 %v600
    %957 = vmatpush1.msra.mxu0 %v599
    %958 = vmatprep.subr.mxu0 0.0
    %959 = vmatpush1.msra.mxu0 0.0
    %960 = vmatprep.subr.mxu0 0.0
    %961 = vmatpush1.msra.mxu0 0.0
    %962 = vmatprep.subr.mxu0 0.0
    %963 = vmatpush1.msra.mxu0 0.0
    %964 = vmatprep.subr.mxu0 0.0
    %965 = vmatpush1.msra.mxu0 0.0
    %966 = vmatprep.subr.mxu0 0.0
    %967 = vmatpush1.msra.mxu0 0.0
    %968 = vmatprep.subr.mxu0 0.0
    %969 = vmatpush1.msra.mxu0 0.0
    %970 = vmatprep.subr.mxu0 0.0
    %971 = vmatpush1.msra.mxu0 0.0
    %972 = vmatprep.subr.mxu0 0.0
    %973 = vmatpush1.msra.mxu0 0.0
    %974 = vmatprep.subr.mxu0 0.0
    %975 = vmatpush1.msra.mxu0 0.0
    %976 = vmatprep.subr.mxu0 0.0
    %977 = vmatpush1.msra.mxu0 0.0
    %978 = vmatprep.subr.mxu0 0.0
    %979 = vmatpush1.msra.mxu0 0.0
    %980 = vmatprep.subr.mxu0 0.0
    %981 = vmatpush1.msra.mxu0 0.0
    %982 = vmatprep.subr.mxu0 0.0
    %983 = vmatpush1.msra.mxu0 0.0
    %984 = vmatprep.subr.mxu0 0.0
    %985 = vmatpush1.msra.mxu0 0.0
    %986 = vmatprep.subr.mxu0 0.0
    %987 = vmatpush1.msra.mxu0 0.0
    %988 = vmatprep.subr.mxu0 0.0
    %989 = vmatpush1.msra.mxu0 0.0
    %990 = vmatprep.mubr.f32.mxu0 0.0
    %991 = vmatmul.mubr.f32.gmra.mrb[0].mxu0 %v925
    %v992 = vpop.f32.mrb[0].mxu0
    %v993 = vadd.f32 0.0, %v992
    %v994 = vpop.f32.mrb[0].mxu0
    %v995 = vadd.f32 0.0, %v994
    %996 = vdwg.mxu0
    %997 = vmatprep.subr.mxu0 0.0
    %998 = vmatpush1.msra.mxu0 %v556
    %999 = vmatprep.subr.mxu0 0.0
    %1000 = vmatpush1.msra.mxu0 %v559
    %1001 = vmatprep.subr.mxu0 0.0
    %1002 = vmatpush1.msra.mxu0 %v562
    %1003 = vmatprep.subr.mxu0 0.0
    %1004 = vmatpush1.msra.mxu0 %v565
    %1005 = vmatprep.subr.mxu0 0.0
    %1006 = vmatpush1.msra.mxu0 %v568
    %1007 = vmatprep.subr.mxu0 0.0
    %1008 = vmatpush1.msra.mxu0 %v571
    %1009 = vmatprep.subr.mxu0 0.0
    %1010 = vmatpush1.msra.mxu0 %v574
    %1011 = vmatprep.subr.mxu0 0.0
    %1012 = vmatpush1.msra.mxu0 %v577
    %1013 = vmatprep.subr.mxu0 0.0
    %1014 = vmatpush1.msra.mxu0 %v580
    %1015 = vmatprep.subr.mxu0 0.0
    %1016 = vmatpush1.msra.mxu0 %v583
    %1017 = vmatprep.subr.mxu0 0.0
    %1018 = vmatpush1.msra.mxu0 %v586
    %1019 = vmatprep.subr.mxu0 0.0
    %1020 = vmatpush1.msra.mxu0 %v589
    %1021 = vmatprep.subr.mxu0 0.0
    %1022 = vmatpush1.msra.mxu0 %v592
    %1023 = vmatprep.subr.mxu0 0.0
    %1024 = vmatpush1.msra.mxu0 %v595
    %1025 = vmatprep.subr.mxu0 0.0
    %1026 = vmatpush1.msra.mxu0 %v598
    %1027 = vmatprep.subr.mxu0 0.0
    %1028 = vmatpush1.msra.mxu0 %v601
    %1029 = vmatprep.subr.mxu0 0.0
    %1030 = vmatpush1.msra.mxu0 0.0
    %1031 = vmatprep.subr.mxu0 0.0
    %1032 = vmatpush1.msra.mxu0 0.0
    %1033 = vmatprep.subr.mxu0 0.0
    %1034 = vmatpush1.msra.mxu0 0.0
    %1035 = vmatprep.subr.mxu0 0.0
    %1036 = vmatpush1.msra.mxu0 0.0
    %1037 = vmatprep.subr.mxu0 0.0
    %1038 = vmatpush1.msra.mxu0 0.0
    %1039 = vmatprep.subr.mxu0 0.0
    %1040 = vmatpush1.msra.mxu0 0.0
    %1041 = vmatprep.subr.mxu0 0.0
    %1042 = vmatpush1.msra.mxu0 0.0
    %1043 = vmatprep.subr.mxu0 0.0
    %1044 = vmatpush1.msra.mxu0 0.0
    %1045 = vmatprep.subr.mxu0 0.0
    %1046 = vmatpush1.msra.mxu0 0.0
    %1047 = vmatprep.subr.mxu0 0.0
    %1048 = vmatpush1.msra.mxu0 0.0
    %1049 = vmatprep.subr.mxu0 0.0
    %1050 = vmatpush1.msra.mxu0 0.0
    %1051 = vmatprep.subr.mxu0 0.0
    %1052 = vmatpush1.msra.mxu0 0.0
    %1053 = vmatprep.subr.mxu0 0.0
    %1054 = vmatpush1.msra.mxu0 0.0
    %1055 = vmatprep.subr.mxu0 0.0
    %1056 = vmatpush1.msra.mxu0 0.0
    %1057 = vmatprep.subr.mxu0 0.0
    %1058 = vmatpush1.msra.mxu0 0.0
    %1059 = vmatprep.subr.mxu0 0.0
    %1060 = vmatpush1.msra.mxu0 0.0
    %1061 = vmatprep.mubr.f32.mxu0 0.0
    %1062 = vmatmul.mubr.f32.gmra.mrb[0].mxu0 %v925
    %v1063 = vpop.f32.mrb[0].mxu0
    %v1064 = vadd.f32 0.0, %v1063
    %v1065 = vpop.f32.mrb[0].mxu0
    %1066 = vdwg.mxu0
    %v1067 = vadd.f32 %v242, %v993
    %v1068 = vxor.u32 %v1067, 2147483648
    %v1069 = vmul.f32 %v1068, 1.442695
    %v1070 = vpow.pop %v1069
    %v1071 = vadd.f32 %v1070, 1.0
    %v1072 = vrcp.pop %v1071
    %v1073 = vmul.f32 1.0, %v1072
    %v1074 = vadd.f32 %v244, %v995
    %v1075 = vxor.u32 %v1074, 2147483648
    %v1076 = vmul.f32 %v1075, 1.442695
    %v1077 = vpow.pop %v1076
    %v1078 = vadd.f32 %v1077, 1.0
    %v1079 = vrcp.pop %v1078
    %v1080 = vmul.f32 1.0, %v1079
    %v1081 = vadd.f32 %v1064, %v75
    %v1082 = vmul.f32 %v1073, %v1081
    %v1083 = vadd.f32 %v353, %v1082
    %v1084 = vtanh.pop %v1083
    %v1085 = vsub.f32 %v925, %v1084
    %v1086 = vmul.f32 %v1080, %v1085
    %v1087 = vadd.f32 %v1084, %v1086
    %1088 = vmatprep.subr.mxu0 %v555
    %1089 = vmatpush1.msra.mxu0 %v554
    %1090 = vmatprep.subr.mxu0 %v558
    %1091 = vmatpush1.msra.mxu0 %v557
    %1092 = vmatprep.subr.mxu0 %v561
    %1093 = vmatpush1.msra.mxu0 %v560
    %1094 = vmatprep.subr.mxu0 %v564
    %1095 = vmatpush1.msra.mxu0 %v563
    %1096 = vmatprep.subr.mxu0 %v567
    %1097 = vmatpush1.msra.mxu0 %v566
    %1098 = vmatprep.subr.mxu0 %v570
    %1099 = vmatpush1.msra.mxu0 %v569
    %1100 = vmatprep.subr.mxu0 %v573
    %1101 = vmatpush1.msra.mxu0 %v572
    %1102 = vmatprep.subr.mxu0 %v576
    %1103 = vmatpush1.msra.mxu0 %v575
    %1104 = vmatprep.subr.mxu0 %v579
    %1105 = vmatpush1.msra.mxu0 %v578
    %1106 = vmatprep.subr.mxu0 %v582
    %1107 = vmatpush1.msra.mxu0 %v581
    %1108 = vmatprep.subr.mxu0 %v585
    %1109 = vmatpush1.msra.mxu0 %v584
    %1110 = vmatprep.subr.mxu0 %v588
    %1111 = vmatpush1.msra.mxu0 %v587
    %1112 = vmatprep.subr.mxu0 %v591
    %1113 = vmatpush1.msra.mxu0 %v590
    %1114 = vmatprep.subr.mxu0 %v594
    %1115 = vmatpush1.msra.mxu0 %v593
    %1116 = vmatprep.subr.mxu0 %v597
    %1117 = vmatpush1.msra.mxu0 %v596
    %1118 = vmatprep.subr.mxu0 %v600
    %1119 = vmatpush1.msra.mxu0 %v599
    %1120 = vmatprep.subr.mxu0 0.0
    %1121 = vmatpush1.msra.mxu0 0.0
    %1122 = vmatprep.subr.mxu0 0.0
    %1123 = vmatpush1.msra.mxu0 0.0
    %1124 = vmatprep.subr.mxu0 0.0
    %1125 = vmatpush1.msra.mxu0 0.0
    %1126 = vmatprep.subr.mxu0 0.0
    %1127 = vmatpush1.msra.mxu0 0.0
    %1128 = vmatprep.subr.mxu0 0.0
    %1129 = vmatpush1.msra.mxu0 0.0
    %1130 = vmatprep.subr.mxu0 0.0
    %1131 = vmatpush1.msra.mxu0 0.0
    %1132 = vmatprep.subr.mxu0 0.0
    %1133 = vmatpush1.msra.mxu0 0.0
    %1134 = vmatprep.subr.mxu0 0.0
    %1135 = vmatpush1.msra.mxu0 0.0
    %1136 = vmatprep.subr.mxu0 0.0
    %1137 = vmatpush1.msra.mxu0 0.0
    %1138 = vmatprep.subr.mxu0 0.0
    %1139 = vmatpush1.msra.mxu0 0.0
    %1140 = vmatprep.subr.mxu0 0.0
    %1141 = vmatpush1.msra.mxu0 0.0
    %1142 = vmatprep.subr.mxu0 0.0
    %1143 = vmatpush1.msra.mxu0 0.0
    %1144 = vmatprep.subr.mxu0 0.0
    %1145 = vmatpush1.msra.mxu0 0.0
    %1146 = vmatprep.subr.mxu0 0.0
    %1147 = vmatpush1.msra.mxu0 0.0
    %1148 = vmatprep.subr.mxu0 0.0
    %1149 = vmatpush1.msra.mxu0 0.0
    %1150 = vmatprep.subr.mxu0 0.0
    %1151 = vmatpush1.msra.mxu0 0.0
    %1152 = vmatprep.mubr.f32.mxu0 0.0
    %1153 = vmatmul.mubr.f32.gmra.mrb[0].mxu0 %v1087
    %v1154 = vpop.f32.mrb[0].mxu0
    %v1155 = vadd.f32 0.0, %v1154
    %v1156 = vpop.f32.mrb[0].mxu0
    %v1157 = vadd.f32 0.0, %v1156
    %1158 = vdwg.mxu0
    %1159 = vmatprep.subr.mxu0 0.0
    %1160 = vmatpush1.msra.mxu0 %v556
    %1161 = vmatprep.subr.mxu0 0.0
    %1162 = vmatpush1.msra.mxu0 %v559
    %1163 = vmatprep.subr.mxu0 0.0
    %1164 = vmatpush1.msra.mxu0 %v562
    %1165 = vmatprep.subr.mxu0 0.0
    %1166 = vmatpush1.msra.mxu0 %v565
    %1167 = vmatprep.subr.mxu0 0.0
    %1168 = vmatpush1.msra.mxu0 %v568
    %1169 = vmatprep.subr.mxu0 0.0
    %1170 = vmatpush1.msra.mxu0 %v571
    %1171 = vmatprep.subr.mxu0 0.0
    %1172 = vmatpush1.msra.mxu0 %v574
    %1173 = vmatprep.subr.mxu0 0.0
    %1174 = vmatpush1.msra.mxu0 %v577
    %1175 = vmatprep.subr.mxu0 0.0
    %1176 = vmatpush1.msra.mxu0 %v580
    %1177 = vmatprep.subr.mxu0 0.0
    %1178 = vmatpush1.msra.mxu0 %v583
    %1179 = vmatprep.subr.mxu0 0.0
    %1180 = vmatpush1.msra.mxu0 %v586
    %1181 = vmatprep.subr.mxu0 0.0
    %1182 = vmatpush1.msra.mxu0 %v589
    %1183 = vmatprep.subr.mxu0 0.0
    %1184 = vmatpush1.msra.mxu0 %v592
    %1185 = vmatprep.subr.mxu0 0.0
    %1186 = vmatpush1.msra.mxu0 %v595
    %1187 = vmatprep.subr.mxu0 0.0
    %1188 = vmatpush1.msra.mxu0 %v598
    %1189 = vmatprep.subr.mxu0 0.0
    %1190 = vmatpush1.msra.mxu0 %v601
    %1191 = vmatprep.subr.mxu0 0.0
    %1192 = vmatpush1.msra.mxu0 0.0
    %1193 = vmatprep.subr.mxu0 0.0
    %1194 = vmatpush1.msra.mxu0 0.0
    %1195 = vmatprep.subr.mxu0 0.0
    %1196 = vmatpush1.msra.mxu0 0.0
    %1197 = vmatprep.subr.mxu0 0.0
    %1198 = vmatpush1.msra.mxu0 0.0
    %1199 = vmatprep.subr.mxu0 0.0
    %1200 = vmatpush1.msra.mxu0 0.0
    %1201 = vmatprep.subr.mxu0 0.0
    %1202 = vmatpush1.msra.mxu0 0.0
    %1203 = vmatprep.subr.mxu0 0.0
    %1204 = vmatpush1.msra.mxu0 0.0
    %1205 = vmatprep.subr.mxu0 0.0
    %1206 = vmatpush1.msra.mxu0 0.0
    %1207 = vmatprep.subr.mxu0 0.0
    %1208 = vmatpush1.msra.mxu0 0.0
    %1209 = vmatprep.subr.mxu0 0.0
    %1210 = vmatpush1.msra.mxu0 0.0
    %1211 = vmatprep.subr.mxu0 0.0
    %1212 = vmatpush1.msra.mxu0 0.0
    %1213 = vmatprep.subr.mxu0 0.0
    %1214 = vmatpush1.msra.mxu0 0.0
    %1215 = vmatprep.subr.mxu0 0.0
    %1216 = vmatpush1.msra.mxu0 0.0
    %1217 = vmatprep.subr.mxu0 0.0
    %1218 = vmatpush1.msra.mxu0 0.0
    %1219 = vmatprep.subr.mxu0 0.0
    %1220 = vmatpush1.msra.mxu0 0.0
    %1221 = vmatprep.subr.mxu0 0.0
    %1222 = vmatpush1.msra.mxu0 0.0
    %1223 = vmatprep.mubr.f32.mxu0 0.0
    %1224 = vmatmul.mubr.f32.gmra.mrb[0].mxu0 %v1087
    %v1225 = vpop.f32.mrb[0].mxu0
    %v1226 = vadd.f32 0.0, %v1225
    %v1227 = vpop.f32.mrb[0].mxu0
    %1228 = vdwg.mxu0
    %v1229 = vadd.f32 %v248, %v1155
    %v1230 = vxor.u32 %v1229, 2147483648
    %v1231 = vmul.f32 %v1230, 1.442695
    %v1232 = vpow.pop %v1231
    %v1233 = vadd.f32 %v1232, 1.0
    %v1234 = vrcp.pop %v1233
    %v1235 = vmul.f32 1.0, %v1234
    %v1236 = vadd.f32 %v250, %v1157
    %v1237 = vxor.u32 %v1236, 2147483648
    %v1238 = vmul.f32 %v1237, 1.442695
    %v1239 = vpow.pop %v1238
    %v1240 = vadd.f32 %v1239, 1.0
    %v1241 = vrcp.pop %v1240
    %v1242 = vmul.f32 1.0, %v1241
    %v1243 = vadd.f32 %v1226, %v75
    %v1244 = vmul.f32 %v1235, %v1243
    %v1245 = vadd.f32 %v358, %v1244
    %v1246 = vtanh.pop %v1245
    %v1247 = vsub.f32 %v1087, %v1246
    %v1248 = vmul.f32 %v1242, %v1247
    %v1249 = vadd.f32 %v1246, %v1248
    %1250 = vmatprep.subr.mxu0 %v555
    %1251 = vmatpush1.msra.mxu0 %v554
    %1252 = vmatprep.subr.mxu0 %v558
    %1253 = vmatpush1.msra.mxu0 %v557
    %1254 = vmatprep.subr.mxu0 %v561
    %1255 = vmatpush1.msra.mxu0 %v560
    %1256 = vmatprep.subr.mxu0 %v564
    %1257 = vmatpush1.msra.mxu0 %v563
    %1258 = vmatprep.subr.mxu0 %v567
    %1259 = vmatpush1.msra.mxu0 %v566
    %1260 = vmatprep.subr.mxu0 %v570
    %1261 = vmatpush1.msra.mxu0 %v569
    %1262 = vmatprep.subr.mxu0 %v573
    %1263 = vmatpush1.msra.mxu0 %v572
    %1264 = vmatprep.subr.mxu0 %v576
    %1265 = vmatpush1.msra.mxu0 %v575
    %1266 = vmatprep.subr.mxu0 %v579
    %1267 = vmatpush1.msra.mxu0 %v578
    %1268 = vmatprep.subr.mxu0 %v582
    %1269 = vmatpush1.msra.mxu0 %v581
    %1270 = vmatprep.subr.mxu0 %v585
    %1271 = vmatpush1.msra.mxu0 %v584
    %1272 = vmatprep.subr.mxu0 %v588
    %1273 = vmatpush1.msra.mxu0 %v587
    %1274 = vmatprep.subr.mxu0 %v591
    %1275 = vmatpush1.msra.mxu0 %v590
    %1276 = vmatprep.subr.mxu0 %v594
    %1277 = vmatpush1.msra.mxu0 %v593
    %1278 = vmatprep.subr.mxu0 %v597
    %1279 = vmatpush1.msra.mxu0 %v596
    %1280 = vmatprep.subr.mxu0 %v600
    %1281 = vmatpush1.msra.mxu0 %v599
    %1282 = vmatprep.subr.mxu0 0.0
    %1283 = vmatpush1.msra.mxu0 0.0
    %1284 = vmatprep.subr.mxu0 0.0
    %1285 = vmatpush1.msra.mxu0 0.0
    %1286 = vmatprep.subr.mxu0 0.0
    %1287 = vmatpush1.msra.mxu0 0.0
    %1288 = vmatprep.subr.mxu0 0.0
    %1289 = vmatpush1.msra.mxu0 0.0
    %1290 = vmatprep.subr.mxu0 0.0
    %1291 = vmatpush1.msra.mxu0 0.0
    %1292 = vmatprep.subr.mxu0 0.0
    %1293 = vmatpush1.msra.mxu0 0.0
    %1294 = vmatprep.subr.mxu0 0.0
    %1295 = vmatpush1.msra.mxu0 0.0
    %1296 = vmatprep.subr.mxu0 0.0
    %1297 = vmatpush1.msra.mxu0 0.0
    %1298 = vmatprep.subr.mxu0 0.0
    %1299 = vmatpush1.msra.mxu0 0.0
    %1300 = vmatprep.subr.mxu0 0.0
    %1301 = vmatpush1.msra.mxu0 0.0
    %1302 = vmatprep.subr.mxu0 0.0
    %1303 = vmatpush1.msra.mxu0 0.0
    %1304 = vmatprep.subr.mxu0 0.0
    %1305 = vmatpush1.msra.mxu0 0.0
    %1306 = vmatprep.subr.mxu0 0.0
    %1307 = vmatpush1.msra.mxu0 0.0
    %1308 = vmatprep.subr.mxu0 0.0
    %1309 = vmatpush1.msra.mxu0 0.0
    %1310 = vmatprep.subr.mxu0 0.0
    %1311 = vmatpush1.msra.mxu0 0.0
    %1312 = vmatprep.subr.mxu0 0.0
    %1313 = vmatpush1.msra.mxu0 0.0
    %1314 = vmatprep.mubr.f32.mxu0 0.0
    %1315 = vmatmul.mubr.f32.gmra.mrb[0].mxu0 %v1249
    %v1316 = vpop.f32.mrb[0].mxu0
    %v1317 = vadd.f32 0.0, %v1316
    %v1318 = vpop.f32.mrb[0].mxu0
    %v1319 = vadd.f32 0.0, %v1318
    %1320 = vdwg.mxu0
    %1321 = vmatprep.subr.mxu0 0.0
    %1322 = vmatpush1.msra.mxu0 %v556
    %1323 = vmatprep.subr.mxu0 0.0
    %1324 = vmatpush1.msra.mxu0 %v559
    %1325 = vmatprep.subr.mxu0 0.0
    %1326 = vmatpush1.msra.mxu0 %v562
    %1327 = vmatprep.subr.mxu0 0.0
    %1328 = vmatpush1.msra.mxu0 %v565
    %1329 = vmatprep.subr.mxu0 0.0
    %1330 = vmatpush1.msra.mxu0 %v568
    %1331 = vmatprep.subr.mxu0 0.0
    %1332 = vmatpush1.msra.mxu0 %v571
    %1333 = vmatprep.subr.mxu0 0.0
    %1334 = vmatpush1.msra.mxu0 %v574
    %1335 = vmatprep.subr.mxu0 0.0
    %1336 = vmatpush1.msra.mxu0 %v577
    %1337 = vmatprep.subr.mxu0 0.0
    %1338 = vmatpush1.msra.mxu0 %v580
    %1339 = vmatprep.subr.mxu0 0.0
    %1340 = vmatpush1.msra.mxu0 %v583
    %1341 = vmatprep.subr.mxu0 0.0
    %1342 = vmatpush1.msra.mxu0 %v586
    %1343 = vmatprep.subr.mxu0 0.0
    %1344 = vmatpush1.msra.mxu0 %v589
    %1345 = vmatprep.subr.mxu0 0.0
    %1346 = vmatpush1.msra.mxu0 %v592
    %1347 = vmatprep.subr.mxu0 0.0
    %1348 = vmatpush1.msra.mxu0 %v595
    %1349 = vmatprep.subr.mxu0 0.0
    %1350 = vmatpush1.msra.mxu0 %v598
    %1351 = vmatprep.subr.mxu0 0.0
    %1352 = vmatpush1.msra.mxu0 %v601
    %1353 = vmatprep.subr.mxu0 0.0
    %1354 = vmatpush1.msra.mxu0 0.0
    %1355 = vmatprep.subr.mxu0 0.0
    %1356 = vmatpush1.msra.mxu0 0.0
    %1357 = vmatprep.subr.mxu0 0.0
    %1358 = vmatpush1.msra.mxu0 0.0
    %1359 = vmatprep.subr.mxu0 0.0
    %1360 = vmatpush1.msra.mxu0 0.0
    %1361 = vmatprep.subr.mxu0 0.0
    %1362 = vmatpush1.msra.mxu0 0.0
    %1363 = vmatprep.subr.mxu0 0.0
    %1364 = vmatpush1.msra.mxu0 0.0
    %1365 = vmatprep.subr.mxu0 0.0
    %1366 = vmatpush1.msra.mxu0 0.0
    %1367 = vmatprep.subr.mxu0 0.0
    %1368 = vmatpush1.msra.mxu0 0.0
    %1369 = vmatprep.subr.mxu0 0.0
    %1370 = vmatpush1.msra.mxu0 0.0
    %1371 = vmatprep.subr.mxu0 0.0
    %1372 = vmatpush1.msra.mxu0 0.0
    %1373 = vmatprep.subr.mxu0 0.0
    %1374 = vmatpush1.msra.mxu0 0.0
    %1375 = vmatprep.subr.mxu0 0.0
    %1376 = vmatpush1.msra.mxu0 0.0
    %1377 = vmatprep.subr.mxu0 0.0
    %1378 = vmatpush1.msra.mxu0 0.0
    %1379 = vmatprep.subr.mxu0 0.0
    %1380 = vmatpush1.msra.mxu0 0.0
    %1381 = vmatprep.subr.mxu0 0.0
    %1382 = vmatpush1.msra.mxu0 0.0
    %1383 = vmatprep.subr.mxu0 0.0
    %1384 = vmatpush1.msra.mxu0 0.0
    %1385 = vmatprep.mubr.f32.mxu0 0.0
    %1386 = vmatmul.mubr.f32.gmra.mrb[0].mxu0 %v1249
    %v1387 = vpop.f32.mrb[0].mxu0
    %v1388 = vadd.f32 0.0, %v1387
    %v1389 = vpop.f32.mrb[0].mxu0
    %1390 = vdwg.mxu0
    %v1391 = vadd.f32 %v254, %v1317
    %v1392 = vxor.u32 %v1391, 2147483648
    %v1393 = vmul.f32 %v1392, 1.442695
    %v1394 = vpow.pop %v1393
    %v1395 = vadd.f32 %v1394, 1.0
    %v1396 = vrcp.pop %v1395
    %v1397 = vmul.f32 1.0, %v1396
    %v1398 = vadd.f32 %v256, %v1319
    %v1399 = vxor.u32 %v1398, 2147483648
    %v1400 = vmul.f32 %v1399, 1.442695
    %v1401 = vpow.pop %v1400
    %v1402 = vadd.f32 %v1401, 1.0
    %v1403 = vrcp.pop %v1402
    %v1404 = vmul.f32 1.0, %v1403
    %v1405 = vadd.f32 %v1388, %v75
    %v1406 = vmul.f32 %v1397, %v1405
    %v1407 = vadd.f32 %v363, %v1406
    %v1408 = vtanh.pop %v1407
    %v1409 = vsub.f32 %v1249, %v1408
    %v1410 = vmul.f32 %v1404, %v1409
    %v1411 = vadd.f32 %v1408, %v1410
    %1412 = vmatprep.subr.mxu0 %v555
    %1413 = vmatpush1.msra.mxu0 %v554
    %1414 = vmatprep.subr.mxu0 %v558
    %1415 = vmatpush1.msra.mxu0 %v557
    %1416 = vmatprep.subr.mxu0 %v561
    %1417 = vmatpush1.msra.mxu0 %v560
    %1418 = vmatprep.subr.mxu0 %v564
    %1419 = vmatpush1.msra.mxu0 %v563
    %1420 = vmatprep.subr.mxu0 %v567
    %1421 = vmatpush1.msra.mxu0 %v566
    %1422 = vmatprep.subr.mxu0 %v570
    %1423 = vmatpush1.msra.mxu0 %v569
    %1424 = vmatprep.subr.mxu0 %v573
    %1425 = vmatpush1.msra.mxu0 %v572
    %1426 = vmatprep.subr.mxu0 %v576
    %1427 = vmatpush1.msra.mxu0 %v575
    %1428 = vmatprep.subr.mxu0 %v579
    %1429 = vmatpush1.msra.mxu0 %v578
    %1430 = vmatprep.subr.mxu0 %v582
    %1431 = vmatpush1.msra.mxu0 %v581
    %1432 = vmatprep.subr.mxu0 %v585
    %1433 = vmatpush1.msra.mxu0 %v584
    %1434 = vmatprep.subr.mxu0 %v588
    %1435 = vmatpush1.msra.mxu0 %v587
    %1436 = vmatprep.subr.mxu0 %v591
    %1437 = vmatpush1.msra.mxu0 %v590
    %1438 = vmatprep.subr.mxu0 %v594
    %1439 = vmatpush1.msra.mxu0 %v593
    %1440 = vmatprep.subr.mxu0 %v597
    %1441 = vmatpush1.msra.mxu0 %v596
    %1442 = vmatprep.subr.mxu0 %v600
    %1443 = vmatpush1.msra.mxu0 %v599
    %1444 = vmatprep.subr.mxu0 0.0
    %1445 = vmatpush1.msra.mxu0 0.0
    %1446 = vmatprep.subr.mxu0 0.0
    %1447 = vmatpush1.msra.mxu0 0.0
    %1448 = vmatprep.subr.mxu0 0.0
    %1449 = vmatpush1.msra.mxu0 0.0
    %1450 = vmatprep.subr.mxu0 0.0
    %1451 = vmatpush1.msra.mxu0 0.0
    %1452 = vmatprep.subr.mxu0 0.0
    %1453 = vmatpush1.msra.mxu0 0.0
    %1454 = vmatprep.subr.mxu0 0.0
    %1455 = vmatpush1.msra.mxu0 0.0
    %1456 = vmatprep.subr.mxu0 0.0
    %1457 = vmatpush1.msra.mxu0 0.0
    %1458 = vmatprep.subr.mxu0 0.0
    %1459 = vmatpush1.msra.mxu0 0.0
    %1460 = vmatprep.subr.mxu0 0.0
    %1461 = vmatpush1.msra.mxu0 0.0
    %1462 = vmatprep.subr.mxu0 0.0
    %1463 = vmatpush1.msra.mxu0 0.0
    %1464 = vmatprep.subr.mxu0 0.0
    %1465 = vmatpush1.msra.mxu0 0.0
    %1466 = vmatprep.subr.mxu0 0.0
    %1467 = vmatpush1.msra.mxu0 0.0
    %1468 = vmatprep.subr.mxu0 0.0
    %1469 = vmatpush1.msra.mxu0 0.0
    %1470 = vmatprep.subr.mxu0 0.0
    %1471 = vmatpush1.msra.mxu0 0.0
    %1472 = vmatprep.subr.mxu0 0.0
    %1473 = vmatpush1.msra.mxu0 0.0
    %1474 = vmatprep.subr.mxu0 0.0
    %1475 = vmatpush1.msra.mxu0 0.0
    %1476 = vmatprep.mubr.f32.mxu0 0.0
    %1477 = vmatmul.mubr.f32.gmra.mrb[0].mxu0 %v1411
    %v1478 = vpop.f32.mrb[0].mxu0
    %v1479 = vadd.f32 0.0, %v1478
    %v1480 = vpop.f32.mrb[0].mxu0
    %v1481 = vadd.f32 0.0, %v1480
    %1482 = vdwg.mxu0
    %1483 = vmatprep.subr.mxu0 0.0
    %1484 = vmatpush1.msra.mxu0 %v556
    %1485 = vmatprep.subr.mxu0 0.0
    %1486 = vmatpush1.msra.mxu0 %v559
    %1487 = vmatprep.subr.mxu0 0.0
    %1488 = vmatpush1.msra.mxu0 %v562
    %1489 = vmatprep.subr.mxu0 0.0
    %1490 = vmatpush1.msra.mxu0 %v565
    %1491 = vmatprep.subr.mxu0 0.0
    %1492 = vmatpush1.msra.mxu0 %v568
    %1493 = vmatprep.subr.mxu0 0.0
    %1494 = vmatpush1.msra.mxu0 %v571
    %1495 = vmatprep.subr.mxu0 0.0
    %1496 = vmatpush1.msra.mxu0 %v574
    %1497 = vmatprep.subr.mxu0 0.0
    %1498 = vmatpush1.msra.mxu0 %v577
    %1499 = vmatprep.subr.mxu0 0.0
    %1500 = vmatpush1.msra.mxu0 %v580
    %1501 = vmatprep.subr.mxu0 0.0
    %1502 = vmatpush1.msra.mxu0 %v583
    %1503 = vmatprep.subr.mxu0 0.0
    %1504 = vmatpush1.msra.mxu0 %v586
    %1505 = vmatprep.subr.mxu0 0.0
    %1506 = vmatpush1.msra.mxu0 %v589
    %1507 = vmatprep.subr.mxu0 0.0
    %1508 = vmatpush1.msra.mxu0 %v592
    %1509 = vmatprep.subr.mxu0 0.0
    %1510 = vmatpush1.msra.mxu0 %v595
    %1511 = vmatprep.subr.mxu0 0.0
    %1512 = vmatpush1.msra.mxu0 %v598
    %1513 = vmatprep.subr.mxu0 0.0
    %1514 = vmatpush1.msra.mxu0 %v601
    %1515 = vmatprep.subr.mxu0 0.0
    %1516 = vmatpush1.msra.mxu0 0.0
    %1517 = vmatprep.subr.mxu0 0.0
    %1518 = vmatpush1.msra.mxu0 0.0
    %1519 = vmatprep.subr.mxu0 0.0
    %1520 = vmatpush1.msra.mxu0 0.0
    %1521 = vmatprep.subr.mxu0 0.0
    %1522 = vmatpush1.msra.mxu0 0.0
    %1523 = vmatprep.subr.mxu0 0.0
    %1524 = vmatpush1.msra.mxu0 0.0
    %1525 = vmatprep.subr.mxu0 0.0
    %1526 = vmatpush1.msra.mxu0 0.0
    %1527 = vmatprep.subr.mxu0 0.0
    %1528 = vmatpush1.msra.mxu0 0.0
    %1529 = vmatprep.subr.mxu0 0.0
    %1530 = vmatpush1.msra.mxu0 0.0
    %1531 = vmatprep.subr.mxu0 0.0
    %1532 = vmatpush1.msra.mxu0 0.0
    %1533 = vmatprep.subr.mxu0 0.0
    %1534 = vmatpush1.msra.mxu0 0.0
    %1535 = vmatprep.subr.mxu0 0.0
    %1536 = vmatpush1.msra.mxu0 0.0
    %1537 = vmatprep.subr.mxu0 0.0
    %1538 = vmatpush1.msra.mxu0 0.0
    %1539 = vmatprep.subr.mxu0 0.0
    %1540 = vmatpush1.msra.mxu0 0.0
    %1541 = vmatprep.subr.mxu0 0.0
    %1542 = vmatpush1.msra.mxu0 0.0
    %1543 = vmatprep.subr.mxu0 0.0
    %1544 = vmatpush1.msra.mxu0 0.0
    %1545 = vmatprep.subr.mxu0 0.0
    %1546 = vmatpush1.msra.mxu0 0.0
    %1547 = vmatprep.mubr.f32.mxu0 0.0
    %1548 = vmatmul.mubr.f32.gmra.mrb[0].mxu0 %v1411
    %v1549 = vpop.f32.mrb[0].mxu0
    %v1550 = vadd.f32 0.0, %v1549
    %v1551 = vpop.f32.mrb[0].mxu0
    %1552 = vdwg.mxu0
    %v1553 = vadd.f32 %v260, %v1479
    %v1554 = vxor.u32 %v1553, 2147483648
    %v1555 = vmul.f32 %v1554, 1.442695
    %v1556 = vpow.pop %v1555
    %v1557 = vadd.f32 %v1556, 1.0
    %v1558 = vrcp.pop %v1557
    %v1559 = vmul.f32 1.0, %v1558
    %v1560 = vadd.f32 %v262, %v1481
    %v1561 = vxor.u32 %v1560, 2147483648
    %v1562 = vmul.f32 %v1561, 1.442695
    %v1563 = vpow.pop %v1562
    %v1564 = vadd.f32 %v1563, 1.0
    %v1565 = vrcp.pop %v1564
    %v1566 = vmul.f32 1.0, %v1565
    %v1567 = vadd.f32 %v1550, %v75
    %v1568 = vmul.f32 %v1559, %v1567
    %v1569 = vadd.f32 %v368, %v1568
    %v1570 = vtanh.pop %v1569
    %v1571 = vsub.f32 %v1411, %v1570
    %v1572 = vmul.f32 %v1566, %v1571
    %v1573 = vadd.f32 %v1570, %v1572
    %1574 = vmatprep.subr.mxu0 %v555
    %1575 = vmatpush1.msra.mxu0 %v554
    %1576 = vmatprep.subr.mxu0 %v558
    %1577 = vmatpush1.msra.mxu0 %v557
    %1578 = vmatprep.subr.mxu0 %v561
    %1579 = vmatpush1.msra.mxu0 %v560
    %1580 = vmatprep.subr.mxu0 %v564
    %1581 = vmatpush1.msra.mxu0 %v563
    %1582 = vmatprep.subr.mxu0 %v567
    %1583 = vmatpush1.msra.mxu0 %v566
    %1584 = vmatprep.subr.mxu0 %v570
    %1585 = vmatpush1.msra.mxu0 %v569
    %1586 = vmatprep.subr.mxu0 %v573
    %1587 = vmatpush1.msra.mxu0 %v572
    %1588 = vmatprep.subr.mxu0 %v576
    %1589 = vmatpush1.msra.mxu0 %v575
    %1590 = vmatprep.subr.mxu0 %v579
    %1591 = vmatpush1.msra.mxu0 %v578
    %1592 = vmatprep.subr.mxu0 %v582
    %1593 = vmatpush1.msra.mxu0 %v581
    %1594 = vmatprep.subr.mxu0 %v585
    %1595 = vmatpush1.msra.mxu0 %v584
    %1596 = vmatprep.subr.mxu0 %v588
    %1597 = vmatpush1.msra.mxu0 %v587
    %1598 = vmatprep.subr.mxu0 %v591
    %1599 = vmatpush1.msra.mxu0 %v590
    %1600 = vmatprep.subr.mxu0 %v594
    %1601 = vmatpush1.msra.mxu0 %v593
    %1602 = vmatprep.subr.mxu0 %v597
    %1603 = vmatpush1.msra.mxu0 %v596
    %1604 = vmatprep.subr.mxu0 %v600
    %1605 = vmatpush1.msra.mxu0 %v599
    %1606 = vmatprep.subr.mxu0 0.0
    %1607 = vmatpush1.msra.mxu0 0.0
    %1608 = vmatprep.subr.mxu0 0.0
    %1609 = vmatpush1.msra.mxu0 0.0
    %1610 = vmatprep.subr.mxu0 0.0
    %1611 = vmatpush1.msra.mxu0 0.0
    %1612 = vmatprep.subr.mxu0 0.0
    %1613 = vmatpush1.msra.mxu0 0.0
    %1614 = vmatprep.subr.mxu0 0.0
    %1615 = vmatpush1.msra.mxu0 0.0
    %1616 = vmatprep.subr.mxu0 0.0
    %1617 = vmatpush1.msra.mxu0 0.0
    %1618 = vmatprep.subr.mxu0 0.0
    %1619 = vmatpush1.msra.mxu0 0.0
    %1620 = vmatprep.subr.mxu0 0.0
    %1621 = vmatpush1.msra.mxu0 0.0
    %1622 = vmatprep.subr.mxu0 0.0
    %1623 = vmatpush1.msra.mxu0 0.0
    %1624 = vmatprep.subr.mxu0 0.0
    %1625 = vmatpush1.msra.mxu0 0.0
    %1626 = vmatprep.subr.mxu0 0.0
    %1627 = vmatpush1.msra.mxu0 0.0
    %1628 = vmatprep.subr.mxu0 0.0
    %1629 = vmatpush1.msra.mxu0 0.0
    %1630 = vmatprep.subr.mxu0 0.0
    %1631 = vmatpush1.msra.mxu0 0.0
    %1632 = vmatprep.subr.mxu0 0.0
    %1633 = vmatpush1.msra.mxu0 0.0
    %1634 = vmatprep.subr.mxu0 0.0
    %1635 = vmatpush1.msra.mxu0 0.0
    %1636 = vmatprep.subr.mxu0 0.0
    %1637 = vmatpush1.msra.mxu0 0.0
    %1638 = vmatprep.mubr.f32.mxu0 0.0
    %1639 = vmatmul.mubr.f32.gmra.mrb[0].mxu0 %v1573
    %v1640 = vpop.f32.mrb[0].mxu0
    %v1641 = vadd.f32 0.0, %v1640
    %v1642 = vpop.f32.mrb[0].mxu0
    %v1643 = vadd.f32 0.0, %v1642
    %1644 = vdwg.mxu0
    %1645 = vmatprep.subr.mxu0 0.0
    %1646 = vmatpush1.msra.mxu0 %v556
    %1647 = vmatprep.subr.mxu0 0.0
    %1648 = vmatpush1.msra.mxu0 %v559
    %1649 = vmatprep.subr.mxu0 0.0
    %1650 = vmatpush1.msra.mxu0 %v562
    %1651 = vmatprep.subr.mxu0 0.0
    %1652 = vmatpush1.msra.mxu0 %v565
    %1653 = vmatprep.subr.mxu0 0.0
    %1654 = vmatpush1.msra.mxu0 %v568
    %1655 = vmatprep.subr.mxu0 0.0
    %1656 = vmatpush1.msra.mxu0 %v571
    %1657 = vmatprep.subr.mxu0 0.0
    %1658 = vmatpush1.msra.mxu0 %v574
    %1659 = vmatprep.subr.mxu0 0.0
    %1660 = vmatpush1.msra.mxu0 %v577
    %1661 = vmatprep.subr.mxu0 0.0
    %1662 = vmatpush1.msra.mxu0 %v580
    %1663 = vmatprep.subr.mxu0 0.0
    %1664 = vmatpush1.msra.mxu0 %v583
    %1665 = vmatprep.subr.mxu0 0.0
    %1666 = vmatpush1.msra.mxu0 %v586
    %1667 = vmatprep.subr.mxu0 0.0
    %1668 = vmatpush1.msra.mxu0 %v589
    %1669 = vmatprep.subr.mxu0 0.0
    %1670 = vmatpush1.msra.mxu0 %v592
    %1671 = vmatprep.subr.mxu0 0.0
    %1672 = vmatpush1.msra.mxu0 %v595
    %1673 = vmatprep.subr.mxu0 0.0
    %1674 = vmatpush1.msra.mxu0 %v598
    %1675 = vmatprep.subr.mxu0 0.0
    %1676 = vmatpush1.msra.mxu0 %v601
    %1677 = vmatprep.subr.mxu0 0.0
    %1678 = vmatpush1.msra.mxu0 0.0
    %1679 = vmatprep.subr.mxu0 0.0
    %1680 = vmatpush1.msra.mxu0 0.0
    %1681 = vmatprep.subr.mxu0 0.0
    %1682 = vmatpush1.msra.mxu0 0.0
    %1683 = vmatprep.subr.mxu0 0.0
    %1684 = vmatpush1.msra.mxu0 0.0
    %1685 = vmatprep.subr.mxu0 0.0
    %1686 = vmatpush1.msra.mxu0 0.0
    %1687 = vmatprep.subr.mxu0 0.0
    %1688 = vmatpush1.msra.mxu0 0.0
    %1689 = vmatprep.subr.mxu0 0.0
    %1690 = vmatpush1.msra.mxu0 0.0
    %1691 = vmatprep.subr.mxu0 0.0
    %1692 = vmatpush1.msra.mxu0 0.0
    %1693 = vmatprep.subr.mxu0 0.0
    %1694 = vmatpush1.msra.mxu0 0.0
    %1695 = vmatprep.subr.mxu0 0.0
    %1696 = vmatpush1.msra.mxu0 0.0
    %1697 = vmatprep.subr.mxu0 0.0
    %1698 = vmatpush1.msra.mxu0 0.0
    %1699 = vmatprep.subr.mxu0 0.0
    %1700 = vmatpush1.msra.mxu0 0.0
    %1701 = vmatprep.subr.mxu0 0.0
    %1702 = vmatpush1.msra.mxu0 0.0
    %1703 = vmatprep.subr.mxu0 0.0
    %1704 = vmatpush1.msra.mxu0 0.0
    %1705 = vmatprep.subr.mxu0 0.0
    %1706 = vmatpush1.msra.mxu0 0.0
    %1707 = vmatprep.subr.mxu0 0.0
    %1708 = vmatpush1.msra.mxu0 0.0
    %1709 = vmatprep.mubr.f32.mxu0 0.0
    %1710 = vmatmul.mubr.f32.gmra.mrb[0].mxu0 %v1573
    %v1711 = vpop.f32.mrb[0].mxu0
    %v1712 = vadd.f32 0.0, %v1711
    %v1713 = vpop.f32.mrb[0].mxu0
    %1714 = vdwg.mxu0
    %v1715 = vadd.f32 %v266, %v1641
    %v1716 = vxor.u32 %v1715, 2147483648
    %v1717 = vmul.f32 %v1716, 1.442695
    %v1718 = vpow.pop %v1717
    %v1719 = vadd.f32 %v1718, 1.0
    %v1720 = vrcp.pop %v1719
    %v1721 = vmul.f32 1.0, %v1720
    %v1722 = vadd.f32 %v268, %v1643
    %v1723 = vxor.u32 %v1722, 2147483648
    %v1724 = vmul.f32 %v1723, 1.442695
    %v1725 = vpow.pop %v1724
    %v1726 = vadd.f32 %v1725, 1.0
    %v1727 = vrcp.pop %v1726
    %v1728 = vmul.f32 1.0, %v1727
    %v1729 = vadd.f32 %v1712, %v75
    %v1730 = vmul.f32 %v1721, %v1729
    %v1731 = vadd.f32 %v373, %v1730
    %v1732 = vtanh.pop %v1731
    %v1733 = vsub.f32 %v1573, %v1732
    %v1734 = vmul.f32 %v1728, %v1733
    %v1735 = vadd.f32 %v1732, %v1734
    %1736 = vmatprep.subr.mxu0 %v555
    %1737 = vmatpush1.msra.mxu0 %v554
    %1738 = vmatprep.subr.mxu0 %v558
    %1739 = vmatpush1.msra.mxu0 %v557
    %1740 = vmatprep.subr.mxu0 %v561
    %1741 = vmatpush1.msra.mxu0 %v560
    %1742 = vmatprep.subr.mxu0 %v564
    %1743 = vmatpush1.msra.mxu0 %v563
    %1744 = vmatprep.subr.mxu0 %v567
    %1745 = vmatpush1.msra.mxu0 %v566
    %1746 = vmatprep.subr.mxu0 %v570
    %1747 = vmatpush1.msra.mxu0 %v569
    %1748 = vmatprep.subr.mxu0 %v573
    %1749 = vmatpush1.msra.mxu0 %v572
    %1750 = vmatprep.subr.mxu0 %v576
    %1751 = vmatpush1.msra.mxu0 %v575
    %1752 = vmatprep.subr.mxu0 %v579
    %1753 = vmatpush1.msra.mxu0 %v578
    %1754 = vmatprep.subr.mxu0 %v582
    %1755 = vmatpush1.msra.mxu0 %v581
    %1756 = vmatprep.subr.mxu0 %v585
    %1757 = vmatpush1.msra.mxu0 %v584
    %1758 = vmatprep.subr.mxu0 %v588
    %1759 = vmatpush1.msra.mxu0 %v587
    %1760 = vmatprep.subr.mxu0 %v591
    %1761 = vmatpush1.msra.mxu0 %v590
    %1762 = vmatprep.subr.mxu0 %v594
    %1763 = vmatpush1.msra.mxu0 %v593
    %1764 = vmatprep.subr.mxu0 %v597
    %1765 = vmatpush1.msra.mxu0 %v596
    %1766 = vmatprep.subr.mxu0 %v600
    %1767 = vmatpush1.msra.mxu0 %v599
    %1768 = vmatprep.subr.mxu0 0.0
    %1769 = vmatpush1.msra.mxu0 0.0
    %1770 = vmatprep.subr.mxu0 0.0
    %1771 = vmatpush1.msra.mxu0 0.0
    %1772 = vmatprep.subr.mxu0 0.0
    %1773 = vmatpush1.msra.mxu0 0.0
    %1774 = vmatprep.subr.mxu0 0.0
    %1775 = vmatpush1.msra.mxu0 0.0
    %1776 = vmatprep.subr.mxu0 0.0
    %1777 = vmatpush1.msra.mxu0 0.0
    %1778 = vmatprep.subr.mxu0 0.0
    %1779 = vmatpush1.msra.mxu0 0.0
    %1780 = vmatprep.subr.mxu0 0.0
    %1781 = vmatpush1.msra.mxu0 0.0
    %1782 = vmatprep.subr.mxu0 0.0
    %1783 = vmatpush1.msra.mxu0 0.0
    %1784 = vmatprep.subr.mxu0 0.0
    %1785 = vmatpush1.msra.mxu0 0.0
    %1786 = vmatprep.subr.mxu0 0.0
    %1787 = vmatpush1.msra.mxu0 0.0
    %1788 = vmatprep.subr.mxu0 0.0
    %1789 = vmatpush1.msra.mxu0 0.0
    %1790 = vmatprep.subr.mxu0 0.0
    %1791 = vmatpush1.msra.mxu0 0.0
    %1792 = vmatprep.subr.mxu0 0.0
    %1793 = vmatpush1.msra.mxu0 0.0
    %1794 = vmatprep.subr.mxu0 0.0
    %1795 = vmatpush1.msra.mxu0 0.0
    %1796 = vmatprep.subr.mxu0 0.0
    %1797 = vmatpush1.msra.mxu0 0.0
    %1798 = vmatprep.subr.mxu0 0.0
    %1799 = vmatpush1.msra.mxu0 0.0
    %1800 = vmatprep.mubr.f32.mxu0 0.0
    %1801 = vmatmul.mubr.f32.gmra.mrb[0].mxu0 %v1735
    %v1802 = vpop.f32.mrb[0].mxu0
    %v1803 = vadd.f32 0.0, %v1802
    %v1804 = vpop.f32.mrb[0].mxu0
    %v1805 = vadd.f32 0.0, %v1804
    %1806 = vdwg.mxu0
    %1807 = vmatprep.subr.mxu0 0.0
    %1808 = vmatpush1.msra.mxu0 %v556
    %1809 = vmatprep.subr.mxu0 0.0
    %1810 = vmatpush1.msra.mxu0 %v559
    %1811 = vmatprep.subr.mxu0 0.0
    %1812 = vmatpush1.msra.mxu0 %v562
    %1813 = vmatprep.subr.mxu0 0.0
    %1814 = vmatpush1.msra.mxu0 %v565
    %1815 = vmatprep.subr.mxu0 0.0
    %1816 = vmatpush1.msra.mxu0 %v568
    %1817 = vmatprep.subr.mxu0 0.0
    %1818 = vmatpush1.msra.mxu0 %v571
    %1819 = vmatprep.subr.mxu0 0.0
    %1820 = vmatpush1.msra.mxu0 %v574
    %1821 = vmatprep.subr.mxu0 0.0
    %1822 = vmatpush1.msra.mxu0 %v577
    %1823 = vmatprep.subr.mxu0 0.0
    %1824 = vmatpush1.msra.mxu0 %v580
    %1825 = vmatprep.subr.mxu0 0.0
    %1826 = vmatpush1.msra.mxu0 %v583
    %1827 = vmatprep.subr.mxu0 0.0
    %1828 = vmatpush1.msra.mxu0 %v586
    %1829 = vmatprep.subr.mxu0 0.0
    %1830 = vmatpush1.msra.mxu0 %v589
    %1831 = vmatprep.subr.mxu0 0.0
    %1832 = vmatpush1.msra.mxu0 %v592
    %1833 = vmatprep.subr.mxu0 0.0
    %1834 = vmatpush1.msra.mxu0 %v595
    %1835 = vmatprep.subr.mxu0 0.0
    %1836 = vmatpush1.msra.mxu0 %v598
    %1837 = vmatprep.subr.mxu0 0.0
    %1838 = vmatpush1.msra.mxu0 %v601
    %1839 = vmatprep.subr.mxu0 0.0
    %1840 = vmatpush1.msra.mxu0 0.0
    %1841 = vmatprep.subr.mxu0 0.0
    %1842 = vmatpush1.msra.mxu0 0.0
    %1843 = vmatprep.subr.mxu0 0.0
    %1844 = vmatpush1.msra.mxu0 0.0
    %1845 = vmatprep.subr.mxu0 0.0
    %1846 = vmatpush1.msra.mxu0 0.0
    %1847 = vmatprep.subr.mxu0 0.0
    %1848 = vmatpush1.msra.mxu0 0.0
    %1849 = vmatprep.subr.mxu0 0.0
    %1850 = vmatpush1.msra.mxu0 0.0
    %1851 = vmatprep.subr.mxu0 0.0
    %1852 = vmatpush1.msra.mxu0 0.0
    %1853 = vmatprep.subr.mxu0 0.0
    %1854 = vmatpush1.msra.mxu0 0.0
    %1855 = vmatprep.subr.mxu0 0.0
    %1856 = vmatpush1.msra.mxu0 0.0
    %1857 = vmatprep.subr.mxu0 0.0
    %1858 = vmatpush1.msra.mxu0 0.0
    %1859 = vmatprep.subr.mxu0 0.0
    %1860 = vmatpush1.msra.mxu0 0.0
    %1861 = vmatprep.subr.mxu0 0.0
    %1862 = vmatpush1.msra.mxu0 0.0
    %1863 = vmatprep.subr.mxu0 0.0
    %1864 = vmatpush1.msra.mxu0 0.0
    %1865 = vmatprep.subr.mxu0 0.0
    %1866 = vmatpush1.msra.mxu0 0.0
    %1867 = vmatprep.subr.mxu0 0.0
    %1868 = vmatpush1.msra.mxu0 0.0
    %1869 = vmatprep.subr.mxu0 0.0
    %1870 = vmatpush1.msra.mxu0 0.0
    %1871 = vmatprep.mubr.f32.mxu0 0.0
    %1872 = vmatmul.mubr.f32.gmra.mrb[0].mxu0 %v1735
    %v1873 = vpop.f32.mrb[0].mxu0
    %v1874 = vadd.f32 0.0, %v1873
    %v1875 = vpop.f32.mrb[0].mxu0
    %1876 = vdwg.mxu0
    %v1877 = vadd.f32 %v272, %v1803
    %v1878 = vxor.u32 %v1877, 2147483648
    %v1879 = vmul.f32 %v1878, 1.442695
    %v1880 = vpow.pop %v1879
    %v1881 = vadd.f32 %v1880, 1.0
    %v1882 = vrcp.pop %v1881
    %v1883 = vmul.f32 1.0, %v1882
    %v1884 = vadd.f32 %v274, %v1805
    %v1885 = vxor.u32 %v1884, 2147483648
    %v1886 = vmul.f32 %v1885, 1.442695
    %v1887 = vpow.pop %v1886
    %v1888 = vadd.f32 %v1887, 1.0
    %v1889 = vrcp.pop %v1888
    %v1890 = vmul.f32 1.0, %v1889
    %v1891 = vadd.f32 %v1874, %v75
    %v1892 = vmul.f32 %v1883, %v1891
    %v1893 = vadd.f32 %v378, %v1892
    %v1894 = vtanh.pop %v1893
    %v1895 = vsub.f32 %v1735, %v1894
    %v1896 = vmul.f32 %v1890, %v1895
    %v1897 = vadd.f32 %v1894, %v1896
    %v1898 = vld [vmem:[#allocation6] sm:$0xff]
    %v1899 = vld [vmem:[#allocation6 + $0x8] sm:$0xff]
    %v1900 = vld [vmem:[#allocation6 + $0x10] sm:$0xff]
    %v1901 = vld [vmem:[#allocation6 + $0x18] sm:$0xff]
    %v1902 = vld [vmem:[#allocation6 + $0x30] sm:$0xff]
    %v1903 = vld [vmem:[#allocation6 + $0x38] sm:$0xff]
    %v1904 = vld [vmem:[#allocation6 + $0x40] sm:$0xff]
    %v1905 = vld [vmem:[#allocation6 + $0x48] sm:$0xff]
    %v1906 = vld [vmem:[#allocation6 + $0x60] sm:$0xff]
    %v1907 = vld [vmem:[#allocation6 + $0x68] sm:$0xff]
    %v1908 = vld [vmem:[#allocation6 + $0x70] sm:$0xff]
    %v1909 = vld [vmem:[#allocation6 + $0x78] sm:$0xff]
    %v1910 = vld [vmem:[#allocation6 + $0x90] sm:$0xff]
    %v1911 = vld [vmem:[#allocation6 + $0x98] sm:$0xff]
    %v1912 = vld [vmem:[#allocation6 + $0xa0] sm:$0xff]
    %v1913 = vld [vmem:[#allocation6 + $0xa8] sm:$0xff]
    %v1914 = vld [vmem:[#allocation6 + $0xc0] sm:$0xff]
    %v1915 = vld [vmem:[#allocation6 + $0xc8] sm:$0xff]
    %v1916 = vld [vmem:[#allocation6 + $0xd0] sm:$0xff]
    %v1917 = vld [vmem:[#allocation6 + $0xd8] sm:$0xff]
    %v1918 = vld [vmem:[#allocation6 + $0xf0] sm:$0xff]
    %v1919 = vld [vmem:[#allocation6 + $0xf8] sm:$0xff]
    %v1920 = vld [vmem:[#allocation6 + $0x100] sm:$0xff]
    %v1921 = vld [vmem:[#allocation6 + $0x108] sm:$0xff]
    %v1922 = vld [vmem:[#allocation6 + $0x120] sm:$0xff]
    %v1923 = vld [vmem:[#allocation6 + $0x128] sm:$0xff]
    %v1924 = vld [vmem:[#allocation6 + $0x130] sm:$0xff]
    %v1925 = vld [vmem:[#allocation6 + $0x138] sm:$0xff]
    %v1926 = vld [vmem:[#allocation6 + $0x150] sm:$0xff]
    %v1927 = vld [vmem:[#allocation6 + $0x158] sm:$0xff]
    %v1928 = vld [vmem:[#allocation6 + $0x160] sm:$0xff]
    %v1929 = vld [vmem:[#allocation6 + $0x168] sm:$0xff]
    %v1930 = vld [vmem:[#allocation6 + $0x180] sm:$0xff]
    %v1931 = vld [vmem:[#allocation6 + $0x188] sm:$0xff]
    %v1932 = vld [vmem:[#allocation6 + $0x190] sm:$0xff]
    %v1933 = vld [vmem:[#allocation6 + $0x198] sm:$0xff]
    %v1934 = vld [vmem:[#allocation6 + $0x1b0] sm:$0xff]
    %v1935 = vld [vmem:[#allocation6 + $0x1b8] sm:$0xff]
    %v1936 = vld [vmem:[#allocation6 + $0x1c0] sm:$0xff]
    %v1937 = vld [vmem:[#allocation6 + $0x1c8] sm:$0xff]
    %v1938 = vld [vmem:[#allocation6 + $0x1e0] sm:$0xff]
    %v1939 = vld [vmem:[#allocation6 + $0x1e8] sm:$0xff]
    %v1940 = vld [vmem:[#allocation6 + $0x1f0] sm:$0xff]
    %v1941 = vld [vmem:[#allocation6 + $0x1f8] sm:$0xff]
    %v1942 = vld [vmem:[#allocation6 + $0x210] sm:$0xff]
    %v1943 = vld [vmem:[#allocation6 + $0x218] sm:$0xff]
    %v1944 = vld [vmem:[#allocation6 + $0x220] sm:$0xff]
    %v1945 = vld [vmem:[#allocation6 + $0x228] sm:$0xff]
    %v1946 = vld [vmem:[#allocation6 + $0x240] sm:$0xff]
    %v1947 = vld [vmem:[#allocation6 + $0x248] sm:$0xff]
    %v1948 = vld [vmem:[#allocation6 + $0x250] sm:$0xff]
    %v1949 = vld [vmem:[#allocation6 + $0x258] sm:$0xff]
    %v1950 = vld [vmem:[#allocation6 + $0x270] sm:$0xff]
    %v1951 = vld [vmem:[#allocation6 + $0x278] sm:$0xff]
    %v1952 = vld [vmem:[#allocation6 + $0x280] sm:$0xff]
    %v1953 = vld [vmem:[#allocation6 + $0x288] sm:$0xff]
    %v1954 = vld [vmem:[#allocation6 + $0x2a0] sm:$0xff]
    %v1955 = vld [vmem:[#allocation6 + $0x2a8] sm:$0xff]
    %v1956 = vld [vmem:[#allocation6 + $0x2b0] sm:$0xff]
    %v1957 = vld [vmem:[#allocation6 + $0x2b8] sm:$0xff]
    %v1958 = vld [vmem:[#allocation6 + $0x2d0] sm:$0xff]
    %v1959 = vld [vmem:[#allocation6 + $0x2d8] sm:$0xff]
    %v1960 = vld [vmem:[#allocation6 + $0x2e0] sm:$0xff]
    %v1961 = vld [vmem:[#allocation6 + $0x2e8] sm:$0xff]
    %1962 = vmatprep.subr.mxu0 %v1899
    %1963 = vmatpush1.msra.mxu0 %v1898
    %1964 = vmatprep.subr.mxu0 %v1903
    %1965 = vmatpush1.msra.mxu0 %v1902
    %1966 = vmatprep.subr.mxu0 %v1907
    %1967 = vmatpush1.msra.mxu0 %v1906
    %1968 = vmatprep.subr.mxu0 %v1911
    %1969 = vmatpush1.msra.mxu0 %v1910
    %1970 = vmatprep.subr.mxu0 %v1915
    %1971 = vmatpush1.msra.mxu0 %v1914
    %1972 = vmatprep.subr.mxu0 %v1919
    %1973 = vmatpush1.msra.mxu0 %v1918
    %1974 = vmatprep.subr.mxu0 %v1923
    %1975 = vmatpush1.msra.mxu0 %v1922
    %1976 = vmatprep.subr.mxu0 %v1927
    %1977 = vmatpush1.msra.mxu0 %v1926
    %1978 = vmatprep.subr.mxu0 %v1931
    %1979 = vmatpush1.msra.mxu0 %v1930
    %1980 = vmatprep.subr.mxu0 %v1935
    %1981 = vmatpush1.msra.mxu0 %v1934
    %1982 = vmatprep.subr.mxu0 %v1939
    %1983 = vmatpush1.msra.mxu0 %v1938
    %1984 = vmatprep.subr.mxu0 %v1943
    %1985 = vmatpush1.msra.mxu0 %v1942
    %1986 = vmatprep.subr.mxu0 %v1947
    %1987 = vmatpush1.msra.mxu0 %v1946
    %1988 = vmatprep.subr.mxu0 %v1951
    %1989 = vmatpush1.msra.mxu0 %v1950
    %1990 = vmatprep.subr.mxu0 %v1955
    %1991 = vmatpush1.msra.mxu0 %v1954
    %1992 = vmatprep.subr.mxu0 %v1959
    %1993 = vmatpush1.msra.mxu0 %v1958
    %1994 = vmatprep.subr.mxu0 0.0
    %1995 = vmatpush1.msra.mxu0 0.0
    %1996 = vmatprep.subr.mxu0 0.0
    %1997 = vmatpush1.msra.mxu0 0.0
    %1998 = vmatprep.subr.mxu0 0.0
    %1999 = vmatpush1.msra.mxu0 0.0
    %2000 = vmatprep.subr.mxu0 0.0
    %2001 = vmatpush1.msra.mxu0 0.0
    %2002 = vmatprep.subr.mxu0 0.0
    %2003 = vmatpush1.msra.mxu0 0.0
    %2004 = vmatprep.subr.mxu0 0.0
    %2005 = vmatpush1.msra.mxu0 0.0
    %2006 = vmatprep.subr.mxu0 0.0
    %2007 = vmatpush1.msra.mxu0 0.0
    %2008 = vmatprep.subr.mxu0 0.0
    %2009 = vmatpush1.msra.mxu0 0.0
    %2010 = vmatprep.subr.mxu0 0.0
    %2011 = vmatpush1.msra.mxu0 0.0
    %2012 = vmatprep.subr.mxu0 0.0
    %2013 = vmatpush1.msra.mxu0 0.0
    %2014 = vmatprep.subr.mxu0 0.0
    %2015 = vmatpush1.msra.mxu0 0.0
    %2016 = vmatprep.subr.mxu0 0.0
    %2017 = vmatpush1.msra.mxu0 0.0
    %2018 = vmatprep.subr.mxu0 0.0
    %2019 = vmatpush1.msra.mxu0 0.0
    %2020 = vmatprep.subr.mxu0 0.0
    %2021 = vmatpush1.msra.mxu0 0.0
    %2022 = vmatprep.subr.mxu0 0.0
    %2023 = vmatpush1.msra.mxu0 0.0
    %2024 = vmatprep.subr.mxu0 0.0
    %2025 = vmatpush1.msra.mxu0 0.0
    %2026 = vmatprep.mubr.f32.mxu0 0.0
    %2027 = vmatmul.mubr.f32.gmra.mrb[0].mxu0 %v1897
    %v2028 = vpop.f32.mrb[0].mxu0
    %v2029 = vadd.f32 0.0, %v2028
    %v2030 = vpop.f32.mrb[0].mxu0
    %v2031 = vadd.f32 0.0, %v2030
    %2032 = vdwg.mxu0
    %2033 = vmatprep.subr.mxu0 %v1901
    %2034 = vmatpush1.msra.mxu0 %v1900
    %2035 = vmatprep.subr.mxu0 %v1905
    %2036 = vmatpush1.msra.mxu0 %v1904
    %2037 = vmatprep.subr.mxu0 %v1909
    %2038 = vmatpush1.msra.mxu0 %v1908
    %2039 = vmatprep.subr.mxu0 %v1913
    %2040 = vmatpush1.msra.mxu0 %v1912
    %2041 = vmatprep.subr.mxu0 %v1917
    %2042 = vmatpush1.msra.mxu0 %v1916
    %2043 = vmatprep.subr.mxu0 %v1921
    %2044 = vmatpush1.msra.mxu0 %v1920
    %2045 = vmatprep.subr.mxu0 %v1925
    %2046 = vmatpush1.msra.mxu0 %v1924
    %2047 = vmatprep.subr.mxu0 %v1929
    %2048 = vmatpush1.msra.mxu0 %v1928
    %2049 = vmatprep.subr.mxu0 %v1933
    %2050 = vmatpush1.msra.mxu0 %v1932
    %2051 = vmatprep.subr.mxu0 %v1937
    %2052 = vmatpush1.msra.mxu0 %v1936
    %2053 = vmatprep.subr.mxu0 %v1941
    %2054 = vmatpush1.msra.mxu0 %v1940
    %2055 = vmatprep.subr.mxu0 %v1945
    %2056 = vmatpush1.msra.mxu0 %v1944
    %2057 = vmatprep.subr.mxu0 %v1949
    %2058 = vmatpush1.msra.mxu0 %v1948
    %2059 = vmatprep.subr.mxu0 %v1953
    %2060 = vmatpush1.msra.mxu0 %v1952
    %2061 = vmatprep.subr.mxu0 %v1957
    %2062 = vmatpush1.msra.mxu0 %v1956
    %2063 = vmatprep.subr.mxu0 %v1961
    %2064 = vmatpush1.msra.mxu0 %v1960
    %2065 = vmatprep.subr.mxu0 0.0
    %2066 = vmatpush1.msra.mxu0 0.0
    %2067 = vmatprep.subr.mxu0 0.0
    %2068 = vmatpush1.msra.mxu0 0.0
    %2069 = vmatprep.subr.mxu0 0.0
    %2070 = vmatpush1.msra.mxu0 0.0
    %2071 = vmatprep.subr.mxu0 0.0
    %2072 = vmatpush1.msra.mxu0 0.0
    %2073 = vmatprep.subr.mxu0 0.0
    %2074 = vmatpush1.msra.mxu0 0.0
    %2075 = vmatprep.subr.mxu0 0.0
    %2076 = vmatpush1.msra.mxu0 0.0
    %2077 = vmatprep.subr.mxu0 0.0
    %2078 = vmatpush1.msra.mxu0 0.0
    %2079 = vmatprep.subr.mxu0 0.0
    %2080 = vmatpush1.msra.mxu0 0.0
    %2081 = vmatprep.subr.mxu0 0.0
    %2082 = vmatpush1.msra.mxu0 0.0
    %2083 = vmatprep.subr.mxu0 0.0
    %2084 = vmatpush1.msra.mxu0 0.0
    %2085 = vmatprep.subr.mxu0 0.0
    %2086 = vmatpush1.msra.mxu0 0.0
    %2087 = vmatprep.subr.mxu0 0.0
    %2088 = vmatpush1.msra.mxu0 0.0
    %2089 = vmatprep.subr.mxu0 0.0
    %2090 = vmatpush1.msra.mxu0 0.0
    %2091 = vmatprep.subr.mxu0 0.0
    %2092 = vmatpush1.msra.mxu0 0.0
    %2093 = vmatprep.subr.mxu0 0.0
    %2094 = vmatpush1.msra.mxu0 0.0
    %2095 = vmatprep.subr.mxu0 0.0
    %2096 = vmatpush1.msra.mxu0 0.0
    %2097 = vmatprep.mubr.f32.mxu0 0.0
    %2098 = vmatmul.mubr.f32.gmra.mrb[0].mxu0 %v1897
    %v2099 = vpop.f32.mrb[0].mxu0
    %v2100 = vadd.f32 0.0, %v2099
    %v2101 = vpop.f32.mrb[0].mxu0
    %2102 = vdwg.mxu0
    %v2103 = vadd.f32 %v480, %v2029
    %v2104 = vxor.u32 %v2103, 2147483648
    %v2105 = vmul.f32 %v2104, 1.442695
    %v2106 = vpow.pop %v2105
    %v2107 = vadd.f32 %v2106, 1.0
    %v2108 = vrcp.pop %v2107
    %v2109 = vmul.f32 1.0, %v2108
    %v2110 = vadd.f32 %v482, %v2031
    %v2111 = vxor.u32 %v2110, 2147483648
    %v2112 = vmul.f32 %v2111, 1.442695
    %v2113 = vpow.pop %v2112
    %v2114 = vadd.f32 %v2113, 1.0
    %v2115 = vrcp.pop %v2114
    %v2116 = vmul.f32 1.0, %v2115
    %v2117 = vadd.f32 %v2100, %v82
    %v2118 = vmul.f32 %v2109, %v2117
    %v2119 = vadd.f32 %v551, %v2118
    %v2120 = vtanh.pop %v2119
    %v2121 = vsub.f32 %v1897, %v2120
    %v2122 = vmul.f32 %v2116, %v2121
    %v2123 = vadd.f32 %v2120, %v2122
    %2124 = vst [vmem:[#allocation2] sm:$0xff] %v2123
    %v2125 = vld [vmem:[#allocation6] sm:$0xff]
    %v2126 = vld [vmem:[#allocation6 + $0x8] sm:$0xff]
    %v2127 = vld [vmem:[#allocation6 + $0x10] sm:$0xff]
    %v2128 = vld [vmem:[#allocation6 + $0x18] sm:$0xff]
    %v2129 = vld [vmem:[#allocation6 + $0x20] sm:$0xff]
    %v2130 = vld [vmem:[#allocation6 + $0x28] sm:$0xff]
    %v2131 = vld [vmem:[#allocation6 + $0x30] sm:$0xff]
    %v2132 = vld [vmem:[#allocation6 + $0x38] sm:$0xff]
    %v2133 = vld [vmem:[#allocation6 + $0x40] sm:$0xff]
    %v2134 = vld [vmem:[#allocation6 + $0x48] sm:$0xff]
    %v2135 = vld [vmem:[#allocation6 + $0x50] sm:$0xff]
    %v2136 = vld [vmem:[#allocation6 + $0x58] sm:$0xff]
    %v2137 = vld [vmem:[#allocation6 + $0x60] sm:$0xff]
    %v2138 = vld [vmem:[#allocation6 + $0x68] sm:$0xff]
    %v2139 = vld [vmem:[#allocation6 + $0x70] sm:$0xff]
    %v2140 = vld [vmem:[#allocation6 + $0x78] sm:$0xff]
    %v2141 = vld [vmem:[#allocation6 + $0x80] sm:$0xff]
    %v2142 = vld [vmem:[#allocation6 + $0x88] sm:$0xff]
    %v2143 = vld [vmem:[#allocation6 + $0x90] sm:$0xff]
    %v2144 = vld [vmem:[#allocation6 + $0x98] sm:$0xff]
    %v2145 = vld [vmem:[#allocation6 + $0xa0] sm:$0xff]
    %v2146 = vld [vmem:[#allocation6 + $0xa8] sm:$0xff]
    %v2147 = vld [vmem:[#allocation6 + $0xb0] sm:$0xff]
    %v2148 = vld [vmem:[#allocation6 + $0xb8] sm:$0xff]
    %v2149 = vld [vmem:[#allocation6 + $0xc0] sm:$0xff]
    %v2150 = vld [vmem:[#allocation6 + $0xc8] sm:$0xff]
    %v2151 = vld [vmem:[#allocation6 + $0xd0] sm:$0xff]
    %v2152 = vld [vmem:[#allocation6 + $0xd8] sm:$0xff]
    %v2153 = vld [vmem:[#allocation6 + $0xe0] sm:$0xff]
    %v2154 = vld [vmem:[#allocation6 + $0xe8] sm:$0xff]
    %v2155 = vld [vmem:[#allocation6 + $0xf0] sm:$0xff]
    %v2156 = vld [vmem:[#allocation6 + $0xf8] sm:$0xff]
    %v2157 = vld [vmem:[#allocation6 + $0x100] sm:$0xff]
    %v2158 = vld [vmem:[#allocation6 + $0x108] sm:$0xff]
    %v2159 = vld [vmem:[#allocation6 + $0x110] sm:$0xff]
    %v2160 = vld [vmem:[#allocation6 + $0x118] sm:$0xff]
    %v2161 = vld [vmem:[#allocation6 + $0x120] sm:$0xff]
    %v2162 = vld [vmem:[#allocation6 + $0x128] sm:$0xff]
    %v2163 = vld [vmem:[#allocation6 + $0x130] sm:$0xff]
    %v2164 = vld [vmem:[#allocation6 + $0x138] sm:$0xff]
    %v2165 = vld [vmem:[#allocation6 + $0x140] sm:$0xff]
    %v2166 = vld [vmem:[#allocation6 + $0x148] sm:$0xff]
    %v2167 = vld [vmem:[#allocation6 + $0x150] sm:$0xff]
    %v2168 = vld [vmem:[#allocation6 + $0x158] sm:$0xff]
    %v2169 = vld [vmem:[#allocation6 + $0x160] sm:$0xff]
    %v2170 = vld [vmem:[#allocation6 + $0x168] sm:$0xff]
    %v2171 = vld [vmem:[#allocation6 + $0x170] sm:$0xff]
    %v2172 = vld [vmem:[#allocation6 + $0x178] sm:$0xff]
    %v2173 = vld [vmem:[#allocation6 + $0x180] sm:$0xff]
    %v2174 = vld [vmem:[#allocation6 + $0x188] sm:$0xff]
    %v2175 = vld [vmem:[#allocation6 + $0x190] sm:$0xff]
    %v2176 = vld [vmem:[#allocation6 + $0x198] sm:$0xff]
    %v2177 = vld [vmem:[#allocation6 + $0x1a0] sm:$0xff]
    %v2178 = vld [vmem:[#allocation6 + $0x1a8] sm:$0xff]
    %v2179 = vld [vmem:[#allocation6 + $0x1b0] sm:$0xff]
    %v2180 = vld [vmem:[#allocation6 + $0x1b8] sm:$0xff]
    %v2181 = vld [vmem:[#allocation6 + $0x1c0] sm:$0xff]
    %v2182 = vld [vmem:[#allocation6 + $0x1c8] sm:$0xff]
    %v2183 = vld [vmem:[#allocation6 + $0x1d0] sm:$0xff]
    %v2184 = vld [vmem:[#allocation6 + $0x1d8] sm:$0xff]
    %v2185 = vld [vmem:[#allocation6 + $0x1e0] sm:$0xff]
    %v2186 = vld [vmem:[#allocation6 + $0x1e8] sm:$0xff]
    %v2187 = vld [vmem:[#allocation6 + $0x1f0] sm:$0xff]
    %v2188 = vld [vmem:[#allocation6 + $0x1f8] sm:$0xff]
    %v2189 = vld [vmem:[#allocation6 + $0x200] sm:$0xff]
    %v2190 = vld [vmem:[#allocation6 + $0x208] sm:$0xff]
    %v2191 = vld [vmem:[#allocation6 + $0x210] sm:$0xff]
    %v2192 = vld [vmem:[#allocation6 + $0x218] sm:$0xff]
    %v2193 = vld [vmem:[#allocation6 + $0x220] sm:$0xff]
    %v2194 = vld [vmem:[#allocation6 + $0x228] sm:$0xff]
    %v2195 = vld [vmem:[#allocation6 + $0x230] sm:$0xff]
    %v2196 = vld [vmem:[#allocation6 + $0x238] sm:$0xff]
    %v2197 = vld [vmem:[#allocation6 + $0x240] sm:$0xff]
    %v2198 = vld [vmem:[#allocation6 + $0x248] sm:$0xff]
    %v2199 = vld [vmem:[#allocation6 + $0x250] sm:$0xff]
    %v2200 = vld [vmem:[#allocation6 + $0x258] sm:$0xff]
    %v2201 = vld [vmem:[#allocation6 + $0x260] sm:$0xff]
    %v2202 = vld [vmem:[#allocation6 + $0x268] sm:$0xff]
    %v2203 = vld [vmem:[#allocation6 + $0x270] sm:$0xff]
    %v2204 = vld [vmem:[#allocation6 + $0x278] sm:$0xff]
    %v2205 = vld [vmem:[#allocation6 + $0x280] sm:$0xff]
    %v2206 = vld [vmem:[#allocation6 + $0x288] sm:$0xff]
    %v2207 = vld [vmem:[#allocation6 + $0x290] sm:$0xff]
    %v2208 = vld [vmem:[#allocation6 + $0x298] sm:$0xff]
    %v2209 = vld [vmem:[#allocation6 + $0x2a0] sm:$0xff]
    %v2210 = vld [vmem:[#allocation6 + $0x2a8] sm:$0xff]
    %v2211 = vld [vmem:[#allocation6 + $0x2b0] sm:$0xff]
    %v2212 = vld [vmem:[#allocation6 + $0x2b8] sm:$0xff]
    %v2213 = vld [vmem:[#allocation6 + $0x2c0] sm:$0xff]
    %v2214 = vld [vmem:[#allocation6 + $0x2c8] sm:$0xff]
    %v2215 = vld [vmem:[#allocation6 + $0x2d0] sm:$0xff]
    %v2216 = vld [vmem:[#allocation6 + $0x2d8] sm:$0xff]
    %v2217 = vld [vmem:[#allocation6 + $0x2e0] sm:$0xff]
    %v2218 = vld [vmem:[#allocation6 + $0x2e8] sm:$0xff]
    %v2219 = vld [vmem:[#allocation6 + $0x2f0] sm:$0xff]
    %v2220 = vld [vmem:[#allocation6 + $0x2f8] sm:$0xff]
    %2221 = vmatprep.subr.mxu0 %v2126
    %2222 = vmatpush1.msra.mxu0 %v2125
    %2223 = vmatprep.subr.mxu0 %v2132
    %2224 = vmatpush1.msra.mxu0 %v2131
    %2225 = vmatprep.subr.mxu0 %v2138
    %2226 = vmatpush1.msra.mxu0 %v2137
    %2227 = vmatprep.subr.mxu0 %v2144
    %2228 = vmatpush1.msra.mxu0 %v2143
    %2229 = vmatprep.subr.mxu0 %v2150
    %2230 = vmatpush1.msra.mxu0 %v2149
    %2231 = vmatprep.subr.mxu0 %v2156
    %2232 = vmatpush1.msra.mxu0 %v2155
    %2233 = vmatprep.subr.mxu0 %v2162
    %2234 = vmatpush1.msra.mxu0 %v2161
    %2235 = vmatprep.subr.mxu0 %v2168
    %2236 = vmatpush1.msra.mxu0 %v2167
    %2237 = vmatprep.subr.mxu0 %v2174
    %2238 = vmatpush1.msra.mxu0 %v2173
    %2239 = vmatprep.subr.mxu0 %v2180
    %2240 = vmatpush1.msra.mxu0 %v2179
    %2241 = vmatprep.subr.mxu0 %v2186
    %2242 = vmatpush1.msra.mxu0 %v2185
    %2243 = vmatprep.subr.mxu0 %v2192
    %2244 = vmatpush1.msra.mxu0 %v2191
    %2245 = vmatprep.subr.mxu0 %v2198
    %2246 = vmatpush1.msra.mxu0 %v2197
    %2247 = vmatprep.subr.mxu0 %v2204
    %2248 = vmatpush1.msra.mxu0 %v2203
    %2249 = vmatprep.subr.mxu0 %v2210
    %2250 = vmatpush1.msra.mxu0 %v2209
    %2251 = vmatprep.subr.mxu0 %v2216
    %2252 = vmatpush1.msra.mxu0 %v2215
    %2253 = vmatprep.subr.mxu0 0.0
    %2254 = vmatpush1.msra.mxu0 0.0
    %2255 = vmatprep.subr.mxu0 0.0
    %2256 = vmatpush1.msra.mxu0 0.0
    %2257 = vmatprep.subr.mxu0 0.0
    %2258 = vmatpush1.msra.mxu0 0.0
    %2259 = vmatprep.subr.mxu0 0.0
    %2260 = vmatpush1.msra.mxu0 0.0
    %2261 = vmatprep.subr.mxu0 0.0
    %2262 = vmatpush1.msra.mxu0 0.0
    %2263 = vmatprep.subr.mxu0 0.0
    %2264 = vmatpush1.msra.mxu0 0.0
    %2265 = vmatprep.subr.mxu0 0.0
    %2266 = vmatpush1.msra.mxu0 0.0
    %2267 = vmatprep.subr.mxu0 0.0
    %2268 = vmatpush1.msra.mxu0 0.0
    %2269 = vmatprep.subr.mxu0 0.0
    %2270 = vmatpush1.msra.mxu0 0.0
    %2271 = vmatprep.subr.mxu0 0.0
    %2272 = vmatpush1.msra.mxu0 0.0
    %2273 = vmatprep.subr.mxu0 0.0
    %2274 = vmatpush1.msra.mxu0 0.0
    %2275 = vmatprep.subr.mxu0 0.0
    %2276 = vmatpush1.msra.mxu0 0.0
    %2277 = vmatprep.subr.mxu0 0.0
    %2278 = vmatpush1.msra.mxu0 0.0
    %2279 = vmatprep.subr.mxu0 0.0
    %2280 = vmatpush1.msra.mxu0 0.0
    %2281 = vmatprep.subr.mxu0 0.0
    %2282 = vmatpush1.msra.mxu0 0.0
    %2283 = vmatprep.subr.mxu0 0.0
    %2284 = vmatpush1.msra.mxu0 0.0
    %2285 = vmatprep.mubr.f32.mxu0 0.0
    %2286 = vmatmul.mubr.f32.gmra.mrb[0].mxu0 %v2123
    %v2287 = vpop.f32.mrb[0].mxu0
    %v2288 = vadd.f32 0.0, %v2287
    %v2289 = vpop.f32.mrb[0].mxu0
    %v2290 = vadd.f32 0.0, %v2289
    %2291 = vdwg.mxu0
    %2292 = vmatprep.subr.mxu0 %v2128
    %2293 = vmatpush1.msra.mxu0 %v2127
    %2294 = vmatprep.subr.mxu0 %v2134
    %2295 = vmatpush1.msra.mxu0 %v2133
    %2296 = vmatprep.subr.mxu0 %v2140
    %2297 = vmatpush1.msra.mxu0 %v2139
    %2298 = vmatprep.subr.mxu0 %v2146
    %2299 = vmatpush1.msra.mxu0 %v2145
    %2300 = vmatprep.subr.mxu0 %v2152
    %2301 = vmatpush1.msra.mxu0 %v2151
    %2302 = vmatprep.subr.mxu0 %v2158
    %2303 = vmatpush1.msra.mxu0 %v2157
    %2304 = vmatprep.subr.mxu0 %v2164
    %2305 = vmatpush1.msra.mxu0 %v2163
    %2306 = vmatprep.subr.mxu0 %v2170
    %2307 = vmatpush1.msra.mxu0 %v2169
    %2308 = vmatprep.subr.mxu0 %v2176
    %2309 = vmatpush1.msra.mxu0 %v2175
    %2310 = vmatprep.subr.mxu0 %v2182
    %2311 = vmatpush1.msra.mxu0 %v2181
    %2312 = vmatprep.subr.mxu0 %v2188
    %2313 = vmatpush1.msra.mxu0 %v2187
    %2314 = vmatprep.subr.mxu0 %v2194
    %2315 = vmatpush1.msra.mxu0 %v2193
    %2316 = vmatprep.subr.mxu0 %v2200
    %2317 = vmatpush1.msra.mxu0 %v2199
    %2318 = vmatprep.subr.mxu0 %v2206
    %2319 = vmatpush1.msra.mxu0 %v2205
    %2320 = vmatprep.subr.mxu0 %v2212
    %2321 = vmatpush1.msra.mxu0 %v2211
    %2322 = vmatprep.subr.mxu0 %v2218
    %2323 = vmatpush1.msra.mxu0 %v2217
    %2324 = vmatprep.subr.mxu0 0.0
    %2325 = vmatpush1.msra.mxu0 0.0
    %2326 = vmatprep.subr.mxu0 0.0
    %2327 = vmatpush1.msra.mxu0 0.0
    %2328 = vmatprep.subr.mxu0 0.0
    %2329 = vmatpush1.msra.mxu0 0.0
    %2330 = vmatprep.subr.mxu0 0.0
    %2331 = vmatpush1.msra.mxu0 0.0
    %2332 = vmatprep.subr.mxu0 0.0
    %2333 = vmatpush1.msra.mxu0 0.0
    %2334 = vmatprep.subr.mxu0 0.0
    %2335 = vmatpush1.msra.mxu0 0.0
    %2336 = vmatprep.subr.mxu0 0.0
    %2337 = vmatpush1.msra.mxu0 0.0
    %2338 = vmatprep.subr.mxu0 0.0
    %2339 = vmatpush1.msra.mxu0 0.0
    %2340 = vmatprep.subr.mxu0 0.0
    %2341 = vmatpush1.msra.mxu0 0.0
    %2342 = vmatprep.subr.mxu0 0.0
    %2343 = vmatpush1.msra.mxu0 0.0
    %2344 = vmatprep.subr.mxu0 0.0
    %2345 = vmatpush1.msra.mxu0 0.0
    %2346 = vmatprep.subr.mxu0 0.0
    %2347 = vmatpush1.msra.mxu0 0.0
    %2348 = vmatprep.subr.mxu0 0.0
    %2349 = vmatpush1.msra.mxu0 0.0
    %2350 = vmatprep.subr.mxu0 0.0
    %2351 = vmatpush1.msra.mxu0 0.0
    %2352 = vmatprep.subr.mxu0 0.0
    %2353 = vmatpush1.msra.mxu0 0.0
    %2354 = vmatprep.subr.mxu0 0.0
    %2355 = vmatpush1.msra.mxu0 0.0
    %2356 = vmatprep.mubr.f32.mxu0 0.0
    %2357 = vmatmul.mubr.f32.gmra.mrb[0].mxu0 %v2123
    %v2358 = vpop.f32.mrb[0].mxu0
    %v2359 = vadd.f32 0.0, %v2358
    %v2360 = vpop.f32.mrb[0].mxu0
    %v2361 = vadd.f32 0.0, %v2360
    %2362 = vdwg.mxu0
    %2363 = vmatprep.subr.mxu0 %v2130
    %2364 = vmatpush1.msra.mxu0 %v2129
    %2365 = vmatprep.subr.mxu0 %v2136
    %2366 = vmatpush1.msra.mxu0 %v2135
    %2367 = vmatprep.subr.mxu0 %v2142
    %2368 = vmatpush1.msra.mxu0 %v2141
    %2369 = vmatprep.subr.mxu0 %v2148
    %2370 = vmatpush1.msra.mxu0 %v2147
    %2371 = vmatprep.subr.mxu0 %v2154
    %2372 = vmatpush1.msra.mxu0 %v2153
    %2373 = vmatprep.subr.mxu0 %v2160
    %2374 = vmatpush1.msra.mxu0 %v2159
    %2375 = vmatprep.subr.mxu0 %v2166
    %2376 = vmatpush1.msra.mxu0 %v2165
    %2377 = vmatprep.subr.mxu0 %v2172
    %2378 = vmatpush1.msra.mxu0 %v2171
    %2379 = vmatprep.subr.mxu0 %v2178
    %2380 = vmatpush1.msra.mxu0 %v2177
    %2381 = vmatprep.subr.mxu0 %v2184
    %2382 = vmatpush1.msra.mxu0 %v2183
    %2383 = vmatprep.subr.mxu0 %v2190
    %2384 = vmatpush1.msra.mxu0 %v2189
    %2385 = vmatprep.subr.mxu0 %v2196
    %2386 = vmatpush1.msra.mxu0 %v2195
    %2387 = vmatprep.subr.mxu0 %v2202
    %2388 = vmatpush1.msra.mxu0 %v2201
    %2389 = vmatprep.subr.mxu0 %v2208
    %2390 = vmatpush1.msra.mxu0 %v2207
    %2391 = vmatprep.subr.mxu0 %v2214
    %2392 = vmatpush1.msra.mxu0 %v2213
    %2393 = vmatprep.subr.mxu0 %v2220
    %2394 = vmatpush1.msra.mxu0 %v2219
    %2395 = vmatprep.subr.mxu0 0.0
    %2396 = vmatpush1.msra.mxu0 0.0
    %2397 = vmatprep.subr.mxu0 0.0
    %2398 = vmatpush1.msra.mxu0 0.0
    %2399 = vmatprep.subr.mxu0 0.0
    %2400 = vmatpush1.msra.mxu0 0.0
    %2401 = vmatprep.subr.mxu0 0.0
    %2402 = vmatpush1.msra.mxu0 0.0
    %2403 = vmatprep.subr.mxu0 0.0
    %2404 = vmatpush1.msra.mxu0 0.0
    %2405 = vmatprep.subr.mxu0 0.0
    %2406 = vmatpush1.msra.mxu0 0.0
    %2407 = vmatprep.subr.mxu0 0.0
    %2408 = vmatpush1.msra.mxu0 0.0
    %2409 = vmatprep.subr.mxu0 0.0
    %2410 = vmatpush1.msra.mxu0 0.0
    %2411 = vmatprep.subr.mxu0 0.0
    %2412 = vmatpush1.msra.mxu0 0.0
    %2413 = vmatprep.subr.mxu0 0.0
    %2414 = vmatpush1.msra.mxu0 0.0
    %2415 = vmatprep.subr.mxu0 0.0
    %2416 = vmatpush1.msra.mxu0 0.0
    %2417 = vmatprep.subr.mxu0 0.0
    %2418 = vmatpush1.msra.mxu0 0.0
    %2419 = vmatprep.subr.mxu0 0.0
    %2420 = vmatpush1.msra.mxu0 0.0
    %2421 = vmatprep.subr.mxu0 0.0
    %2422 = vmatpush1.msra.mxu0 0.0
    %2423 = vmatprep.subr.mxu0 0.0
    %2424 = vmatpush1.msra.mxu0 0.0
    %2425 = vmatprep.subr.mxu0 0.0
    %2426 = vmatpush1.msra.mxu0 0.0
    %2427 = vmatprep.mubr.f32.mxu0 0.0
    %2428 = vmatmul.mubr.f32.gmra.mrb[0].mxu0 %v2123
    %v2429 = vpop.f32.mrb[0].mxu0
    %v2430 = vadd.f32 0.0, %v2429
    %v2431 = vpop.f32.mrb[0].mxu0
    %v2432 = vadd.f32 0.0, %v2431
    %2433 = vdwg.mxu0
    %v2434 = vadd.f32 %v2361, %v89
    %v2435 = vadd.f32 %v2430, %v93
    %v2436 = vadd.f32 %v2432, %v97
    %v2437 = vadd.f32 %v2434, %v2288
    %v2438 = vxor.u32 %v2437, 2147483648
    %v2439 = vmul.f32 %v2438, 1.442695
    %v2440 = vpow.pop %v2439
    %v2441 = vadd.f32 %v2440, 1.0
    %v2442 = vrcp.pop %v2441
    %v2443 = vmul.f32 1.0, %v2442
    %v2444 = vadd.f32 %v2435, %v2290
    %v2445 = vxor.u32 %v2444, 2147483648
    %v2446 = vmul.f32 %v2445, 1.442695
    %v2447 = vpow.pop %v2446
    %v2448 = vadd.f32 %v2447, 1.0
    %v2449 = vrcp.pop %v2448
    %v2450 = vmul.f32 1.0, %v2449
    %v2451 = vadd.f32 %v2359, %v82
    %v2452 = vmul.f32 %v2443, %v2451
    %v2453 = vadd.f32 %v2436, %v2452
    %v2454 = vtanh.pop %v2453
    %v2455 = vsub.f32 %v2123, %v2454
    %v2456 = vmul.f32 %v2450, %v2455
    %v2457 = vadd.f32 %v2454, %v2456
    %2458 = vst [vmem:[#allocation2 + $0x8] sm:$0xff] %v2457
    %v2459 = vld [vmem:[#allocation6] sm:$0xff]
    %v2460 = vld [vmem:[#allocation6 + $0x8] sm:$0xff]
    %v2461 = vld [vmem:[#allocation6 + $0x10] sm:$0xff]
    %v2462 = vld [vmem:[#allocation6 + $0x18] sm:$0xff]
    %v2463 = vld [vmem:[#allocation6 + $0x20] sm:$0xff]
    %v2464 = vld [vmem:[#allocation6 + $0x28] sm:$0xff]
    %v2465 = vld [vmem:[#allocation6 + $0x30] sm:$0xff]
    %v2466 = vld [vmem:[#allocation6 + $0x38] sm:$0xff]
    %v2467 = vld [vmem:[#allocation6 + $0x40] sm:$0xff]
    %v2468 = vld [vmem:[#allocation6 + $0x48] sm:$0xff]
    %v2469 = vld [vmem:[#allocation6 + $0x50] sm:$0xff]
    %v2470 = vld [vmem:[#allocation6 + $0x58] sm:$0xff]
    %v2471 = vld [vmem:[#allocation6 + $0x60] sm:$0xff]
    %v2472 = vld [vmem:[#allocation6 + $0x68] sm:$0xff]
    %v2473 = vld [vmem:[#allocation6 + $0x70] sm:$0xff]
    %v2474 = vld [vmem:[#allocation6 + $0x78] sm:$0xff]
    %v2475 = vld [vmem:[#allocation6 + $0x80] sm:$0xff]
    %v2476 = vld [vmem:[#allocation6 + $0x88] sm:$0xff]
    %v2477 = vld [vmem:[#allocation6 + $0x90] sm:$0xff]
    %v2478 = vld [vmem:[#allocation6 + $0x98] sm:$0xff]
    %v2479 = vld [vmem:[#allocation6 + $0xa0] sm:$0xff]
    %v2480 = vld [vmem:[#allocation6 + $0xa8] sm:$0xff]
    %v2481 = vld [vmem:[#allocation6 + $0xb0] sm:$0xff]
    %v2482 = vld [vmem:[#allocation6 + $0xb8] sm:$0xff]
    %v2483 = vld [vmem:[#allocation6 + $0xc0] sm:$0xff]
    %v2484 = vld [vmem:[#allocation6 + $0xc8] sm:$0xff]
    %v2485 = vld [vmem:[#allocation6 + $0xd0] sm:$0xff]
    %v2486 = vld [vmem:[#allocation6 + $0xd8] sm:$0xff]
    %v2487 = vld [vmem:[#allocation6 + $0xe0] sm:$0xff]
    %v2488 = vld [vmem:[#allocation6 + $0xe8] sm:$0xff]
    %v2489 = vld [vmem:[#allocation6 + $0xf0] sm:$0xff]
    %v2490 = vld [vmem:[#allocation6 + $0xf8] sm:$0xff]
    %v2491 = vld [vmem:[#allocation6 + $0x100] sm:$0xff]
    %v2492 = vld [vmem:[#allocation6 + $0x108] sm:$0xff]
    %v2493 = vld [vmem:[#allocation6 + $0x110] sm:$0xff]
    %v2494 = vld [vmem:[#allocation6 + $0x118] sm:$0xff]
    %v2495 = vld [vmem:[#allocation6 + $0x120] sm:$0xff]
    %v2496 = vld [vmem:[#allocation6 + $0x128] sm:$0xff]
    %v2497 = vld [vmem:[#allocation6 + $0x130] sm:$0xff]
    %v2498 = vld [vmem:[#allocation6 + $0x138] sm:$0xff]
    %v2499 = vld [vmem:[#allocation6 + $0x140] sm:$0xff]
    %v2500 = vld [vmem:[#allocation6 + $0x148] sm:$0xff]
    %v2501 = vld [vmem:[#allocation6 + $0x150] sm:$0xff]
    %v2502 = vld [vmem:[#allocation6 + $0x158] sm:$0xff]
    %v2503 = vld [vmem:[#allocation6 + $0x160] sm:$0xff]
    %v2504 = vld [vmem:[#allocation6 + $0x168] sm:$0xff]
    %v2505 = vld [vmem:[#allocation6 + $0x170] sm:$0xff]
    %v2506 = vld [vmem:[#allocation6 + $0x178] sm:$0xff]
    %v2507 = vld [vmem:[#allocation6 + $0x180] sm:$0xff]
    %v2508 = vld [vmem:[#allocation6 + $0x188] sm:$0xff]
    %v2509 = vld [vmem:[#allocation6 + $0x190] sm:$0xff]
    %v2510 = vld [vmem:[#allocation6 + $0x198] sm:$0xff]
    %v2511 = vld [vmem:[#allocation6 + $0x1a0] sm:$0xff]
    %v2512 = vld [vmem:[#allocation6 + $0x1a8] sm:$0xff]
    %v2513 = vld [vmem:[#allocation6 + $0x1b0] sm:$0xff]
    %v2514 = vld [vmem:[#allocation6 + $0x1b8] sm:$0xff]
    %v2515 = vld [vmem:[#allocation6 + $0x1c0] sm:$0xff]
    %v2516 = vld [vmem:[#allocation6 + $0x1c8] sm:$0xff]
    %v2517 = vld [vmem:[#allocation6 + $0x1d0] sm:$0xff]
    %v2518 = vld [vmem:[#allocation6 + $0x1d8] sm:$0xff]
    %v2519 = vld [vmem:[#allocation6 + $0x1e0] sm:$0xff]
    %v2520 = vld [vmem:[#allocation6 + $0x1e8] sm:$0xff]
    %v2521 = vld [vmem:[#allocation6 + $0x1f0] sm:$0xff]
    %v2522 = vld [vmem:[#allocation6 + $0x1f8] sm:$0xff]
    %v2523 = vld [vmem:[#allocation6 + $0x200] sm:$0xff]
    %v2524 = vld [vmem:[#allocation6 + $0x208] sm:$0xff]
    %v2525 = vld [vmem:[#allocation6 + $0x210] sm:$0xff]
    %v2526 = vld [vmem:[#allocation6 + $0x218] sm:$0xff]
    %v2527 = vld [vmem:[#allocation6 + $0x220] sm:$0xff]
    %v2528 = vld [vmem:[#allocation6 + $0x228] sm:$0xff]
    %v2529 = vld [vmem:[#allocation6 + $0x230] sm:$0xff]
    %v2530 = vld [vmem:[#allocation6 + $0x238] sm:$0xff]
    %v2531 = vld [vmem:[#allocation6 + $0x240] sm:$0xff]
    %v2532 = vld [vmem:[#allocation6 + $0x248] sm:$0xff]
    %v2533 = vld [vmem:[#allocation6 + $0x250] sm:$0xff]
    %v2534 = vld [vmem:[#allocation6 + $0x258] sm:$0xff]
    %v2535 = vld [vmem:[#allocation6 + $0x260] sm:$0xff]
    %v2536 = vld [vmem:[#allocation6 + $0x268] sm:$0xff]
    %v2537 = vld [vmem:[#allocation6 + $0x270] sm:$0xff]
    %v2538 = vld [vmem:[#allocation6 + $0x278] sm:$0xff]
    %v2539 = vld [vmem:[#allocation6 + $0x280] sm:$0xff]
    %v2540 = vld [vmem:[#allocation6 + $0x288] sm:$0xff]
    %v2541 = vld [vmem:[#allocation6 + $0x290] sm:$0xff]
    %v2542 = vld [vmem:[#allocation6 + $0x298] sm:$0xff]
    %v2543 = vld [vmem:[#allocation6 + $0x2a0] sm:$0xff]
    %v2544 = vld [vmem:[#allocation6 + $0x2a8] sm:$0xff]
    %v2545 = vld [vmem:[#allocation6 + $0x2b0] sm:$0xff]
    %v2546 = vld [vmem:[#allocation6 + $0x2b8] sm:$0xff]
    %v2547 = vld [vmem:[#allocation6 + $0x2c0] sm:$0xff]
    %v2548 = vld [vmem:[#allocation6 + $0x2c8] sm:$0xff]
    %v2549 = vld [vmem:[#allocation6 + $0x2d0] sm:$0xff]
    %v2550 = vld [vmem:[#allocation6 + $0x2d8] sm:$0xff]
    %v2551 = vld [vmem:[#allocation6 + $0x2e0] sm:$0xff]
    %v2552 = vld [vmem:[#allocation6 + $0x2e8] sm:$0xff]
    %v2553 = vld [vmem:[#allocation6 + $0x2f0] sm:$0xff]
    %v2554 = vld [vmem:[#allocation6 + $0x2f8] sm:$0xff]
    %2555 = vmatprep.subr.mxu0 %v2460
    %2556 = vmatpush1.msra.mxu0 %v2459
    %2557 = vmatprep.subr.mxu0 %v2466
    %2558 = vmatpush1.msra.mxu0 %v2465
    %2559 = vmatprep.subr.mxu0 %v2472
    %2560 = vmatpush1.msra.mxu0 %v2471
    %2561 = vmatprep.subr.mxu0 %v2478
    %2562 = vmatpush1.msra.mxu0 %v2477
    %2563 = vmatprep.subr.mxu0 %v2484
    %2564 = vmatpush1.msra.mxu0 %v2483
    %2565 = vmatprep.subr.mxu0 %v2490
    %2566 = vmatpush1.msra.mxu0 %v2489
    %2567 = vmatprep.subr.mxu0 %v2496
    %2568 = vmatpush1.msra.mxu0 %v2495
    %2569 = vmatprep.subr.mxu0 %v2502
    %2570 = vmatpush1.msra.mxu0 %v2501
    %2571 = vmatprep.subr.mxu0 %v2508
    %2572 = vmatpush1.msra.mxu0 %v2507
    %2573 = vmatprep.subr.mxu0 %v2514
    %2574 = vmatpush1.msra.mxu0 %v2513
    %2575 = vmatprep.subr.mxu0 %v2520
    %2576 = vmatpush1.msra.mxu0 %v2519
    %2577 = vmatprep.subr.mxu0 %v2526
    %2578 = vmatpush1.msra.mxu0 %v2525
    %2579 = vmatprep.subr.mxu0 %v2532
    %2580 = vmatpush1.msra.mxu0 %v2531
    %2581 = vmatprep.subr.mxu0 %v2538
    %2582 = vmatpush1.msra.mxu0 %v2537
    %2583 = vmatprep.subr.mxu0 %v2544
    %2584 = vmatpush1.msra.mxu0 %v2543
    %2585 = vmatprep.subr.mxu0 %v2550
    %2586 = vmatpush1.msra.mxu0 %v2549
    %2587 = vmatprep.subr.mxu0 0.0
    %2588 = vmatpush1.msra.mxu0 0.0
    %2589 = vmatprep.subr.mxu0 0.0
    %2590 = vmatpush1.msra.mxu0 0.0
    %2591 = vmatprep.subr.mxu0 0.0
    %2592 = vmatpush1.msra.mxu0 0.0
    %2593 = vmatprep.subr.mxu0 0.0
    %2594 = vmatpush1.msra.mxu0 0.0
    %2595 = vmatprep.subr.mxu0 0.0
    %2596 = vmatpush1.msra.mxu0 0.0
    %2597 = vmatprep.subr.mxu0 0.0
    %2598 = vmatpush1.msra.mxu0 0.0
    %2599 = vmatprep.subr.mxu0 0.0
    %2600 = vmatpush1.msra.mxu0 0.0
    %2601 = vmatprep.subr.mxu0 0.0
    %2602 = vmatpush1.msra.mxu0 0.0
    %2603 = vmatprep.subr.mxu0 0.0
    %2604 = vmatpush1.msra.mxu0 0.0
    %2605 = vmatprep.subr.mxu0 0.0
    %2606 = vmatpush1.msra.mxu0 0.0
    %2607 = vmatprep.subr.mxu0 0.0
    %2608 = vmatpush1.msra.mxu0 0.0
    %2609 = vmatprep.subr.mxu0 0.0
    %2610 = vmatpush1.msra.mxu0 0.0
    %2611 = vmatprep.subr.mxu0 0.0
    %2612 = vmatpush1.msra.mxu0 0.0
    %2613 = vmatprep.subr.mxu0 0.0
    %2614 = vmatpush1.msra.mxu0 0.0
    %2615 = vmatprep.subr.mxu0 0.0
    %2616 = vmatpush1.msra.mxu0 0.0
    %2617 = vmatprep.subr.mxu0 0.0
    %2618 = vmatpush1.msra.mxu0 0.0
    %2619 = vmatprep.mubr.f32.mxu0 0.0
    %2620 = vmatmul.mubr.f32.gmra.mrb[0].mxu0 %v2457
    %v2621 = vpop.f32.mrb[0].mxu0
    %v2622 = vadd.f32 0.0, %v2621
    %v2623 = vpop.f32.mrb[0].mxu0
    %v2624 = vadd.f32 0.0, %v2623
    %2625 = vdwg.mxu0
    %2626 = vmatprep.subr.mxu0 %v2462
    %2627 = vmatpush1.msra.mxu0 %v2461
    %2628 = vmatprep.subr.mxu0 %v2468
    %2629 = vmatpush1.msra.mxu0 %v2467
    %2630 = vmatprep.subr.mxu0 %v2474
    %2631 = vmatpush1.msra.mxu0 %v2473
    %2632 = vmatprep.subr.mxu0 %v2480
    %2633 = vmatpush1.msra.mxu0 %v2479
    %2634 = vmatprep.subr.mxu0 %v2486
    %2635 = vmatpush1.msra.mxu0 %v2485
    %2636 = vmatprep.subr.mxu0 %v2492
    %2637 = vmatpush1.msra.mxu0 %v2491
    %2638 = vmatprep.subr.mxu0 %v2498
    %2639 = vmatpush1.msra.mxu0 %v2497
    %2640 = vmatprep.subr.mxu0 %v2504
    %2641 = vmatpush1.msra.mxu0 %v2503
    %2642 = vmatprep.subr.mxu0 %v2510
    %2643 = vmatpush1.msra.mxu0 %v2509
    %2644 = vmatprep.subr.mxu0 %v2516
    %2645 = vmatpush1.msra.mxu0 %v2515
    %2646 = vmatprep.subr.mxu0 %v2522
    %2647 = vmatpush1.msra.mxu0 %v2521
    %2648 = vmatprep.subr.mxu0 %v2528
    %2649 = vmatpush1.msra.mxu0 %v2527
    %2650 = vmatprep.subr.mxu0 %v2534
    %2651 = vmatpush1.msra.mxu0 %v2533
    %2652 = vmatprep.subr.mxu0 %v2540
    %2653 = vmatpush1.msra.mxu0 %v2539
    %2654 = vmatprep.subr.mxu0 %v2546
    %2655 = vmatpush1.msra.mxu0 %v2545
    %2656 = vmatprep.subr.mxu0 %v2552
    %2657 = vmatpush1.msra.mxu0 %v2551
    %2658 = vmatprep.subr.mxu0 0.0
    %2659 = vmatpush1.msra.mxu0 0.0
    %2660 = vmatprep.subr.mxu0 0.0
    %2661 = vmatpush1.msra.mxu0 0.0
    %2662 = vmatprep.subr.mxu0 0.0
    %2663 = vmatpush1.msra.mxu0 0.0
    %2664 = vmatprep.subr.mxu0 0.0
    %2665 = vmatpush1.msra.mxu0 0.0
    %2666 = vmatprep.subr.mxu0 0.0
    %2667 = vmatpush1.msra.mxu0 0.0
    %2668 = vmatprep.subr.mxu0 0.0
    %2669 = vmatpush1.msra.mxu0 0.0
    %2670 = vmatprep.subr.mxu0 0.0
    %2671 = vmatpush1.msra.mxu0 0.0
    %2672 = vmatprep.subr.mxu0 0.0
    %2673 = vmatpush1.msra.mxu0 0.0
    %2674 = vmatprep.subr.mxu0 0.0
    %2675 = vmatpush1.msra.mxu0 0.0
    %2676 = vmatprep.subr.mxu0 0.0
    %2677 = vmatpush1.msra.mxu0 0.0
    %2678 = vmatprep.subr.mxu0 0.0
    %2679 = vmatpush1.msra.mxu0 0.0
    %2680 = vmatprep.subr.mxu0 0.0
    %2681 = vmatpush1.msra.mxu0 0.0
    %2682 = vmatprep.subr.mxu0 0.0
    %2683 = vmatpush1.msra.mxu0 0.0
    %2684 = vmatprep.subr.mxu0 0.0
    %2685 = vmatpush1.msra.mxu0 0.0
    %2686 = vmatprep.subr.mxu0 0.0
    %2687 = vmatpush1.msra.mxu0 0.0
    %2688 = vmatprep.subr.mxu0 0.0
    %2689 = vmatpush1.msra.mxu0 0.0
    %2690 = vmatprep.mubr.f32.mxu0 0.0
    %2691 = vmatmul.mubr.f32.gmra.mrb[0].mxu0 %v2457
    %v2692 = vpop.f32.mrb[0].mxu0
    %v2693 = vadd.f32 0.0, %v2692
    %v2694 = vpop.f32.mrb[0].mxu0
    %v2695 = vadd.f32 0.0, %v2694
    %2696 = vdwg.mxu0
    %2697 = vmatprep.subr.mxu0 %v2464
    %2698 = vmatpush1.msra.mxu0 %v2463
    %2699 = vmatprep.subr.mxu0 %v2470
    %2700 = vmatpush1.msra.mxu0 %v2469
    %2701 = vmatprep.subr.mxu0 %v2476
    %2702 = vmatpush1.msra.mxu0 %v2475
    %2703 = vmatprep.subr.mxu0 %v2482
    %2704 = vmatpush1.msra.mxu0 %v2481
    %2705 = vmatprep.subr.mxu0 %v2488
    %2706 = vmatpush1.msra.mxu0 %v2487
    %2707 = vmatprep.subr.mxu0 %v2494
    %2708 = vmatpush1.msra.mxu0 %v2493
    %2709 = vmatprep.subr.mxu0 %v2500
    %2710 = vmatpush1.msra.mxu0 %v2499
    %2711 = vmatprep.subr.mxu0 %v2506
    %2712 = vmatpush1.msra.mxu0 %v2505
    %2713 = vmatprep.subr.mxu0 %v2512
    %2714 = vmatpush1.msra.mxu0 %v2511
    %2715 = vmatprep.subr.mxu0 %v2518
    %2716 = vmatpush1.msra.mxu0 %v2517
    %2717 = vmatprep.subr.mxu0 %v2524
    %2718 = vmatpush1.msra.mxu0 %v2523
    %2719 = vmatprep.subr.mxu0 %v2530
    %2720 = vmatpush1.msra.mxu0 %v2529
    %2721 = vmatprep.subr.mxu0 %v2536
    %2722 = vmatpush1.msra.mxu0 %v2535
    %2723 = vmatprep.subr.mxu0 %v2542
    %2724 = vmatpush1.msra.mxu0 %v2541
    %2725 = vmatprep.subr.mxu0 %v2548
    %2726 = vmatpush1.msra.mxu0 %v2547
    %2727 = vmatprep.subr.mxu0 %v2554
    %2728 = vmatpush1.msra.mxu0 %v2553
    %2729 = vmatprep.subr.mxu0 0.0
    %2730 = vmatpush1.msra.mxu0 0.0
    %2731 = vmatprep.subr.mxu0 0.0
    %2732 = vmatpush1.msra.mxu0 0.0
    %2733 = vmatprep.subr.mxu0 0.0
    %2734 = vmatpush1.msra.mxu0 0.0
    %2735 = vmatprep.subr.mxu0 0.0
    %2736 = vmatpush1.msra.mxu0 0.0
    %2737 = vmatprep.subr.mxu0 0.0
    %2738 = vmatpush1.msra.mxu0 0.0
    %2739 = vmatprep.subr.mxu0 0.0
    %2740 = vmatpush1.msra.mxu0 0.0
    %2741 = vmatprep.subr.mxu0 0.0
    %2742 = vmatpush1.msra.mxu0 0.0
    %2743 = vmatprep.subr.mxu0 0.0
    %2744 = vmatpush1.msra.mxu0 0.0
    %2745 = vmatprep.subr.mxu0 0.0
    %2746 = vmatpush1.msra.mxu0 0.0
    %2747 = vmatprep.subr.mxu0 0.0
    %2748 = vmatpush1.msra.mxu0 0.0
    %2749 = vmatprep.subr.mxu0 0.0
    %2750 = vmatpush1.msra.mxu0 0.0
    %2751 = vmatprep.subr.mxu0 0.0
    %2752 = vmatpush1.msra.mxu0 0.0
    %2753 = vmatprep.subr.mxu0 0.0
    %2754 = vmatpush1.msra.mxu0 0.0
    %2755 = vmatprep.subr.mxu0 0.0
    %2756 = vmatpush1.msra.mxu0 0.0
    %2757 = vmatprep.subr.mxu0 0.0
    %2758 = vmatpush1.msra.mxu0 0.0
    %2759 = vmatprep.subr.mxu0 0.0
    %2760 = vmatpush1.msra.mxu0 0.0
    %2761 = vmatprep.mubr.f32.mxu0 0.0
    %2762 = vmatmul.mubr.f32.gmra.mrb[0].mxu0 %v2457
    %v2763 = vpop.f32.mrb[0].mxu0
    %v2764 = vadd.f32 0.0, %v2763
    %v2765 = vpop.f32.mrb[0].mxu0
    %v2766 = vadd.f32 0.0, %v2765
    %2767 = vdwg.mxu0
    %v2768 = vadd.f32 %v2695, %v89
    %v2769 = vadd.f32 %v2764, %v93
    %v2770 = vadd.f32 %v2766, %v97
    %v2771 = vadd.f32 %v2768, %v2622
    %v2772 = vxor.u32 %v2771, 2147483648
    %v2773 = vmul.f32 %v2772, 1.442695
    %v2774 = vpow.pop %v2773
    %v2775 = vadd.f32 %v2774, 1.0
    %v2776 = vrcp.pop %v2775
    %v2777 = vmul.f32 1.0, %v2776
    %v2778 = vadd.f32 %v2769, %v2624
    %v2779 = vxor.u32 %v2778, 2147483648
    %v2780 = vmul.f32 %v2779, 1.442695
    %v2781 = vpow.pop %v2780
    %v2782 = vadd.f32 %v2781, 1.0
    %v2783 = vrcp.pop %v2782
    %v2784 = vmul.f32 1.0, %v2783
    %v2785 = vadd.f32 %v2693, %v82
    %v2786 = vmul.f32 %v2777, %v2785
    %v2787 = vadd.f32 %v2770, %v2786
    %v2788 = vtanh.pop %v2787
    %v2789 = vsub.f32 %v2457, %v2788
    %v2790 = vmul.f32 %v2784, %v2789
    %v2791 = vadd.f32 %v2788, %v2790
    %2792 = vst [vmem:[#allocation2 + $0x10] sm:$0xff] %v2791
    %v2793 = vld [vmem:[#allocation6] sm:$0xff]
    %v2794 = vld [vmem:[#allocation6 + $0x8] sm:$0xff]
    %v2795 = vld [vmem:[#allocation6 + $0x10] sm:$0xff]
    %v2796 = vld [vmem:[#allocation6 + $0x18] sm:$0xff]
    %v2797 = vld [vmem:[#allocation6 + $0x20] sm:$0xff]
    %v2798 = vld [vmem:[#allocation6 + $0x28] sm:$0xff]
    %v2799 = vld [vmem:[#allocation6 + $0x30] sm:$0xff]
    %v2800 = vld [vmem:[#allocation6 + $0x38] sm:$0xff]
    %v2801 = vld [vmem:[#allocation6 + $0x40] sm:$0xff]
    %v2802 = vld [vmem:[#allocation6 + $0x48] sm:$0xff]
    %v2803 = vld [vmem:[#allocation6 + $0x50] sm:$0xff]
    %v2804 = vld [vmem:[#allocation6 + $0x58] sm:$0xff]
    %v2805 = vld [vmem:[#allocation6 + $0x60] sm:$0xff]
    %v2806 = vld [vmem:[#allocation6 + $0x68] sm:$0xff]
    %v2807 = vld [vmem:[#allocation6 + $0x70] sm:$0xff]
    %v2808 = vld [vmem:[#allocation6 + $0x78] sm:$0xff]
    %v2809 = vld [vmem:[#allocation6 + $0x80] sm:$0xff]
    %v2810 = vld [vmem:[#allocation6 + $0x88] sm:$0xff]
    %v2811 = vld [vmem:[#allocation6 + $0x90] sm:$0xff]
    %v2812 = vld [vmem:[#allocation6 + $0x98] sm:$0xff]
    %v2813 = vld [vmem:[#allocation6 + $0xa0] sm:$0xff]
    %v2814 = vld [vmem:[#allocation6 + $0xa8] sm:$0xff]
    %v2815 = vld [vmem:[#allocation6 + $0xb0] sm:$0xff]
    %v2816 = vld [vmem:[#allocation6 + $0xb8] sm:$0xff]
    %v2817 = vld [vmem:[#allocation6 + $0xc0] sm:$0xff]
    %v2818 = vld [vmem:[#allocation6 + $0xc8] sm:$0xff]
    %v2819 = vld [vmem:[#allocation6 + $0xd0] sm:$0xff]
    %v2820 = vld [vmem:[#allocation6 + $0xd8] sm:$0xff]
    %v2821 = vld [vmem:[#allocation6 + $0xe0] sm:$0xff]
    %v2822 = vld [vmem:[#allocation6 + $0xe8] sm:$0xff]
    %v2823 = vld [vmem:[#allocation6 + $0xf0] sm:$0xff]
    %v2824 = vld [vmem:[#allocation6 + $0xf8] sm:$0xff]
    %v2825 = vld [vmem:[#allocation6 + $0x100] sm:$0xff]
    %v2826 = vld [vmem:[#allocation6 + $0x108] sm:$0xff]
    %v2827 = vld [vmem:[#allocation6 + $0x110] sm:$0xff]
    %v2828 = vld [vmem:[#allocation6 + $0x118] sm:$0xff]
    %v2829 = vld [vmem:[#allocation6 + $0x120] sm:$0xff]
    %v2830 = vld [vmem:[#allocation6 + $0x128] sm:$0xff]
    %v2831 = vld [vmem:[#allocation6 + $0x130] sm:$0xff]
    %v2832 = vld [vmem:[#allocation6 + $0x138] sm:$0xff]
    %v2833 = vld [vmem:[#allocation6 + $0x140] sm:$0xff]
    %v2834 = vld [vmem:[#allocation6 + $0x148] sm:$0xff]
    %v2835 = vld [vmem:[#allocation6 + $0x150] sm:$0xff]
    %v2836 = vld [vmem:[#allocation6 + $0x158] sm:$0xff]
    %v2837 = vld [vmem:[#allocation6 + $0x160] sm:$0xff]
    %v2838 = vld [vmem:[#allocation6 + $0x168] sm:$0xff]
    %v2839 = vld [vmem:[#allocation6 + $0x170] sm:$0xff]
    %v2840 = vld [vmem:[#allocation6 + $0x178] sm:$0xff]
    %v2841 = vld [vmem:[#allocation6 + $0x180] sm:$0xff]
    %v2842 = vld [vmem:[#allocation6 + $0x188] sm:$0xff]
    %v2843 = vld [vmem:[#allocation6 + $0x190] sm:$0xff]
    %v2844 = vld [vmem:[#allocation6 + $0x198] sm:$0xff]
    %v2845 = vld [vmem:[#allocation6 + $0x1a0] sm:$0xff]
    %v2846 = vld [vmem:[#allocation6 + $0x1a8] sm:$0xff]
    %v2847 = vld [vmem:[#allocation6 + $0x1b0] sm:$0xff]
    %v2848 = vld [vmem:[#allocation6 + $0x1b8] sm:$0xff]
    %v2849 = vld [vmem:[#allocation6 + $0x1c0] sm:$0xff]
    %v2850 = vld [vmem:[#allocation6 + $0x1c8] sm:$0xff]
    %v2851 = vld [vmem:[#allocation6 + $0x1d0] sm:$0xff]
    %v2852 = vld [vmem:[#allocation6 + $0x1d8] sm:$0xff]
    %v2853 = vld [vmem:[#allocation6 + $0x1e0] sm:$0xff]
    %v2854 = vld [vmem:[#allocation6 + $0x1e8] sm:$0xff]
    %v2855 = vld [vmem:[#allocation6 + $0x1f0] sm:$0xff]
    %v2856 = vld [vmem:[#allocation6 + $0x1f8] sm:$0xff]
    %v2857 = vld [vmem:[#allocation6 + $0x200] sm:$0xff]
    %v2858 = vld [vmem:[#allocation6 + $0x208] sm:$0xff]
    %v2859 = vld [vmem:[#allocation6 + $0x210] sm:$0xff]
    %v2860 = vld [vmem:[#allocation6 + $0x218] sm:$0xff]
    %v2861 = vld [vmem:[#allocation6 + $0x220] sm:$0xff]
    %v2862 = vld [vmem:[#allocation6 + $0x228] sm:$0xff]
    %v2863 = vld [vmem:[#allocation6 + $0x230] sm:$0xff]
    %v2864 = vld [vmem:[#allocation6 + $0x238] sm:$0xff]
    %v2865 = vld [vmem:[#allocation6 + $0x240] sm:$0xff]
    %v2866 = vld [vmem:[#allocation6 + $0x248] sm:$0xff]
    %v2867 = vld [vmem:[#allocation6 + $0x250] sm:$0xff]
    %v2868 = vld [vmem:[#allocation6 + $0x258] sm:$0xff]
    %v2869 = vld [vmem:[#allocation6 + $0x260] sm:$0xff]
    %v2870 = vld [vmem:[#allocation6 + $0x268] sm:$0xff]
    %v2871 = vld [vmem:[#allocation6 + $0x270] sm:$0xff]
    %v2872 = vld [vmem:[#allocation6 + $0x278] sm:$0xff]
    %v2873 = vld [vmem:[#allocation6 + $0x280] sm:$0xff]
    %v2874 = vld [vmem:[#allocation6 + $0x288] sm:$0xff]
    %v2875 = vld [vmem:[#allocation6 + $0x290] sm:$0xff]
    %v2876 = vld [vmem:[#allocation6 + $0x298] sm:$0xff]
    %v2877 = vld [vmem:[#allocation6 + $0x2a0] sm:$0xff]
    %v2878 = vld [vmem:[#allocation6 + $0x2a8] sm:$0xff]
    %v2879 = vld [vmem:[#allocation6 + $0x2b0] sm:$0xff]
    %v2880 = vld [vmem:[#allocation6 + $0x2b8] sm:$0xff]
    %v2881 = vld [vmem:[#allocation6 + $0x2c0] sm:$0xff]
    %v2882 = vld [vmem:[#allocation6 + $0x2c8] sm:$0xff]
    %v2883 = vld [vmem:[#allocation6 + $0x2d0] sm:$0xff]
    %v2884 = vld [vmem:[#allocation6 + $0x2d8] sm:$0xff]
    %v2885 = vld [vmem:[#allocation6 + $0x2e0] sm:$0xff]
    %v2886 = vld [vmem:[#allocation6 + $0x2e8] sm:$0xff]
    %v2887 = vld [vmem:[#allocation6 + $0x2f0] sm:$0xff]
    %v2888 = vld [vmem:[#allocation6 + $0x2f8] sm:$0xff]
    %2889 = vmatprep.subr.mxu0 %v2794
    %2890 = vmatpush1.msra.mxu0 %v2793
    %2891 = vmatprep.subr.mxu0 %v2800
    %2892 = vmatpush1.msra.mxu0 %v2799
    %2893 = vmatprep.subr.mxu0 %v2806
    %2894 = vmatpush1.msra.mxu0 %v2805
    %2895 = vmatprep.subr.mxu0 %v2812
    %2896 = vmatpush1.msra.mxu0 %v2811
    %2897 = vmatprep.subr.mxu0 %v2818
    %2898 = vmatpush1.msra.mxu0 %v2817
    %2899 = vmatprep.subr.mxu0 %v2824
    %2900 = vmatpush1.msra.mxu0 %v2823
    %2901 = vmatprep.subr.mxu0 %v2830
    %2902 = vmatpush1.msra.mxu0 %v2829
    %2903 = vmatprep.subr.mxu0 %v2836
    %2904 = vmatpush1.msra.mxu0 %v2835
    %2905 = vmatprep.subr.mxu0 %v2842
    %2906 = vmatpush1.msra.mxu0 %v2841
    %2907 = vmatprep.subr.mxu0 %v2848
    %2908 = vmatpush1.msra.mxu0 %v2847
    %2909 = vmatprep.subr.mxu0 %v2854
    %2910 = vmatpush1.msra.mxu0 %v2853
    %2911 = vmatprep.subr.mxu0 %v2860
    %2912 = vmatpush1.msra.mxu0 %v2859
    %2913 = vmatprep.subr.mxu0 %v2866
    %2914 = vmatpush1.msra.mxu0 %v2865
    %2915 = vmatprep.subr.mxu0 %v2872
    %2916 = vmatpush1.msra.mxu0 %v2871
    %2917 = vmatprep.subr.mxu0 %v2878
    %2918 = vmatpush1.msra.mxu0 %v2877
    %2919 = vmatprep.subr.mxu0 %v2884
    %2920 = vmatpush1.msra.mxu0 %v2883
    %2921 = vmatprep.subr.mxu0 0.0
    %2922 = vmatpush1.msra.mxu0 0.0
    %2923 = vmatprep.subr.mxu0 0.0
    %2924 = vmatpush1.msra.mxu0 0.0
    %2925 = vmatprep.subr.mxu0 0.0
    %2926 = vmatpush1.msra.mxu0 0.0
    %2927 = vmatprep.subr.mxu0 0.0
    %2928 = vmatpush1.msra.mxu0 0.0
    %2929 = vmatprep.subr.mxu0 0.0
    %2930 = vmatpush1.msra.mxu0 0.0
    %2931 = vmatprep.subr.mxu0 0.0
    %2932 = vmatpush1.msra.mxu0 0.0
    %2933 = vmatprep.subr.mxu0 0.0
    %2934 = vmatpush1.msra.mxu0 0.0
    %2935 = vmatprep.subr.mxu0 0.0
    %2936 = vmatpush1.msra.mxu0 0.0
    %2937 = vmatprep.subr.mxu0 0.0
    %2938 = vmatpush1.msra.mxu0 0.0
    %2939 = vmatprep.subr.mxu0 0.0
    %2940 = vmatpush1.msra.mxu0 0.0
    %2941 = vmatprep.subr.mxu0 0.0
    %2942 = vmatpush1.msra.mxu0 0.0
    %2943 = vmatprep.subr.mxu0 0.0
    %2944 = vmatpush1.msra.mxu0 0.0
    %2945 = vmatprep.subr.mxu0 0.0
    %2946 = vmatpush1.msra.mxu0 0.0
    %2947 = vmatprep.subr.mxu0 0.0
    %2948 = vmatpush1.msra.mxu0 0.0
    %2949 = vmatprep.subr.mxu0 0.0
    %2950 = vmatpush1.msra.mxu0 0.0
    %2951 = vmatprep.subr.mxu0 0.0
    %2952 = vmatpush1.msra.mxu0 0.0
    %2953 = vmatprep.mubr.f32.mxu0 0.0
    %2954 = vmatmul.mubr.f32.gmra.mrb[0].mxu0 %v2791
    %v2955 = vpop.f32.mrb[0].mxu0
    %v2956 = vadd.f32 0.0, %v2955
    %v2957 = vpop.f32.mrb[0].mxu0
    %v2958 = vadd.f32 0.0, %v2957
    %2959 = vdwg.mxu0
    %2960 = vmatprep.subr.mxu0 %v2796
    %2961 = vmatpush1.msra.mxu0 %v2795
    %2962 = vmatprep.subr.mxu0 %v2802
    %2963 = vmatpush1.msra.mxu0 %v2801
    %2964 = vmatprep.subr.mxu0 %v2808
    %2965 = vmatpush1.msra.mxu0 %v2807
    %2966 = vmatprep.subr.mxu0 %v2814
    %2967 = vmatpush1.msra.mxu0 %v2813
    %2968 = vmatprep.subr.mxu0 %v2820
    %2969 = vmatpush1.msra.mxu0 %v2819
    %2970 = vmatprep.subr.mxu0 %v2826
    %2971 = vmatpush1.msra.mxu0 %v2825
    %2972 = vmatprep.subr.mxu0 %v2832
    %2973 = vmatpush1.msra.mxu0 %v2831
    %2974 = vmatprep.subr.mxu0 %v2838
    %2975 = vmatpush1.msra.mxu0 %v2837
    %2976 = vmatprep.subr.mxu0 %v2844
    %2977 = vmatpush1.msra.mxu0 %v2843
    %2978 = vmatprep.subr.mxu0 %v2850
    %2979 = vmatpush1.msra.mxu0 %v2849
    %2980 = vmatprep.subr.mxu0 %v2856
    %2981 = vmatpush1.msra.mxu0 %v2855
    %2982 = vmatprep.subr.mxu0 %v2862
    %2983 = vmatpush1.msra.mxu0 %v2861
    %2984 = vmatprep.subr.mxu0 %v2868
    %2985 = vmatpush1.msra.mxu0 %v2867
    %2986 = vmatprep.subr.mxu0 %v2874
    %2987 = vmatpush1.msra.mxu0 %v2873
    %2988 = vmatprep.subr.mxu0 %v2880
    %2989 = vmatpush1.msra.mxu0 %v2879
    %2990 = vmatprep.subr.mxu0 %v2886
    %2991 = vmatpush1.msra.mxu0 %v2885
    %2992 = vmatprep.subr.mxu0 0.0
    %2993 = vmatpush1.msra.mxu0 0.0
    %2994 = vmatprep.subr.mxu0 0.0
    %2995 = vmatpush1.msra.mxu0 0.0
    %2996 = vmatprep.subr.mxu0 0.0
    %2997 = vmatpush1.msra.mxu0 0.0
    %2998 = vmatprep.subr.mxu0 0.0
    %2999 = vmatpush1.msra.mxu0 0.0
    %3000 = vmatprep.subr.mxu0 0.0
    %3001 = vmatpush1.msra.mxu0 0.0
    %3002 = vmatprep.subr.mxu0 0.0
    %3003 = vmatpush1.msra.mxu0 0.0
    %3004 = vmatprep.subr.mxu0 0.0
    %3005 = vmatpush1.msra.mxu0 0.0
    %3006 = vmatprep.subr.mxu0 0.0
    %3007 = vmatpush1.msra.mxu0 0.0
    %3008 = vmatprep.subr.mxu0 0.0
    %3009 = vmatpush1.msra.mxu0 0.0
    %3010 = vmatprep.subr.mxu0 0.0
    %3011 = vmatpush1.msra.mxu0 0.0
    %3012 = vmatprep.subr.mxu0 0.0
    %3013 = vmatpush1.msra.mxu0 0.0
    %3014 = vmatprep.subr.mxu0 0.0
    %3015 = vmatpush1.msra.mxu0 0.0
    %3016 = vmatprep.subr.mxu0 0.0
    %3017 = vmatpush1.msra.mxu0 0.0
    %3018 = vmatprep.subr.mxu0 0.0
    %3019 = vmatpush1.msra.mxu0 0.0
    %3020 = vmatprep.subr.mxu0 0.0
    %3021 = vmatpush1.msra.mxu0 0.0
    %3022 = vmatprep.subr.mxu0 0.0
    %3023 = vmatpush1.msra.mxu0 0.0
    %3024 = vmatprep.mubr.f32.mxu0 0.0
    %3025 = vmatmul.mubr.f32.gmra.mrb[0].mxu0 %v2791
    %v3026 = vpop.f32.mrb[0].mxu0
    %v3027 = vadd.f32 0.0, %v3026
    %v3028 = vpop.f32.mrb[0].mxu0
    %v3029 = vadd.f32 0.0, %v3028
    %3030 = vdwg.mxu0
    %3031 = vmatprep.subr.mxu0 %v2798
    %3032 = vmatpush1.msra.mxu0 %v2797
    %3033 = vmatprep.subr.mxu0 %v2804
    %3034 = vmatpush1.msra.mxu0 %v2803
    %3035 = vmatprep.subr.mxu0 %v2810
    %3036 = vmatpush1.msra.mxu0 %v2809
    %3037 = vmatprep.subr.mxu0 %v2816
    %3038 = vmatpush1.msra.mxu0 %v2815
    %3039 = vmatprep.subr.mxu0 %v2822
    %3040 = vmatpush1.msra.mxu0 %v2821
    %3041 = vmatprep.subr.mxu0 %v2828
    %3042 = vmatpush1.msra.mxu0 %v2827
    %3043 = vmatprep.subr.mxu0 %v2834
    %3044 = vmatpush1.msra.mxu0 %v2833
    %3045 = vmatprep.subr.mxu0 %v2840
    %3046 = vmatpush1.msra.mxu0 %v2839
    %3047 = vmatprep.subr.mxu0 %v2846
    %3048 = vmatpush1.msra.mxu0 %v2845
    %3049 = vmatprep.subr.mxu0 %v2852
    %3050 = vmatpush1.msra.mxu0 %v2851
    %3051 = vmatprep.subr.mxu0 %v2858
    %3052 = vmatpush1.msra.mxu0 %v2857
    %3053 = vmatprep.subr.mxu0 %v2864
    %3054 = vmatpush1.msra.mxu0 %v2863
    %3055 = vmatprep.subr.mxu0 %v2870
    %3056 = vmatpush1.msra.mxu0 %v2869
    %3057 = vmatprep.subr.mxu0 %v2876
    %3058 = vmatpush1.msra.mxu0 %v2875
    %3059 = vmatprep.subr.mxu0 %v2882
    %3060 = vmatpush1.msra.mxu0 %v2881
    %3061 = vmatprep.subr.mxu0 %v2888
    %3062 = vmatpush1.msra.mxu0 %v2887
    %3063 = vmatprep.subr.mxu0 0.0
    %3064 = vmatpush1.msra.mxu0 0.0
    %3065 = vmatprep.subr.mxu0 0.0
    %3066 = vmatpush1.msra.mxu0 0.0
    %3067 = vmatprep.subr.mxu0 0.0
    %3068 = vmatpush1.msra.mxu0 0.0
    %3069 = vmatprep.subr.mxu0 0.0
    %3070 = vmatpush1.msra.mxu0 0.0
    %3071 = vmatprep.subr.mxu0 0.0
    %3072 = vmatpush1.msra.mxu0 0.0
    %3073 = vmatprep.subr.mxu0 0.0
    %3074 = vmatpush1.msra.mxu0 0.0
    %3075 = vmatprep.subr.mxu0 0.0
    %3076 = vmatpush1.msra.mxu0 0.0
    %3077 = vmatprep.subr.mxu0 0.0
    %3078 = vmatpush1.msra.mxu0 0.0
    %3079 = vmatprep.subr.mxu0 0.0
    %3080 = vmatpush1.msra.mxu0 0.0
    %3081 = vmatprep.subr.mxu0 0.0
    %3082 = vmatpush1.msra.mxu0 0.0
    %3083 = vmatprep.subr.mxu0 0.0
    %3084 = vmatpush1.msra.mxu0 0.0
    %3085 = vmatprep.subr.mxu0 0.0
    %3086 = vmatpush1.msra.mxu0 0.0
    %3087 = vmatprep.subr.mxu0 0.0
    %3088 = vmatpush1.msra.mxu0 0.0
    %3089 = vmatprep.subr.mxu0 0.0
    %3090 = vmatpush1.msra.mxu0 0.0
    %3091 = vmatprep.subr.mxu0 0.0
    %3092 = vmatpush1.msra.mxu0 0.0
    %3093 = vmatprep.subr.mxu0 0.0
    %3094 = vmatpush1.msra.mxu0 0.0
    %3095 = vmatprep.mubr.f32.mxu0 0.0
    %3096 = vmatmul.mubr.f32.gmra.mrb[0].mxu0 %v2791
    %v3097 = vpop.f32.mrb[0].mxu0
    %v3098 = vadd.f32 0.0, %v3097
    %v3099 = vpop.f32.mrb[0].mxu0
    %v3100 = vadd.f32 0.0, %v3099
    %3101 = vdwg.mxu0
    %v3102 = vadd.f32 %v3029, %v89
    %v3103 = vadd.f32 %v3098, %v93
    %v3104 = vadd.f32 %v3100, %v97
    %v3105 = vadd.f32 %v3102, %v2956
    %v3106 = vxor.u32 %v3105, 2147483648
    %v3107 = vmul.f32 %v3106, 1.442695
    %v3108 = vpow.pop %v3107
    %v3109 = vadd.f32 %v3108, 1.0
    %v3110 = vrcp.pop %v3109
    %v3111 = vmul.f32 1.0, %v3110
    %v3112 = vadd.f32 %v3103, %v2958
    %v3113 = vxor.u32 %v3112, 2147483648
    %v3114 = vmul.f32 %v3113, 1.442695
    %v3115 = vpow.pop %v3114
    %v3116 = vadd.f32 %v3115, 1.0
    %v3117 = vrcp.pop %v3116
    %v3118 = vmul.f32 1.0, %v3117
    %v3119 = vadd.f32 %v3027, %v82
    %v3120 = vmul.f32 %v3111, %v3119
    %v3121 = vadd.f32 %v3104, %v3120
    %v3122 = vtanh.pop %v3121
    %v3123 = vsub.f32 %v2791, %v3122
    %v3124 = vmul.f32 %v3118, %v3123
    %v3125 = vadd.f32 %v3122, %v3124
    %3126 = vst [vmem:[#allocation2 + $0x18] sm:$0xff] %v3125
    %v3127 = vld [vmem:[#allocation6] sm:$0xff]
    %v3128 = vld [vmem:[#allocation6 + $0x8] sm:$0xff]
    %v3129 = vld [vmem:[#allocation6 + $0x10] sm:$0xff]
    %v3130 = vld [vmem:[#allocation6 + $0x18] sm:$0xff]
    %v3131 = vld [vmem:[#allocation6 + $0x20] sm:$0xff]
    %v3132 = vld [vmem:[#allocation6 + $0x28] sm:$0xff]
    %v3133 = vld [vmem:[#allocation6 + $0x30] sm:$0xff]
    %v3134 = vld [vmem:[#allocation6 + $0x38] sm:$0xff]
    %v3135 = vld [vmem:[#allocation6 + $0x40] sm:$0xff]
    %v3136 = vld [vmem:[#allocation6 + $0x48] sm:$0xff]
    %v3137 = vld [vmem:[#allocation6 + $0x50] sm:$0xff]
    %v3138 = vld [vmem:[#allocation6 + $0x58] sm:$0xff]
    %v3139 = vld [vmem:[#allocation6 + $0x60] sm:$0xff]
    %v3140 = vld [vmem:[#allocation6 + $0x68] sm:$0xff]
    %v3141 = vld [vmem:[#allocation6 + $0x70] sm:$0xff]
    %v3142 = vld [vmem:[#allocation6 + $0x78] sm:$0xff]
    %v3143 = vld [vmem:[#allocation6 + $0x80] sm:$0xff]
    %v3144 = vld [vmem:[#allocation6 + $0x88] sm:$0xff]
    %v3145 = vld [vmem:[#allocation6 + $0x90] sm:$0xff]
    %v3146 = vld [vmem:[#allocation6 + $0x98] sm:$0xff]
    %v3147 = vld [vmem:[#allocation6 + $0xa0] sm:$0xff]
    %v3148 = vld [vmem:[#allocation6 + $0xa8] sm:$0xff]
    %v3149 = vld [vmem:[#allocation6 + $0xb0] sm:$0xff]
    %v3150 = vld [vmem:[#allocation6 + $0xb8] sm:$0xff]
    %v3151 = vld [vmem:[#allocation6 + $0xc0] sm:$0xff]
    %v3152 = vld [vmem:[#allocation6 + $0xc8] sm:$0xff]
    %v3153 = vld [vmem:[#allocation6 + $0xd0] sm:$0xff]
    %v3154 = vld [vmem:[#allocation6 + $0xd8] sm:$0xff]
    %v3155 = vld [vmem:[#allocation6 + $0xe0] sm:$0xff]
    %v3156 = vld [vmem:[#allocation6 + $0xe8] sm:$0xff]
    %v3157 = vld [vmem:[#allocation6 + $0xf0] sm:$0xff]
    %v3158 = vld [vmem:[#allocation6 + $0xf8] sm:$0xff]
    %v3159 = vld [vmem:[#allocation6 + $0x100] sm:$0xff]
    %v3160 = vld [vmem:[#allocation6 + $0x108] sm:$0xff]
    %v3161 = vld [vmem:[#allocation6 + $0x110] sm:$0xff]
    %v3162 = vld [vmem:[#allocation6 + $0x118] sm:$0xff]
    %v3163 = vld [vmem:[#allocation6 + $0x120] sm:$0xff]
    %v3164 = vld [vmem:[#allocation6 + $0x128] sm:$0xff]
    %v3165 = vld [vmem:[#allocation6 + $0x130] sm:$0xff]
    %v3166 = vld [vmem:[#allocation6 + $0x138] sm:$0xff]
    %v3167 = vld [vmem:[#allocation6 + $0x140] sm:$0xff]
    %v3168 = vld [vmem:[#allocation6 + $0x148] sm:$0xff]
    %v3169 = vld [vmem:[#allocation6 + $0x150] sm:$0xff]
    %v3170 = vld [vmem:[#allocation6 + $0x158] sm:$0xff]
    %v3171 = vld [vmem:[#allocation6 + $0x160] sm:$0xff]
    %v3172 = vld [vmem:[#allocation6 + $0x168] sm:$0xff]
    %v3173 = vld [vmem:[#allocation6 + $0x170] sm:$0xff]
    %v3174 = vld [vmem:[#allocation6 + $0x178] sm:$0xff]
    %v3175 = vld [vmem:[#allocation6 + $0x180] sm:$0xff]
    %v3176 = vld [vmem:[#allocation6 + $0x188] sm:$0xff]
    %v3177 = vld [vmem:[#allocation6 + $0x190] sm:$0xff]
    %v3178 = vld [vmem:[#allocation6 + $0x198] sm:$0xff]
    %v3179 = vld [vmem:[#allocation6 + $0x1a0] sm:$0xff]
    %v3180 = vld [vmem:[#allocation6 + $0x1a8] sm:$0xff]
    %v3181 = vld [vmem:[#allocation6 + $0x1b0] sm:$0xff]
    %v3182 = vld [vmem:[#allocation6 + $0x1b8] sm:$0xff]
    %v3183 = vld [vmem:[#allocation6 + $0x1c0] sm:$0xff]
    %v3184 = vld [vmem:[#allocation6 + $0x1c8] sm:$0xff]
    %v3185 = vld [vmem:[#allocation6 + $0x1d0] sm:$0xff]
    %v3186 = vld [vmem:[#allocation6 + $0x1d8] sm:$0xff]
    %v3187 = vld [vmem:[#allocation6 + $0x1e0] sm:$0xff]
    %v3188 = vld [vmem:[#allocation6 + $0x1e8] sm:$0xff]
    %v3189 = vld [vmem:[#allocation6 + $0x1f0] sm:$0xff]
    %v3190 = vld [vmem:[#allocation6 + $0x1f8] sm:$0xff]
    %v3191 = vld [vmem:[#allocation6 + $0x200] sm:$0xff]
    %v3192 = vld [vmem:[#allocation6 + $0x208] sm:$0xff]
    %v3193 = vld [vmem:[#allocation6 + $0x210] sm:$0xff]
    %v3194 = vld [vmem:[#allocation6 + $0x218] sm:$0xff]
    %v3195 = vld [vmem:[#allocation6 + $0x220] sm:$0xff]
    %v3196 = vld [vmem:[#allocation6 + $0x228] sm:$0xff]
    %v3197 = vld [vmem:[#allocation6 + $0x230] sm:$0xff]
    %v3198 = vld [vmem:[#allocation6 + $0x238] sm:$0xff]
    %v3199 = vld [vmem:[#allocation6 + $0x240] sm:$0xff]
    %v3200 = vld [vmem:[#allocation6 + $0x248] sm:$0xff]
    %v3201 = vld [vmem:[#allocation6 + $0x250] sm:$0xff]
    %v3202 = vld [vmem:[#allocation6 + $0x258] sm:$0xff]
    %v3203 = vld [vmem:[#allocation6 + $0x260] sm:$0xff]
    %v3204 = vld [vmem:[#allocation6 + $0x268] sm:$0xff]
    %v3205 = vld [vmem:[#allocation6 + $0x270] sm:$0xff]
    %v3206 = vld [vmem:[#allocation6 + $0x278] sm:$0xff]
    %v3207 = vld [vmem:[#allocation6 + $0x280] sm:$0xff]
    %v3208 = vld [vmem:[#allocation6 + $0x288] sm:$0xff]
    %v3209 = vld [vmem:[#allocation6 + $0x290] sm:$0xff]
    %v3210 = vld [vmem:[#allocation6 + $0x298] sm:$0xff]
    %v3211 = vld [vmem:[#allocation6 + $0x2a0] sm:$0xff]
    %v3212 = vld [vmem:[#allocation6 + $0x2a8] sm:$0xff]
    %v3213 = vld [vmem:[#allocation6 + $0x2b0] sm:$0xff]
    %v3214 = vld [vmem:[#allocation6 + $0x2b8] sm:$0xff]
    %v3215 = vld [vmem:[#allocation6 + $0x2c0] sm:$0xff]
    %v3216 = vld [vmem:[#allocation6 + $0x2c8] sm:$0xff]
    %v3217 = vld [vmem:[#allocation6 + $0x2d0] sm:$0xff]
    %v3218 = vld [vmem:[#allocation6 + $0x2d8] sm:$0xff]
    %v3219 = vld [vmem:[#allocation6 + $0x2e0] sm:$0xff]
    %v3220 = vld [vmem:[#allocation6 + $0x2e8] sm:$0xff]
    %v3221 = vld [vmem:[#allocation6 + $0x2f0] sm:$0xff]
    %v3222 = vld [vmem:[#allocation6 + $0x2f8] sm:$0xff]
    %3223 = vmatprep.subr.mxu0 %v3128
    %3224 = vmatpush1.msra.mxu0 %v3127
    %3225 = vmatprep.subr.mxu0 %v3134
    %3226 = vmatpush1.msra.mxu0 %v3133
    %3227 = vmatprep.subr.mxu0 %v3140
    %3228 = vmatpush1.msra.mxu0 %v3139
    %3229 = vmatprep.subr.mxu0 %v3146
    %3230 = vmatpush1.msra.mxu0 %v3145
    %3231 = vmatprep.subr.mxu0 %v3152
    %3232 = vmatpush1.msra.mxu0 %v3151
    %3233 = vmatprep.subr.mxu0 %v3158
    %3234 = vmatpush1.msra.mxu0 %v3157
    %3235 = vmatprep.subr.mxu0 %v3164
    %3236 = vmatpush1.msra.mxu0 %v3163
    %3237 = vmatprep.subr.mxu0 %v3170
    %3238 = vmatpush1.msra.mxu0 %v3169
    %3239 = vmatprep.subr.mxu0 %v3176
    %3240 = vmatpush1.msra.mxu0 %v3175
    %3241 = vmatprep.subr.mxu0 %v3182
    %3242 = vmatpush1.msra.mxu0 %v3181
    %3243 = vmatprep.subr.mxu0 %v3188
    %3244 = vmatpush1.msra.mxu0 %v3187
    %3245 = vmatprep.subr.mxu0 %v3194
    %3246 = vmatpush1.msra.mxu0 %v3193
    %3247 = vmatprep.subr.mxu0 %v3200
    %3248 = vmatpush1.msra.mxu0 %v3199
    %3249 = vmatprep.subr.mxu0 %v3206
    %3250 = vmatpush1.msra.mxu0 %v3205
    %3251 = vmatprep.subr.mxu0 %v3212
    %3252 = vmatpush1.msra.mxu0 %v3211
    %3253 = vmatprep.subr.mxu0 %v3218
    %3254 = vmatpush1.msra.mxu0 %v3217
    %3255 = vmatprep.subr.mxu0 0.0
    %3256 = vmatpush1.msra.mxu0 0.0
    %3257 = vmatprep.subr.mxu0 0.0
    %3258 = vmatpush1.msra.mxu0 0.0
    %3259 = vmatprep.subr.mxu0 0.0
    %3260 = vmatpush1.msra.mxu0 0.0
    %3261 = vmatprep.subr.mxu0 0.0
    %3262 = vmatpush1.msra.mxu0 0.0
    %3263 = vmatprep.subr.mxu0 0.0
    %3264 = vmatpush1.msra.mxu0 0.0
    %3265 = vmatprep.subr.mxu0 0.0
    %3266 = vmatpush1.msra.mxu0 0.0
    %3267 = vmatprep.subr.mxu0 0.0
    %3268 = vmatpush1.msra.mxu0 0.0
    %3269 = vmatprep.subr.mxu0 0.0
    %3270 = vmatpush1.msra.mxu0 0.0
    %3271 = vmatprep.subr.mxu0 0.0
    %3272 = vmatpush1.msra.mxu0 0.0
    %3273 = vmatprep.subr.mxu0 0.0
    %3274 = vmatpush1.msra.mxu0 0.0
    %3275 = vmatprep.subr.mxu0 0.0
    %3276 = vmatpush1.msra.mxu0 0.0
    %3277 = vmatprep.subr.mxu0 0.0
    %3278 = vmatpush1.msra.mxu0 0.0
    %3279 = vmatprep.subr.mxu0 0.0
    %3280 = vmatpush1.msra.mxu0 0.0
    %3281 = vmatprep.subr.mxu0 0.0
    %3282 = vmatpush1.msra.mxu0 0.0
    %3283 = vmatprep.subr.mxu0 0.0
    %3284 = vmatpush1.msra.mxu0 0.0
    %3285 = vmatprep.subr.mxu0 0.0
    %3286 = vmatpush1.msra.mxu0 0.0
    %3287 = vmatprep.mubr.f32.mxu0 0.0
    %3288 = vmatmul.mubr.f32.gmra.mrb[0].mxu0 %v3125
    %v3289 = vpop.f32.mrb[0].mxu0
    %v3290 = vadd.f32 0.0, %v3289
    %v3291 = vpop.f32.mrb[0].mxu0
    %v3292 = vadd.f32 0.0, %v3291
    %3293 = vdwg.mxu0
    %3294 = vmatprep.subr.mxu0 %v3130
    %3295 = vmatpush1.msra.mxu0 %v3129
    %3296 = vmatprep.subr.mxu0 %v3136
    %3297 = vmatpush1.msra.mxu0 %v3135
    %3298 = vmatprep.subr.mxu0 %v3142
    %3299 = vmatpush1.msra.mxu0 %v3141
    %3300 = vmatprep.subr.mxu0 %v3148
    %3301 = vmatpush1.msra.mxu0 %v3147
    %3302 = vmatprep.subr.mxu0 %v3154
    %3303 = vmatpush1.msra.mxu0 %v3153
    %3304 = vmatprep.subr.mxu0 %v3160
    %3305 = vmatpush1.msra.mxu0 %v3159
    %3306 = vmatprep.subr.mxu0 %v3166
    %3307 = vmatpush1.msra.mxu0 %v3165
    %3308 = vmatprep.subr.mxu0 %v3172
    %3309 = vmatpush1.msra.mxu0 %v3171
    %3310 = vmatprep.subr.mxu0 %v3178
    %3311 = vmatpush1.msra.mxu0 %v3177
    %3312 = vmatprep.subr.mxu0 %v3184
    %3313 = vmatpush1.msra.mxu0 %v3183
    %3314 = vmatprep.subr.mxu0 %v3190
    %3315 = vmatpush1.msra.mxu0 %v3189
    %3316 = vmatprep.subr.mxu0 %v3196
    %3317 = vmatpush1.msra.mxu0 %v3195
    %3318 = vmatprep.subr.mxu0 %v3202
    %3319 = vmatpush1.msra.mxu0 %v3201
    %3320 = vmatprep.subr.mxu0 %v3208
    %3321 = vmatpush1.msra.mxu0 %v3207
    %3322 = vmatprep.subr.mxu0 %v3214
    %3323 = vmatpush1.msra.mxu0 %v3213
    %3324 = vmatprep.subr.mxu0 %v3220
    %3325 = vmatpush1.msra.mxu0 %v3219
    %3326 = vmatprep.subr.mxu0 0.0
    %3327 = vmatpush1.msra.mxu0 0.0
    %3328 = vmatprep.subr.mxu0 0.0
    %3329 = vmatpush1.msra.mxu0 0.0
    %3330 = vmatprep.subr.mxu0 0.0
    %3331 = vmatpush1.msra.mxu0 0.0
    %3332 = vmatprep.subr.mxu0 0.0
    %3333 = vmatpush1.msra.mxu0 0.0
    %3334 = vmatprep.subr.mxu0 0.0
    %3335 = vmatpush1.msra.mxu0 0.0
    %3336 = vmatprep.subr.mxu0 0.0
    %3337 = vmatpush1.msra.mxu0 0.0
    %3338 = vmatprep.subr.mxu0 0.0
    %3339 = vmatpush1.msra.mxu0 0.0
    %3340 = vmatprep.subr.mxu0 0.0
    %3341 = vmatpush1.msra.mxu0 0.0
    %3342 = vmatprep.subr.mxu0 0.0
    %3343 = vmatpush1.msra.mxu0 0.0
    %3344 = vmatprep.subr.mxu0 0.0
    %3345 = vmatpush1.msra.mxu0 0.0
    %3346 = vmatprep.subr.mxu0 0.0
    %3347 = vmatpush1.msra.mxu0 0.0
    %3348 = vmatprep.subr.mxu0 0.0
    %3349 = vmatpush1.msra.mxu0 0.0
    %3350 = vmatprep.subr.mxu0 0.0
    %3351 = vmatpush1.msra.mxu0 0.0
    %3352 = vmatprep.subr.mxu0 0.0
    %3353 = vmatpush1.msra.mxu0 0.0
    %3354 = vmatprep.subr.mxu0 0.0
    %3355 = vmatpush1.msra.mxu0 0.0
    %3356 = vmatprep.subr.mxu0 0.0
    %3357 = vmatpush1.msra.mxu0 0.0
    %3358 = vmatprep.mubr.f32.mxu0 0.0
    %3359 = vmatmul.mubr.f32.gmra.mrb[0].mxu0 %v3125
    %v3360 = vpop.f32.mrb[0].mxu0
    %v3361 = vadd.f32 0.0, %v3360
    %v3362 = vpop.f32.mrb[0].mxu0
    %v3363 = vadd.f32 0.0, %v3362
    %3364 = vdwg.mxu0
    %3365 = vmatprep.subr.mxu0 %v3132
    %3366 = vmatpush1.msra.mxu0 %v3131
    %3367 = vmatprep.subr.mxu0 %v3138
    %3368 = vmatpush1.msra.mxu0 %v3137
    %3369 = vmatprep.subr.mxu0 %v3144
    %3370 = vmatpush1.msra.mxu0 %v3143
    %3371 = vmatprep.subr.mxu0 %v3150
    %3372 = vmatpush1.msra.mxu0 %v3149
    %3373 = vmatprep.subr.mxu0 %v3156
    %3374 = vmatpush1.msra.mxu0 %v3155
    %3375 = vmatprep.subr.mxu0 %v3162
    %3376 = vmatpush1.msra.mxu0 %v3161
    %3377 = vmatprep.subr.mxu0 %v3168
    %3378 = vmatpush1.msra.mxu0 %v3167
    %3379 = vmatprep.subr.mxu0 %v3174
    %3380 = vmatpush1.msra.mxu0 %v3173
    %3381 = vmatprep.subr.mxu0 %v3180
    %3382 = vmatpush1.msra.mxu0 %v3179
    %3383 = vmatprep.subr.mxu0 %v3186
    %3384 = vmatpush1.msra.mxu0 %v3185
    %3385 = vmatprep.subr.mxu0 %v3192
    %3386 = vmatpush1.msra.mxu0 %v3191
    %3387 = vmatprep.subr.mxu0 %v3198
    %3388 = vmatpush1.msra.mxu0 %v3197
    %3389 = vmatprep.subr.mxu0 %v3204
    %3390 = vmatpush1.msra.mxu0 %v3203
    %3391 = vmatprep.subr.mxu0 %v3210
    %3392 = vmatpush1.msra.mxu0 %v3209
    %3393 = vmatprep.subr.mxu0 %v3216
    %3394 = vmatpush1.msra.mxu0 %v3215
    %3395 = vmatprep.subr.mxu0 %v3222
    %3396 = vmatpush1.msra.mxu0 %v3221
    %3397 = vmatprep.subr.mxu0 0.0
    %3398 = vmatpush1.msra.mxu0 0.0
    %3399 = vmatprep.subr.mxu0 0.0
    %3400 = vmatpush1.msra.mxu0 0.0
    %3401 = vmatprep.subr.mxu0 0.0
    %3402 = vmatpush1.msra.mxu0 0.0
    %3403 = vmatprep.subr.mxu0 0.0
    %3404 = vmatpush1.msra.mxu0 0.0
    %3405 = vmatprep.subr.mxu0 0.0
    %3406 = vmatpush1.msra.mxu0 0.0
    %3407 = vmatprep.subr.mxu0 0.0
    %3408 = vmatpush1.msra.mxu0 0.0
    %3409 = vmatprep.subr.mxu0 0.0
    %3410 = vmatpush1.msra.mxu0 0.0
    %3411 = vmatprep.subr.mxu0 0.0
    %3412 = vmatpush1.msra.mxu0 0.0
    %3413 = vmatprep.subr.mxu0 0.0
    %3414 = vmatpush1.msra.mxu0 0.0
    %3415 = vmatprep.subr.mxu0 0.0
    %3416 = vmatpush1.msra.mxu0 0.0
    %3417 = vmatprep.subr.mxu0 0.0
    %3418 = vmatpush1.msra.mxu0 0.0
    %3419 = vmatprep.subr.mxu0 0.0
    %3420 = vmatpush1.msra.mxu0 0.0
    %3421 = vmatprep.subr.mxu0 0.0
    %3422 = vmatpush1.msra.mxu0 0.0
    %3423 = vmatprep.subr.mxu0 0.0
    %3424 = vmatpush1.msra.mxu0 0.0
    %3425 = vmatprep.subr.mxu0 0.0
    %3426 = vmatpush1.msra.mxu0 0.0
    %3427 = vmatprep.subr.mxu0 0.0
    %3428 = vmatpush1.msra.mxu0 0.0
    %3429 = vmatprep.mubr.f32.mxu0 0.0
    %3430 = vmatmul.mubr.f32.gmra.mrb[0].mxu0 %v3125
    %v3431 = vpop.f32.mrb[0].mxu0
    %v3432 = vadd.f32 0.0, %v3431
    %v3433 = vpop.f32.mrb[0].mxu0
    %v3434 = vadd.f32 0.0, %v3433
    %3435 = vdwg.mxu0
    %v3436 = vadd.f32 %v3363, %v89
    %v3437 = vadd.f32 %v3432, %v93
    %v3438 = vadd.f32 %v3434, %v97
    %v3439 = vadd.f32 %v3436, %v3290
    %v3440 = vxor.u32 %v3439, 2147483648
    %v3441 = vmul.f32 %v3440, 1.442695
    %v3442 = vpow.pop %v3441
    %v3443 = vadd.f32 %v3442, 1.0
    %v3444 = vrcp.pop %v3443
    %v3445 = vmul.f32 1.0, %v3444
    %v3446 = vadd.f32 %v3437, %v3292
    %v3447 = vxor.u32 %v3446, 2147483648
    %v3448 = vmul.f32 %v3447, 1.442695
    %v3449 = vpow.pop %v3448
    %v3450 = vadd.f32 %v3449, 1.0
    %v3451 = vrcp.pop %v3450
    %v3452 = vmul.f32 1.0, %v3451
    %v3453 = vadd.f32 %v3361, %v82
    %v3454 = vmul.f32 %v3445, %v3453
    %v3455 = vadd.f32 %v3438, %v3454
    %v3456 = vtanh.pop %v3455
    %v3457 = vsub.f32 %v3125, %v3456
    %v3458 = vmul.f32 %v3452, %v3457
    %v3459 = vadd.f32 %v3456, %v3458
    %3460 = vst [vmem:[#allocation2 + $0x20] sm:$0xff] %v3459
    %v3461 = vld [vmem:[#allocation6] sm:$0xff]
    %v3462 = vld [vmem:[#allocation6 + $0x8] sm:$0xff]
    %v3463 = vld [vmem:[#allocation6 + $0x10] sm:$0xff]
    %v3464 = vld [vmem:[#allocation6 + $0x18] sm:$0xff]
    %v3465 = vld [vmem:[#allocation6 + $0x20] sm:$0xff]
    %v3466 = vld [vmem:[#allocation6 + $0x28] sm:$0xff]
    %v3467 = vld [vmem:[#allocation6 + $0x30] sm:$0xff]
    %v3468 = vld [vmem:[#allocation6 + $0x38] sm:$0xff]
    %v3469 = vld [vmem:[#allocation6 + $0x40] sm:$0xff]
    %v3470 = vld [vmem:[#allocation6 + $0x48] sm:$0xff]
    %v3471 = vld [vmem:[#allocation6 + $0x50] sm:$0xff]
    %v3472 = vld [vmem:[#allocation6 + $0x58] sm:$0xff]
    %v3473 = vld [vmem:[#allocation6 + $0x60] sm:$0xff]
    %v3474 = vld [vmem:[#allocation6 + $0x68] sm:$0xff]
    %v3475 = vld [vmem:[#allocation6 + $0x70] sm:$0xff]
    %v3476 = vld [vmem:[#allocation6 + $0x78] sm:$0xff]
    %v3477 = vld [vmem:[#allocation6 + $0x80] sm:$0xff]
    %v3478 = vld [vmem:[#allocation6 + $0x88] sm:$0xff]
    %v3479 = vld [vmem:[#allocation6 + $0x90] sm:$0xff]
    %v3480 = vld [vmem:[#allocation6 + $0x98] sm:$0xff]
    %v3481 = vld [vmem:[#allocation6 + $0xa0] sm:$0xff]
    %v3482 = vld [vmem:[#allocation6 + $0xa8] sm:$0xff]
    %v3483 = vld [vmem:[#allocation6 + $0xb0] sm:$0xff]
    %v3484 = vld [vmem:[#allocation6 + $0xb8] sm:$0xff]
    %v3485 = vld [vmem:[#allocation6 + $0xc0] sm:$0xff]
    %v3486 = vld [vmem:[#allocation6 + $0xc8] sm:$0xff]
    %v3487 = vld [vmem:[#allocation6 + $0xd0] sm:$0xff]
    %v3488 = vld [vmem:[#allocation6 + $0xd8] sm:$0xff]
    %v3489 = vld [vmem:[#allocation6 + $0xe0] sm:$0xff]
    %v3490 = vld [vmem:[#allocation6 + $0xe8] sm:$0xff]
    %v3491 = vld [vmem:[#allocation6 + $0xf0] sm:$0xff]
    %v3492 = vld [vmem:[#allocation6 + $0xf8] sm:$0xff]
    %v3493 = vld [vmem:[#allocation6 + $0x100] sm:$0xff]
    %v3494 = vld [vmem:[#allocation6 + $0x108] sm:$0xff]
    %v3495 = vld [vmem:[#allocation6 + $0x110] sm:$0xff]
    %v3496 = vld [vmem:[#allocation6 + $0x118] sm:$0xff]
    %v3497 = vld [vmem:[#allocation6 + $0x120] sm:$0xff]
    %v3498 = vld [vmem:[#allocation6 + $0x128] sm:$0xff]
    %v3499 = vld [vmem:[#allocation6 + $0x130] sm:$0xff]
    %v3500 = vld [vmem:[#allocation6 + $0x138] sm:$0xff]
    %v3501 = vld [vmem:[#allocation6 + $0x140] sm:$0xff]
    %v3502 = vld [vmem:[#allocation6 + $0x148] sm:$0xff]
    %v3503 = vld [vmem:[#allocation6 + $0x150] sm:$0xff]
    %v3504 = vld [vmem:[#allocation6 + $0x158] sm:$0xff]
    %v3505 = vld [vmem:[#allocation6 + $0x160] sm:$0xff]
    %v3506 = vld [vmem:[#allocation6 + $0x168] sm:$0xff]
    %v3507 = vld [vmem:[#allocation6 + $0x170] sm:$0xff]
    %v3508 = vld [vmem:[#allocation6 + $0x178] sm:$0xff]
    %v3509 = vld [vmem:[#allocation6 + $0x180] sm:$0xff]
    %v3510 = vld [vmem:[#allocation6 + $0x188] sm:$0xff]
    %v3511 = vld [vmem:[#allocation6 + $0x190] sm:$0xff]
    %v3512 = vld [vmem:[#allocation6 + $0x198] sm:$0xff]
    %v3513 = vld [vmem:[#allocation6 + $0x1a0] sm:$0xff]
    %v3514 = vld [vmem:[#allocation6 + $0x1a8] sm:$0xff]
    %v3515 = vld [vmem:[#allocation6 + $0x1b0] sm:$0xff]
    %v3516 = vld [vmem:[#allocation6 + $0x1b8] sm:$0xff]
    %v3517 = vld [vmem:[#allocation6 + $0x1c0] sm:$0xff]
    %v3518 = vld [vmem:[#allocation6 + $0x1c8] sm:$0xff]
    %v3519 = vld [vmem:[#allocation6 + $0x1d0] sm:$0xff]
    %v3520 = vld [vmem:[#allocation6 + $0x1d8] sm:$0xff]
    %v3521 = vld [vmem:[#allocation6 + $0x1e0] sm:$0xff]
    %v3522 = vld [vmem:[#allocation6 + $0x1e8] sm:$0xff]
    %v3523 = vld [vmem:[#allocation6 + $0x1f0] sm:$0xff]
    %v3524 = vld [vmem:[#allocation6 + $0x1f8] sm:$0xff]
    %v3525 = vld [vmem:[#allocation6 + $0x200] sm:$0xff]
    %v3526 = vld [vmem:[#allocation6 + $0x208] sm:$0xff]
    %v3527 = vld [vmem:[#allocation6 + $0x210] sm:$0xff]
    %v3528 = vld [vmem:[#allocation6 + $0x218] sm:$0xff]
    %v3529 = vld [vmem:[#allocation6 + $0x220] sm:$0xff]
    %v3530 = vld [vmem:[#allocation6 + $0x228] sm:$0xff]
    %v3531 = vld [vmem:[#allocation6 + $0x230] sm:$0xff]
    %v3532 = vld [vmem:[#allocation6 + $0x238] sm:$0xff]
    %v3533 = vld [vmem:[#allocation6 + $0x240] sm:$0xff]
    %v3534 = vld [vmem:[#allocation6 + $0x248] sm:$0xff]
    %v3535 = vld [vmem:[#allocation6 + $0x250] sm:$0xff]
    %v3536 = vld [vmem:[#allocation6 + $0x258] sm:$0xff]
    %v3537 = vld [vmem:[#allocation6 + $0x260] sm:$0xff]
    %v3538 = vld [vmem:[#allocation6 + $0x268] sm:$0xff]
    %v3539 = vld [vmem:[#allocation6 + $0x270] sm:$0xff]
    %v3540 = vld [vmem:[#allocation6 + $0x278] sm:$0xff]
    %v3541 = vld [vmem:[#allocation6 + $0x280] sm:$0xff]
    %v3542 = vld [vmem:[#allocation6 + $0x288] sm:$0xff]
    %v3543 = vld [vmem:[#allocation6 + $0x290] sm:$0xff]
    %v3544 = vld [vmem:[#allocation6 + $0x298] sm:$0xff]
    %v3545 = vld [vmem:[#allocation6 + $0x2a0] sm:$0xff]
    %v3546 = vld [vmem:[#allocation6 + $0x2a8] sm:$0xff]
    %v3547 = vld [vmem:[#allocation6 + $0x2b0] sm:$0xff]
    %v3548 = vld [vmem:[#allocation6 + $0x2b8] sm:$0xff]
    %v3549 = vld [vmem:[#allocation6 + $0x2c0] sm:$0xff]
    %v3550 = vld [vmem:[#allocation6 + $0x2c8] sm:$0xff]
    %v3551 = vld [vmem:[#allocation6 + $0x2d0] sm:$0xff]
    %v3552 = vld [vmem:[#allocation6 + $0x2d8] sm:$0xff]
    %v3553 = vld [vmem:[#allocation6 + $0x2e0] sm:$0xff]
    %v3554 = vld [vmem:[#allocation6 + $0x2e8] sm:$0xff]
    %v3555 = vld [vmem:[#allocation6 + $0x2f0] sm:$0xff]
    %v3556 = vld [vmem:[#allocation6 + $0x2f8] sm:$0xff]
    %3557 = vmatprep.subr.mxu0 %v3462
    %3558 = vmatpush1.msra.mxu0 %v3461
    %3559 = vmatprep.subr.mxu0 %v3468
    %3560 = vmatpush1.msra.mxu0 %v3467
    %3561 = vmatprep.subr.mxu0 %v3474
    %3562 = vmatpush1.msra.mxu0 %v3473
    %3563 = vmatprep.subr.mxu0 %v3480
    %3564 = vmatpush1.msra.mxu0 %v3479
    %3565 = vmatprep.subr.mxu0 %v3486
    %3566 = vmatpush1.msra.mxu0 %v3485
    %3567 = vmatprep.subr.mxu0 %v3492
    %3568 = vmatpush1.msra.mxu0 %v3491
    %3569 = vmatprep.subr.mxu0 %v3498
    %3570 = vmatpush1.msra.mxu0 %v3497
    %3571 = vmatprep.subr.mxu0 %v3504
    %3572 = vmatpush1.msra.mxu0 %v3503
    %3573 = vmatprep.subr.mxu0 %v3510
    %3574 = vmatpush1.msra.mxu0 %v3509
    %3575 = vmatprep.subr.mxu0 %v3516
    %3576 = vmatpush1.msra.mxu0 %v3515
    %3577 = vmatprep.subr.mxu0 %v3522
    %3578 = vmatpush1.msra.mxu0 %v3521
    %3579 = vmatprep.subr.mxu0 %v3528
    %3580 = vmatpush1.msra.mxu0 %v3527
    %3581 = vmatprep.subr.mxu0 %v3534
    %3582 = vmatpush1.msra.mxu0 %v3533
    %3583 = vmatprep.subr.mxu0 %v3540
    %3584 = vmatpush1.msra.mxu0 %v3539
    %3585 = vmatprep.subr.mxu0 %v3546
    %3586 = vmatpush1.msra.mxu0 %v3545
    %3587 = vmatprep.subr.mxu0 %v3552
    %3588 = vmatpush1.msra.mxu0 %v3551
    %3589 = vmatprep.subr.mxu0 0.0
    %3590 = vmatpush1.msra.mxu0 0.0
    %3591 = vmatprep.subr.mxu0 0.0
    %3592 = vmatpush1.msra.mxu0 0.0
    %3593 = vmatprep.subr.mxu0 0.0
    %3594 = vmatpush1.msra.mxu0 0.0
    %3595 = vmatprep.subr.mxu0 0.0
    %3596 = vmatpush1.msra.mxu0 0.0
    %3597 = vmatprep.subr.mxu0 0.0
    %3598 = vmatpush1.msra.mxu0 0.0
    %3599 = vmatprep.subr.mxu0 0.0
    %3600 = vmatpush1.msra.mxu0 0.0
    %3601 = vmatprep.subr.mxu0 0.0
    %3602 = vmatpush1.msra.mxu0 0.0
    %3603 = vmatprep.subr.mxu0 0.0
    %3604 = vmatpush1.msra.mxu0 0.0
    %3605 = vmatprep.subr.mxu0 0.0
    %3606 = vmatpush1.msra.mxu0 0.0
    %3607 = vmatprep.subr.mxu0 0.0
    %3608 = vmatpush1.msra.mxu0 0.0
    %3609 = vmatprep.subr.mxu0 0.0
    %3610 = vmatpush1.msra.mxu0 0.0
    %3611 = vmatprep.subr.mxu0 0.0
    %3612 = vmatpush1.msra.mxu0 0.0
    %3613 = vmatprep.subr.mxu0 0.0
    %3614 = vmatpush1.msra.mxu0 0.0
    %3615 = vmatprep.subr.mxu0 0.0
    %3616 = vmatpush1.msra.mxu0 0.0
    %3617 = vmatprep.subr.mxu0 0.0
    %3618 = vmatpush1.msra.mxu0 0.0
    %3619 = vmatprep.subr.mxu0 0.0
    %3620 = vmatpush1.msra.mxu0 0.0
    %3621 = vmatprep.mubr.f32.mxu0 0.0
    %3622 = vmatmul.mubr.f32.gmra.mrb[0].mxu0 %v3459
    %v3623 = vpop.f32.mrb[0].mxu0
    %v3624 = vadd.f32 0.0, %v3623
    %v3625 = vpop.f32.mrb[0].mxu0
    %v3626 = vadd.f32 0.0, %v3625
    %3627 = vdwg.mxu0
    %3628 = vmatprep.subr.mxu0 %v3464
    %3629 = vmatpush1.msra.mxu0 %v3463
    %3630 = vmatprep.subr.mxu0 %v3470
    %3631 = vmatpush1.msra.mxu0 %v3469
    %3632 = vmatprep.subr.mxu0 %v3476
    %3633 = vmatpush1.msra.mxu0 %v3475
    %3634 = vmatprep.subr.mxu0 %v3482
    %3635 = vmatpush1.msra.mxu0 %v3481
    %3636 = vmatprep.subr.mxu0 %v3488
    %3637 = vmatpush1.msra.mxu0 %v3487
    %3638 = vmatprep.subr.mxu0 %v3494
    %3639 = vmatpush1.msra.mxu0 %v3493
    %3640 = vmatprep.subr.mxu0 %v3500
    %3641 = vmatpush1.msra.mxu0 %v3499
    %3642 = vmatprep.subr.mxu0 %v3506
    %3643 = vmatpush1.msra.mxu0 %v3505
    %3644 = vmatprep.subr.mxu0 %v3512
    %3645 = vmatpush1.msra.mxu0 %v3511
    %3646 = vmatprep.subr.mxu0 %v3518
    %3647 = vmatpush1.msra.mxu0 %v3517
    %3648 = vmatprep.subr.mxu0 %v3524
    %3649 = vmatpush1.msra.mxu0 %v3523
    %3650 = vmatprep.subr.mxu0 %v3530
    %3651 = vmatpush1.msra.mxu0 %v3529
    %3652 = vmatprep.subr.mxu0 %v3536
    %3653 = vmatpush1.msra.mxu0 %v3535
    %3654 = vmatprep.subr.mxu0 %v3542
    %3655 = vmatpush1.msra.mxu0 %v3541
    %3656 = vmatprep.subr.mxu0 %v3548
    %3657 = vmatpush1.msra.mxu0 %v3547
    %3658 = vmatprep.subr.mxu0 %v3554
    %3659 = vmatpush1.msra.mxu0 %v3553
    %3660 = vmatprep.subr.mxu0 0.0
    %3661 = vmatpush1.msra.mxu0 0.0
    %3662 = vmatprep.subr.mxu0 0.0
    %3663 = vmatpush1.msra.mxu0 0.0
    %3664 = vmatprep.subr.mxu0 0.0
    %3665 = vmatpush1.msra.mxu0 0.0
    %3666 = vmatprep.subr.mxu0 0.0
    %3667 = vmatpush1.msra.mxu0 0.0
    %3668 = vmatprep.subr.mxu0 0.0
    %3669 = vmatpush1.msra.mxu0 0.0
    %3670 = vmatprep.subr.mxu0 0.0
    %3671 = vmatpush1.msra.mxu0 0.0
    %3672 = vmatprep.subr.mxu0 0.0
    %3673 = vmatpush1.msra.mxu0 0.0
    %3674 = vmatprep.subr.mxu0 0.0
    %3675 = vmatpush1.msra.mxu0 0.0
    %3676 = vmatprep.subr.mxu0 0.0
    %3677 = vmatpush1.msra.mxu0 0.0
    %3678 = vmatprep.subr.mxu0 0.0
    %3679 = vmatpush1.msra.mxu0 0.0
    %3680 = vmatprep.subr.mxu0 0.0
    %3681 = vmatpush1.msra.mxu0 0.0
    %3682 = vmatprep.subr.mxu0 0.0
    %3683 = vmatpush1.msra.mxu0 0.0
    %3684 = vmatprep.subr.mxu0 0.0
    %3685 = vmatpush1.msra.mxu0 0.0
    %3686 = vmatprep.subr.mxu0 0.0
    %3687 = vmatpush1.msra.mxu0 0.0
    %3688 = vmatprep.subr.mxu0 0.0
    %3689 = vmatpush1.msra.mxu0 0.0
    %3690 = vmatprep.subr.mxu0 0.0
    %3691 = vmatpush1.msra.mxu0 0.0
    %3692 = vmatprep.mubr.f32.mxu0 0.0
    %3693 = vmatmul.mubr.f32.gmra.mrb[0].mxu0 %v3459
    %v3694 = vpop.f32.mrb[0].mxu0
    %v3695 = vadd.f32 0.0, %v3694
    %v3696 = vpop.f32.mrb[0].mxu0
    %v3697 = vadd.f32 0.0, %v3696
    %3698 = vdwg.mxu0
    %3699 = vmatprep.subr.mxu0 %v3466
    %3700 = vmatpush1.msra.mxu0 %v3465
    %3701 = vmatprep.subr.mxu0 %v3472
    %3702 = vmatpush1.msra.mxu0 %v3471
    %3703 = vmatprep.subr.mxu0 %v3478
    %3704 = vmatpush1.msra.mxu0 %v3477
    %3705 = vmatprep.subr.mxu0 %v3484
    %3706 = vmatpush1.msra.mxu0 %v3483
    %3707 = vmatprep.subr.mxu0 %v3490
    %3708 = vmatpush1.msra.mxu0 %v3489
    %3709 = vmatprep.subr.mxu0 %v3496
    %3710 = vmatpush1.msra.mxu0 %v3495
    %3711 = vmatprep.subr.mxu0 %v3502
    %3712 = vmatpush1.msra.mxu0 %v3501
    %3713 = vmatprep.subr.mxu0 %v3508
    %3714 = vmatpush1.msra.mxu0 %v3507
    %3715 = vmatprep.subr.mxu0 %v3514
    %3716 = vmatpush1.msra.mxu0 %v3513
    %3717 = vmatprep.subr.mxu0 %v3520
    %3718 = vmatpush1.msra.mxu0 %v3519
    %3719 = vmatprep.subr.mxu0 %v3526
    %3720 = vmatpush1.msra.mxu0 %v3525
    %3721 = vmatprep.subr.mxu0 %v3532
    %3722 = vmatpush1.msra.mxu0 %v3531
    %3723 = vmatprep.subr.mxu0 %v3538
    %3724 = vmatpush1.msra.mxu0 %v3537
    %3725 = vmatprep.subr.mxu0 %v3544
    %3726 = vmatpush1.msra.mxu0 %v3543
    %3727 = vmatprep.subr.mxu0 %v3550
    %3728 = vmatpush1.msra.mxu0 %v3549
    %3729 = vmatprep.subr.mxu0 %v3556
    %3730 = vmatpush1.msra.mxu0 %v3555
    %3731 = vmatprep.subr.mxu0 0.0
    %3732 = vmatpush1.msra.mxu0 0.0
    %3733 = vmatprep.subr.mxu0 0.0
    %3734 = vmatpush1.msra.mxu0 0.0
    %3735 = vmatprep.subr.mxu0 0.0
    %3736 = vmatpush1.msra.mxu0 0.0
    %3737 = vmatprep.subr.mxu0 0.0
    %3738 = vmatpush1.msra.mxu0 0.0
    %3739 = vmatprep.subr.mxu0 0.0
    %3740 = vmatpush1.msra.mxu0 0.0
    %3741 = vmatprep.subr.mxu0 0.0
    %3742 = vmatpush1.msra.mxu0 0.0
    %3743 = vmatprep.subr.mxu0 0.0
    %3744 = vmatpush1.msra.mxu0 0.0
    %3745 = vmatprep.subr.mxu0 0.0
    %3746 = vmatpush1.msra.mxu0 0.0
    %3747 = vmatprep.subr.mxu0 0.0
    %3748 = vmatpush1.msra.mxu0 0.0
    %3749 = vmatprep.subr.mxu0 0.0
    %3750 = vmatpush1.msra.mxu0 0.0
    %3751 = vmatprep.subr.mxu0 0.0
    %3752 = vmatpush1.msra.mxu0 0.0
    %3753 = vmatprep.subr.mxu0 0.0
    %3754 = vmatpush1.msra.mxu0 0.0
    %3755 = vmatprep.subr.mxu0 0.0
    %3756 = vmatpush1.msra.mxu0 0.0
    %3757 = vmatprep.subr.mxu0 0.0
    %3758 = vmatpush1.msra.mxu0 0.0
    %3759 = vmatprep.subr.mxu0 0.0
    %3760 = vmatpush1.msra.mxu0 0.0
    %3761 = vmatprep.subr.mxu0 0.0
    %3762 = vmatpush1.msra.mxu0 0.0
    %3763 = vmatprep.mubr.f32.mxu0 0.0
    %3764 = vmatmul.mubr.f32.gmra.mrb[0].mxu0 %v3459
    %v3765 = vpop.f32.mrb[0].mxu0
    %v3766 = vadd.f32 0.0, %v3765
    %v3767 = vpop.f32.mrb[0].mxu0
    %v3768 = vadd.f32 0.0, %v3767
    %3769 = vdwg.mxu0
    %v3770 = vadd.f32 %v3697, %v89
    %v3771 = vadd.f32 %v3766, %v93
    %v3772 = vadd.f32 %v3768, %v97
    %v3773 = vadd.f32 %v3770, %v3624
    %v3774 = vxor.u32 %v3773, 2147483648
    %v3775 = vmul.f32 %v3774, 1.442695
    %v3776 = vpow.pop %v3775
    %v3777 = vadd.f32 %v3776, 1.0
    %v3778 = vrcp.pop %v3777
    %v3779 = vmul.f32 1.0, %v3778
    %v3780 = vadd.f32 %v3771, %v3626
    %v3781 = vxor.u32 %v3780, 2147483648
    %v3782 = vmul.f32 %v3781, 1.442695
    %v3783 = vpow.pop %v3782
    %v3784 = vadd.f32 %v3783, 1.0
    %v3785 = vrcp.pop %v3784
    %v3786 = vmul.f32 1.0, %v3785
    %v3787 = vadd.f32 %v3695, %v82
    %v3788 = vmul.f32 %v3779, %v3787
    %v3789 = vadd.f32 %v3772, %v3788
    %v3790 = vtanh.pop %v3789
    %v3791 = vsub.f32 %v3459, %v3790
    %v3792 = vmul.f32 %v3786, %v3791
    %v3793 = vadd.f32 %v3790, %v3792
    %3794 = vst [vmem:[#allocation2 + $0x28] sm:$0xff] %v3793
    %v3795 = vld [vmem:[#allocation6] sm:$0xff]
    %v3796 = vld [vmem:[#allocation6 + $0x8] sm:$0xff]
    %v3797 = vld [vmem:[#allocation6 + $0x10] sm:$0xff]
    %v3798 = vld [vmem:[#allocation6 + $0x18] sm:$0xff]
    %v3799 = vld [vmem:[#allocation6 + $0x20] sm:$0xff]
    %v3800 = vld [vmem:[#allocation6 + $0x28] sm:$0xff]
    %v3801 = vld [vmem:[#allocation6 + $0x30] sm:$0xff]
    %v3802 = vld [vmem:[#allocation6 + $0x38] sm:$0xff]
    %v3803 = vld [vmem:[#allocation6 + $0x40] sm:$0xff]
    %v3804 = vld [vmem:[#allocation6 + $0x48] sm:$0xff]
    %v3805 = vld [vmem:[#allocation6 + $0x50] sm:$0xff]
    %v3806 = vld [vmem:[#allocation6 + $0x58] sm:$0xff]
    %v3807 = vld [vmem:[#allocation6 + $0x60] sm:$0xff]
    %v3808 = vld [vmem:[#allocation6 + $0x68] sm:$0xff]
    %v3809 = vld [vmem:[#allocation6 + $0x70] sm:$0xff]
    %v3810 = vld [vmem:[#allocation6 + $0x78] sm:$0xff]
    %v3811 = vld [vmem:[#allocation6 + $0x80] sm:$0xff]
    %v3812 = vld [vmem:[#allocation6 + $0x88] sm:$0xff]
    %v3813 = vld [vmem:[#allocation6 + $0x90] sm:$0xff]
    %v3814 = vld [vmem:[#allocation6 + $0x98] sm:$0xff]
    %v3815 = vld [vmem:[#allocation6 + $0xa0] sm:$0xff]
    %v3816 = vld [vmem:[#allocation6 + $0xa8] sm:$0xff]
    %v3817 = vld [vmem:[#allocation6 + $0xb0] sm:$0xff]
    %v3818 = vld [vmem:[#allocation6 + $0xb8] sm:$0xff]
    %v3819 = vld [vmem:[#allocation6 + $0xc0] sm:$0xff]
    %v3820 = vld [vmem:[#allocation6 + $0xc8] sm:$0xff]
    %v3821 = vld [vmem:[#allocation6 + $0xd0] sm:$0xff]
    %v3822 = vld [vmem:[#allocation6 + $0xd8] sm:$0xff]
    %v3823 = vld [vmem:[#allocation6 + $0xe0] sm:$0xff]
    %v3824 = vld [vmem:[#allocation6 + $0xe8] sm:$0xff]
    %v3825 = vld [vmem:[#allocation6 + $0xf0] sm:$0xff]
    %v3826 = vld [vmem:[#allocation6 + $0xf8] sm:$0xff]
    %v3827 = vld [vmem:[#allocation6 + $0x100] sm:$0xff]
    %v3828 = vld [vmem:[#allocation6 + $0x108] sm:$0xff]
    %v3829 = vld [vmem:[#allocation6 + $0x110] sm:$0xff]
    %v3830 = vld [vmem:[#allocation6 + $0x118] sm:$0xff]
    %v3831 = vld [vmem:[#allocation6 + $0x120] sm:$0xff]
    %v3832 = vld [vmem:[#allocation6 + $0x128] sm:$0xff]
    %v3833 = vld [vmem:[#allocation6 + $0x130] sm:$0xff]
    %v3834 = vld [vmem:[#allocation6 + $0x138] sm:$0xff]
    %v3835 = vld [vmem:[#allocation6 + $0x140] sm:$0xff]
    %v3836 = vld [vmem:[#allocation6 + $0x148] sm:$0xff]
    %v3837 = vld [vmem:[#allocation6 + $0x150] sm:$0xff]
    %v3838 = vld [vmem:[#allocation6 + $0x158] sm:$0xff]
    %v3839 = vld [vmem:[#allocation6 + $0x160] sm:$0xff]
    %v3840 = vld [vmem:[#allocation6 + $0x168] sm:$0xff]
    %v3841 = vld [vmem:[#allocation6 + $0x170] sm:$0xff]
    %v3842 = vld [vmem:[#allocation6 + $0x178] sm:$0xff]
    %v3843 = vld [vmem:[#allocation6 + $0x180] sm:$0xff]
    %v3844 = vld [vmem:[#allocation6 + $0x188] sm:$0xff]
    %v3845 = vld [vmem:[#allocation6 + $0x190] sm:$0xff]
    %v3846 = vld [vmem:[#allocation6 + $0x198] sm:$0xff]
    %v3847 = vld [vmem:[#allocation6 + $0x1a0] sm:$0xff]
    %v3848 = vld [vmem:[#allocation6 + $0x1a8] sm:$0xff]
    %v3849 = vld [vmem:[#allocation6 + $0x1b0] sm:$0xff]
    %v3850 = vld [vmem:[#allocation6 + $0x1b8] sm:$0xff]
    %v3851 = vld [vmem:[#allocation6 + $0x1c0] sm:$0xff]
    %v3852 = vld [vmem:[#allocation6 + $0x1c8] sm:$0xff]
    %v3853 = vld [vmem:[#allocation6 + $0x1d0] sm:$0xff]
    %v3854 = vld [vmem:[#allocation6 + $0x1d8] sm:$0xff]
    %v3855 = vld [vmem:[#allocation6 + $0x1e0] sm:$0xff]
    %v3856 = vld [vmem:[#allocation6 + $0x1e8] sm:$0xff]
    %v3857 = vld [vmem:[#allocation6 + $0x1f0] sm:$0xff]
    %v3858 = vld [vmem:[#allocation6 + $0x1f8] sm:$0xff]
    %v3859 = vld [vmem:[#allocation6 + $0x200] sm:$0xff]
    %v3860 = vld [vmem:[#allocation6 + $0x208] sm:$0xff]
    %v3861 = vld [vmem:[#allocation6 + $0x210] sm:$0xff]
    %v3862 = vld [vmem:[#allocation6 + $0x218] sm:$0xff]
    %v3863 = vld [vmem:[#allocation6 + $0x220] sm:$0xff]
    %v3864 = vld [vmem:[#allocation6 + $0x228] sm:$0xff]
    %v3865 = vld [vmem:[#allocation6 + $0x230] sm:$0xff]
    %v3866 = vld [vmem:[#allocation6 + $0x238] sm:$0xff]
    %v3867 = vld [vmem:[#allocation6 + $0x240] sm:$0xff]
    %v3868 = vld [vmem:[#allocation6 + $0x248] sm:$0xff]
    %v3869 = vld [vmem:[#allocation6 + $0x250] sm:$0xff]
    %v3870 = vld [vmem:[#allocation6 + $0x258] sm:$0xff]
    %v3871 = vld [vmem:[#allocation6 + $0x260] sm:$0xff]
    %v3872 = vld [vmem:[#allocation6 + $0x268] sm:$0xff]
    %v3873 = vld [vmem:[#allocation6 + $0x270] sm:$0xff]
    %v3874 = vld [vmem:[#allocation6 + $0x278] sm:$0xff]
    %v3875 = vld [vmem:[#allocation6 + $0x280] sm:$0xff]
    %v3876 = vld [vmem:[#allocation6 + $0x288] sm:$0xff]
    %v3877 = vld [vmem:[#allocation6 + $0x290] sm:$0xff]
    %v3878 = vld [vmem:[#allocation6 + $0x298] sm:$0xff]
    %v3879 = vld [vmem:[#allocation6 + $0x2a0] sm:$0xff]
    %v3880 = vld [vmem:[#allocation6 + $0x2a8] sm:$0xff]
    %v3881 = vld [vmem:[#allocation6 + $0x2b0] sm:$0xff]
    %v3882 = vld [vmem:[#allocation6 + $0x2b8] sm:$0xff]
    %v3883 = vld [vmem:[#allocation6 + $0x2c0] sm:$0xff]
    %v3884 = vld [vmem:[#allocation6 + $0x2c8] sm:$0xff]
    %v3885 = vld [vmem:[#allocation6 + $0x2d0] sm:$0xff]
    %v3886 = vld [vmem:[#allocation6 + $0x2d8] sm:$0xff]
    %v3887 = vld [vmem:[#allocation6 + $0x2e0] sm:$0xff]
    %v3888 = vld [vmem:[#allocation6 + $0x2e8] sm:$0xff]
    %v3889 = vld [vmem:[#allocation6 + $0x2f0] sm:$0xff]
    %v3890 = vld [vmem:[#allocation6 + $0x2f8] sm:$0xff]
    %3891 = vmatprep.subr.mxu0 %v3796
    %3892 = vmatpush1.msra.mxu0 %v3795
    %3893 = vmatprep.subr.mxu0 %v3802
    %3894 = vmatpush1.msra.mxu0 %v3801
    %3895 = vmatprep.subr.mxu0 %v3808
    %3896 = vmatpush1.msra.mxu0 %v3807
    %3897 = vmatprep.subr.mxu0 %v3814
    %3898 = vmatpush1.msra.mxu0 %v3813
    %3899 = vmatprep.subr.mxu0 %v3820
    %3900 = vmatpush1.msra.mxu0 %v3819
    %3901 = vmatprep.subr.mxu0 %v3826
    %3902 = vmatpush1.msra.mxu0 %v3825
    %3903 = vmatprep.subr.mxu0 %v3832
    %3904 = vmatpush1.msra.mxu0 %v3831
    %3905 = vmatprep.subr.mxu0 %v3838
    %3906 = vmatpush1.msra.mxu0 %v3837
    %3907 = vmatprep.subr.mxu0 %v3844
    %3908 = vmatpush1.msra.mxu0 %v3843
    %3909 = vmatprep.subr.mxu0 %v3850
    %3910 = vmatpush1.msra.mxu0 %v3849
    %3911 = vmatprep.subr.mxu0 %v3856
    %3912 = vmatpush1.msra.mxu0 %v3855
    %3913 = vmatprep.subr.mxu0 %v3862
    %3914 = vmatpush1.msra.mxu0 %v3861
    %3915 = vmatprep.subr.mxu0 %v3868
    %3916 = vmatpush1.msra.mxu0 %v3867
    %3917 = vmatprep.subr.mxu0 %v3874
    %3918 = vmatpush1.msra.mxu0 %v3873
    %3919 = vmatprep.subr.mxu0 %v3880
    %3920 = vmatpush1.msra.mxu0 %v3879
    %3921 = vmatprep.subr.mxu0 %v3886
    %3922 = vmatpush1.msra.mxu0 %v3885
    %3923 = vmatprep.subr.mxu0 0.0
    %3924 = vmatpush1.msra.mxu0 0.0
    %3925 = vmatprep.subr.mxu0 0.0
    %3926 = vmatpush1.msra.mxu0 0.0
    %3927 = vmatprep.subr.mxu0 0.0
    %3928 = vmatpush1.msra.mxu0 0.0
    %3929 = vmatprep.subr.mxu0 0.0
    %3930 = vmatpush1.msra.mxu0 0.0
    %3931 = vmatprep.subr.mxu0 0.0
    %3932 = vmatpush1.msra.mxu0 0.0
    %3933 = vmatprep.subr.mxu0 0.0
    %3934 = vmatpush1.msra.mxu0 0.0
    %3935 = vmatprep.subr.mxu0 0.0
    %3936 = vmatpush1.msra.mxu0 0.0
    %3937 = vmatprep.subr.mxu0 0.0
    %3938 = vmatpush1.msra.mxu0 0.0
    %3939 = vmatprep.subr.mxu0 0.0
    %3940 = vmatpush1.msra.mxu0 0.0
    %3941 = vmatprep.subr.mxu0 0.0
    %3942 = vmatpush1.msra.mxu0 0.0
    %3943 = vmatprep.subr.mxu0 0.0
    %3944 = vmatpush1.msra.mxu0 0.0
    %3945 = vmatprep.subr.mxu0 0.0
    %3946 = vmatpush1.msra.mxu0 0.0
    %3947 = vmatprep.subr.mxu0 0.0
    %3948 = vmatpush1.msra.mxu0 0.0
    %3949 = vmatprep.subr.mxu0 0.0
    %3950 = vmatpush1.msra.mxu0 0.0
    %3951 = vmatprep.subr.mxu0 0.0
    %3952 = vmatpush1.msra.mxu0 0.0
    %3953 = vmatprep.subr.mxu0 0.0
    %3954 = vmatpush1.msra.mxu0 0.0
    %3955 = vmatprep.mubr.f32.mxu0 0.0
    %3956 = vmatmul.mubr.f32.gmra.mrb[0].mxu0 %v3793
    %v3957 = vpop.f32.mrb[0].mxu0
    %v3958 = vadd.f32 0.0, %v3957
    %v3959 = vpop.f32.mrb[0].mxu0
    %v3960 = vadd.f32 0.0, %v3959
    %3961 = vdwg.mxu0
    %3962 = vmatprep.subr.mxu0 %v3798
    %3963 = vmatpush1.msra.mxu0 %v3797
    %3964 = vmatprep.subr.mxu0 %v3804
    %3965 = vmatpush1.msra.mxu0 %v3803
    %3966 = vmatprep.subr.mxu0 %v3810
    %3967 = vmatpush1.msra.mxu0 %v3809
    %3968 = vmatprep.subr.mxu0 %v3816
    %3969 = vmatpush1.msra.mxu0 %v3815
    %3970 = vmatprep.subr.mxu0 %v3822
    %3971 = vmatpush1.msra.mxu0 %v3821
    %3972 = vmatprep.subr.mxu0 %v3828
    %3973 = vmatpush1.msra.mxu0 %v3827
    %3974 = vmatprep.subr.mxu0 %v3834
    %3975 = vmatpush1.msra.mxu0 %v3833
    %3976 = vmatprep.subr.mxu0 %v3840
    %3977 = vmatpush1.msra.mxu0 %v3839
    %3978 = vmatprep.subr.mxu0 %v3846
    %3979 = vmatpush1.msra.mxu0 %v3845
    %3980 = vmatprep.subr.mxu0 %v3852
    %3981 = vmatpush1.msra.mxu0 %v3851
    %3982 = vmatprep.subr.mxu0 %v3858
    %3983 = vmatpush1.msra.mxu0 %v3857
    %3984 = vmatprep.subr.mxu0 %v3864
    %3985 = vmatpush1.msra.mxu0 %v3863
    %3986 = vmatprep.subr.mxu0 %v3870
    %3987 = vmatpush1.msra.mxu0 %v3869
    %3988 = vmatprep.subr.mxu0 %v3876
    %3989 = vmatpush1.msra.mxu0 %v3875
    %3990 = vmatprep.subr.mxu0 %v3882
    %3991 = vmatpush1.msra.mxu0 %v3881
    %3992 = vmatprep.subr.mxu0 %v3888
    %3993 = vmatpush1.msra.mxu0 %v3887
    %3994 = vmatprep.subr.mxu0 0.0
    %3995 = vmatpush1.msra.mxu0 0.0
    %3996 = vmatprep.subr.mxu0 0.0
    %3997 = vmatpush1.msra.mxu0 0.0
    %3998 = vmatprep.subr.mxu0 0.0
    %3999 = vmatpush1.msra.mxu0 0.0
    %4000 = vmatprep.subr.mxu0 0.0
    %4001 = vmatpush1.msra.mxu0 0.0
    %4002 = vmatprep.subr.mxu0 0.0
    %4003 = vmatpush1.msra.mxu0 0.0
    %4004 = vmatprep.subr.mxu0 0.0
    %4005 = vmatpush1.msra.mxu0 0.0
    %4006 = vmatprep.subr.mxu0 0.0
    %4007 = vmatpush1.msra.mxu0 0.0
    %4008 = vmatprep.subr.mxu0 0.0
    %4009 = vmatpush1.msra.mxu0 0.0
    %4010 = vmatprep.subr.mxu0 0.0
    %4011 = vmatpush1.msra.mxu0 0.0
    %4012 = vmatprep.subr.mxu0 0.0
    %4013 = vmatpush1.msra.mxu0 0.0
    %4014 = vmatprep.subr.mxu0 0.0
    %4015 = vmatpush1.msra.mxu0 0.0
    %4016 = vmatprep.subr.mxu0 0.0
    %4017 = vmatpush1.msra.mxu0 0.0
    %4018 = vmatprep.subr.mxu0 0.0
    %4019 = vmatpush1.msra.mxu0 0.0
    %4020 = vmatprep.subr.mxu0 0.0
    %4021 = vmatpush1.msra.mxu0 0.0
    %4022 = vmatprep.subr.mxu0 0.0
    %4023 = vmatpush1.msra.mxu0 0.0
    %4024 = vmatprep.subr.mxu0 0.0
    %4025 = vmatpush1.msra.mxu0 0.0
    %4026 = vmatprep.mubr.f32.mxu0 0.0
    %4027 = vmatmul.mubr.f32.gmra.mrb[0].mxu0 %v3793
    %v4028 = vpop.f32.mrb[0].mxu0
    %v4029 = vadd.f32 0.0, %v4028
    %v4030 = vpop.f32.mrb[0].mxu0
    %v4031 = vadd.f32 0.0, %v4030
    %4032 = vdwg.mxu0
    %4033 = vmatprep.subr.mxu0 %v3800
    %4034 = vmatpush1.msra.mxu0 %v3799
    %4035 = vmatprep.subr.mxu0 %v3806
    %4036 = vmatpush1.msra.mxu0 %v3805
    %4037 = vmatprep.subr.mxu0 %v3812
    %4038 = vmatpush1.msra.mxu0 %v3811
    %4039 = vmatprep.subr.mxu0 %v3818
    %4040 = vmatpush1.msra.mxu0 %v3817
    %4041 = vmatprep.subr.mxu0 %v3824
    %4042 = vmatpush1.msra.mxu0 %v3823
    %4043 = vmatprep.subr.mxu0 %v3830
    %4044 = vmatpush1.msra.mxu0 %v3829
    %4045 = vmatprep.subr.mxu0 %v3836
    %4046 = vmatpush1.msra.mxu0 %v3835
    %4047 = vmatprep.subr.mxu0 %v3842
    %4048 = vmatpush1.msra.mxu0 %v3841
    %4049 = vmatprep.subr.mxu0 %v3848
    %4050 = vmatpush1.msra.mxu0 %v3847
    %4051 = vmatprep.subr.mxu0 %v3854
    %4052 = vmatpush1.msra.mxu0 %v3853
    %4053 = vmatprep.subr.mxu0 %v3860
    %4054 = vmatpush1.msra.mxu0 %v3859
    %4055 = vmatprep.subr.mxu0 %v3866
    %4056 = vmatpush1.msra.mxu0 %v3865
    %4057 = vmatprep.subr.mxu0 %v3872
    %4058 = vmatpush1.msra.mxu0 %v3871
    %4059 = vmatprep.subr.mxu0 %v3878
    %4060 = vmatpush1.msra.mxu0 %v3877
    %4061 = vmatprep.subr.mxu0 %v3884
    %4062 = vmatpush1.msra.mxu0 %v3883
    %4063 = vmatprep.subr.mxu0 %v3890
    %4064 = vmatpush1.msra.mxu0 %v3889
    %4065 = vmatprep.subr.mxu0 0.0
    %4066 = vmatpush1.msra.mxu0 0.0
    %4067 = vmatprep.subr.mxu0 0.0
    %4068 = vmatpush1.msra.mxu0 0.0
    %4069 = vmatprep.subr.mxu0 0.0
    %4070 = vmatpush1.msra.mxu0 0.0
    %4071 = vmatprep.subr.mxu0 0.0
    %4072 = vmatpush1.msra.mxu0 0.0
    %4073 = vmatprep.subr.mxu0 0.0
    %4074 = vmatpush1.msra.mxu0 0.0
    %4075 = vmatprep.subr.mxu0 0.0
    %4076 = vmatpush1.msra.mxu0 0.0
    %4077 = vmatprep.subr.mxu0 0.0
    %4078 = vmatpush1.msra.mxu0 0.0
    %4079 = vmatprep.subr.mxu0 0.0
    %4080 = vmatpush1.msra.mxu0 0.0
    %4081 = vmatprep.subr.mxu0 0.0
    %4082 = vmatpush1.msra.mxu0 0.0
    %4083 = vmatprep.subr.mxu0 0.0
    %4084 = vmatpush1.msra.mxu0 0.0
    %4085 = vmatprep.subr.mxu0 0.0
    %4086 = vmatpush1.msra.mxu0 0.0
    %4087 = vmatprep.subr.mxu0 0.0
    %4088 = vmatpush1.msra.mxu0 0.0
    %4089 = vmatprep.subr.mxu0 0.0
    %4090 = vmatpush1.msra.mxu0 0.0
    %4091 = vmatprep.subr.mxu0 0.0
    %4092 = vmatpush1.msra.mxu0 0.0
    %4093 = vmatprep.subr.mxu0 0.0
    %4094 = vmatpush1.msra.mxu0 0.0
    %4095 = vmatprep.subr.mxu0 0.0
    %4096 = vmatpush1.msra.mxu0 0.0
    %4097 = vmatprep.mubr.f32.mxu0 0.0
    %4098 = vmatmul.mubr.f32.gmra.mrb[0].mxu0 %v3793
    %v4099 = vpop.f32.mrb[0].mxu0
    %v4100 = vadd.f32 0.0, %v4099
    %v4101 = vpop.f32.mrb[0].mxu0
    %v4102 = vadd.f32 0.0, %v4101
    %4103 = vdwg.mxu0
    %v4104 = vadd.f32 %v4031, %v89
    %v4105 = vadd.f32 %v4100, %v93
    %v4106 = vadd.f32 %v4102, %v97
    %v4107 = vadd.f32 %v4104, %v3958
    %v4108 = vxor.u32 %v4107, 2147483648
    %v4109 = vmul.f32 %v4108, 1.442695
    %v4110 = vpow.pop %v4109
    %v4111 = vadd.f32 %v4110, 1.0
    %v4112 = vrcp.pop %v4111
    %v4113 = vmul.f32 1.0, %v4112
    %v4114 = vadd.f32 %v4105, %v3960
    %v4115 = vxor.u32 %v4114, 2147483648
    %v4116 = vmul.f32 %v4115, 1.442695
    %v4117 = vpow.pop %v4116
    %v4118 = vadd.f32 %v4117, 1.0
    %v4119 = vrcp.pop %v4118
    %v4120 = vmul.f32 1.0, %v4119
    %v4121 = vadd.f32 %v4029, %v82
    %v4122 = vmul.f32 %v4113, %v4121
    %v4123 = vadd.f32 %v4106, %v4122
    %v4124 = vtanh.pop %v4123
    %v4125 = vsub.f32 %v3793, %v4124
    %v4126 = vmul.f32 %v4120, %v4125
    %v4127 = vadd.f32 %v4124, %v4126
    %4128 = vst [vmem:[#allocation2 + $0x30] sm:$0xff] %v4127
    %v4129 = vld [vmem:[#allocation6] sm:$0xff]
    %v4130 = vld [vmem:[#allocation6 + $0x8] sm:$0xff]
    %v4131 = vld [vmem:[#allocation6 + $0x10] sm:$0xff]
    %v4132 = vld [vmem:[#allocation6 + $0x18] sm:$0xff]
    %v4133 = vld [vmem:[#allocation6 + $0x20] sm:$0xff]
    %v4134 = vld [vmem:[#allocation6 + $0x28] sm:$0xff]
    %v4135 = vld [vmem:[#allocation6 + $0x30] sm:$0xff]
    %v4136 = vld [vmem:[#allocation6 + $0x38] sm:$0xff]
    %v4137 = vld [vmem:[#allocation6 + $0x40] sm:$0xff]
    %v4138 = vld [vmem:[#allocation6 + $0x48] sm:$0xff]
    %v4139 = vld [vmem:[#allocation6 + $0x50] sm:$0xff]
    %v4140 = vld [vmem:[#allocation6 + $0x58] sm:$0xff]
    %v4141 = vld [vmem:[#allocation6 + $0x60] sm:$0xff]
    %v4142 = vld [vmem:[#allocation6 + $0x68] sm:$0xff]
    %v4143 = vld [vmem:[#allocation6 + $0x70] sm:$0xff]
    %v4144 = vld [vmem:[#allocation6 + $0x78] sm:$0xff]
    %v4145 = vld [vmem:[#allocation6 + $0x80] sm:$0xff]
    %v4146 = vld [vmem:[#allocation6 + $0x88] sm:$0xff]
    %v4147 = vld [vmem:[#allocation6 + $0x90] sm:$0xff]
    %v4148 = vld [vmem:[#allocation6 + $0x98] sm:$0xff]
    %v4149 = vld [vmem:[#allocation6 + $0xa0] sm:$0xff]
    %v4150 = vld [vmem:[#allocation6 + $0xa8] sm:$0xff]
    %v4151 = vld [vmem:[#allocation6 + $0xb0] sm:$0xff]
    %v4152 = vld [vmem:[#allocation6 + $0xb8] sm:$0xff]
    %v4153 = vld [vmem:[#allocation6 + $0xc0] sm:$0xff]
    %v4154 = vld [vmem:[#allocation6 + $0xc8] sm:$0xff]
    %v4155 = vld [vmem:[#allocation6 + $0xd0] sm:$0xff]
    %v4156 = vld [vmem:[#allocation6 + $0xd8] sm:$0xff]
    %v4157 = vld [vmem:[#allocation6 + $0xe0] sm:$0xff]
    %v4158 = vld [vmem:[#allocation6 + $0xe8] sm:$0xff]
    %v4159 = vld [vmem:[#allocation6 + $0xf0] sm:$0xff]
    %v4160 = vld [vmem:[#allocation6 + $0xf8] sm:$0xff]
    %v4161 = vld [vmem:[#allocation6 + $0x100] sm:$0xff]
    %v4162 = vld [vmem:[#allocation6 + $0x108] sm:$0xff]
    %v4163 = vld [vmem:[#allocation6 + $0x110] sm:$0xff]
    %v4164 = vld [vmem:[#allocation6 + $0x118] sm:$0xff]
    %v4165 = vld [vmem:[#allocation6 + $0x120] sm:$0xff]
    %v4166 = vld [vmem:[#allocation6 + $0x128] sm:$0xff]
    %v4167 = vld [vmem:[#allocation6 + $0x130] sm:$0xff]
    %v4168 = vld [vmem:[#allocation6 + $0x138] sm:$0xff]
    %v4169 = vld [vmem:[#allocation6 + $0x140] sm:$0xff]
    %v4170 = vld [vmem:[#allocation6 + $0x148] sm:$0xff]
    %v4171 = vld [vmem:[#allocation6 + $0x150] sm:$0xff]
    %v4172 = vld [vmem:[#allocation6 + $0x158] sm:$0xff]
    %v4173 = vld [vmem:[#allocation6 + $0x160] sm:$0xff]
    %v4174 = vld [vmem:[#allocation6 + $0x168] sm:$0xff]
    %v4175 = vld [vmem:[#allocation6 + $0x170] sm:$0xff]
    %v4176 = vld [vmem:[#allocation6 + $0x178] sm:$0xff]
    %v4177 = vld [vmem:[#allocation6 + $0x180] sm:$0xff]
    %v4178 = vld [vmem:[#allocation6 + $0x188] sm:$0xff]
    %v4179 = vld [vmem:[#allocation6 + $0x190] sm:$0xff]
    %v4180 = vld [vmem:[#allocation6 + $0x198] sm:$0xff]
    %v4181 = vld [vmem:[#allocation6 + $0x1a0] sm:$0xff]
    %v4182 = vld [vmem:[#allocation6 + $0x1a8] sm:$0xff]
    %v4183 = vld [vmem:[#allocation6 + $0x1b0] sm:$0xff]
    %v4184 = vld [vmem:[#allocation6 + $0x1b8] sm:$0xff]
    %v4185 = vld [vmem:[#allocation6 + $0x1c0] sm:$0xff]
    %v4186 = vld [vmem:[#allocation6 + $0x1c8] sm:$0xff]
    %v4187 = vld [vmem:[#allocation6 + $0x1d0] sm:$0xff]
    %v4188 = vld [vmem:[#allocation6 + $0x1d8] sm:$0xff]
    %v4189 = vld [vmem:[#allocation6 + $0x1e0] sm:$0xff]
    %v4190 = vld [vmem:[#allocation6 + $0x1e8] sm:$0xff]
    %v4191 = vld [vmem:[#allocation6 + $0x1f0] sm:$0xff]
    %v4192 = vld [vmem:[#allocation6 + $0x1f8] sm:$0xff]
    %v4193 = vld [vmem:[#allocation6 + $0x200] sm:$0xff]
    %v4194 = vld [vmem:[#allocation6 + $0x208] sm:$0xff]
    %v4195 = vld [vmem:[#allocation6 + $0x210] sm:$0xff]
    %v4196 = vld [vmem:[#allocation6 + $0x218] sm:$0xff]
    %v4197 = vld [vmem:[#allocation6 + $0x220] sm:$0xff]
    %v4198 = vld [vmem:[#allocation6 + $0x228] sm:$0xff]
    %v4199 = vld [vmem:[#allocation6 + $0x230] sm:$0xff]
    %v4200 = vld [vmem:[#allocation6 + $0x238] sm:$0xff]
    %v4201 = vld [vmem:[#allocation6 + $0x240] sm:$0xff]
    %v4202 = vld [vmem:[#allocation6 + $0x248] sm:$0xff]
    %v4203 = vld [vmem:[#allocation6 + $0x250] sm:$0xff]
    %v4204 = vld [vmem:[#allocation6 + $0x258] sm:$0xff]
    %v4205 = vld [vmem:[#allocation6 + $0x260] sm:$0xff]
    %v4206 = vld [vmem:[#allocation6 + $0x268] sm:$0xff]
    %v4207 = vld [vmem:[#allocation6 + $0x270] sm:$0xff]
    %v4208 = vld [vmem:[#allocation6 + $0x278] sm:$0xff]
    %v4209 = vld [vmem:[#allocation6 + $0x280] sm:$0xff]
    %v4210 = vld [vmem:[#allocation6 + $0x288] sm:$0xff]
    %v4211 = vld [vmem:[#allocation6 + $0x290] sm:$0xff]
    %v4212 = vld [vmem:[#allocation6 + $0x298] sm:$0xff]
    %v4213 = vld [vmem:[#allocation6 + $0x2a0] sm:$0xff]
    %v4214 = vld [vmem:[#allocation6 + $0x2a8] sm:$0xff]
    %v4215 = vld [vmem:[#allocation6 + $0x2b0] sm:$0xff]
    %v4216 = vld [vmem:[#allocation6 + $0x2b8] sm:$0xff]
    %v4217 = vld [vmem:[#allocation6 + $0x2c0] sm:$0xff]
    %v4218 = vld [vmem:[#allocation6 + $0x2c8] sm:$0xff]
    %v4219 = vld [vmem:[#allocation6 + $0x2d0] sm:$0xff]
    %v4220 = vld [vmem:[#allocation6 + $0x2d8] sm:$0xff]
    %v4221 = vld [vmem:[#allocation6 + $0x2e0] sm:$0xff]
    %v4222 = vld [vmem:[#allocation6 + $0x2e8] sm:$0xff]
    %v4223 = vld [vmem:[#allocation6 + $0x2f0] sm:$0xff]
    %v4224 = vld [vmem:[#allocation6 + $0x2f8] sm:$0xff]
    %4225 = vmatprep.subr.mxu0 %v4130
    %4226 = vmatpush1.msra.mxu0 %v4129
    %4227 = vmatprep.subr.mxu0 %v4136
    %4228 = vmatpush1.msra.mxu0 %v4135
    %4229 = vmatprep.subr.mxu0 %v4142
    %4230 = vmatpush1.msra.mxu0 %v4141
    %4231 = vmatprep.subr.mxu0 %v4148
    %4232 = vmatpush1.msra.mxu0 %v4147
    %4233 = vmatprep.subr.mxu0 %v4154
    %4234 = vmatpush1.msra.mxu0 %v4153
    %4235 = vmatprep.subr.mxu0 %v4160
    %4236 = vmatpush1.msra.mxu0 %v4159
    %4237 = vmatprep.subr.mxu0 %v4166
    %4238 = vmatpush1.msra.mxu0 %v4165
    %4239 = vmatprep.subr.mxu0 %v4172
    %4240 = vmatpush1.msra.mxu0 %v4171
    %4241 = vmatprep.subr.mxu0 %v4178
    %4242 = vmatpush1.msra.mxu0 %v4177
    %4243 = vmatprep.subr.mxu0 %v4184
    %4244 = vmatpush1.msra.mxu0 %v4183
    %4245 = vmatprep.subr.mxu0 %v4190
    %4246 = vmatpush1.msra.mxu0 %v4189
    %4247 = vmatprep.subr.mxu0 %v4196
    %4248 = vmatpush1.msra.mxu0 %v4195
    %4249 = vmatprep.subr.mxu0 %v4202
    %4250 = vmatpush1.msra.mxu0 %v4201
    %4251 = vmatprep.subr.mxu0 %v4208
    %4252 = vmatpush1.msra.mxu0 %v4207
    %4253 = vmatprep.subr.mxu0 %v4214
    %4254 = vmatpush1.msra.mxu0 %v4213
    %4255 = vmatprep.subr.mxu0 %v4220
    %4256 = vmatpush1.msra.mxu0 %v4219
    %4257 = vmatprep.subr.mxu0 0.0
    %4258 = vmatpush1.msra.mxu0 0.0
    %4259 = vmatprep.subr.mxu0 0.0
    %4260 = vmatpush1.msra.mxu0 0.0
    %4261 = vmatprep.subr.mxu0 0.0
    %4262 = vmatpush1.msra.mxu0 0.0
    %4263 = vmatprep.subr.mxu0 0.0
    %4264 = vmatpush1.msra.mxu0 0.0
    %4265 = vmatprep.subr.mxu0 0.0
    %4266 = vmatpush1.msra.mxu0 0.0
    %4267 = vmatprep.subr.mxu0 0.0
    %4268 = vmatpush1.msra.mxu0 0.0
    %4269 = vmatprep.subr.mxu0 0.0
    %4270 = vmatpush1.msra.mxu0 0.0
    %4271 = vmatprep.subr.mxu0 0.0
    %4272 = vmatpush1.msra.mxu0 0.0
    %4273 = vmatprep.subr.mxu0 0.0
    %4274 = vmatpush1.msra.mxu0 0.0
    %4275 = vmatprep.subr.mxu0 0.0
    %4276 = vmatpush1.msra.mxu0 0.0
    %4277 = vmatprep.subr.mxu0 0.0
    %4278 = vmatpush1.msra.mxu0 0.0
    %4279 = vmatprep.subr.mxu0 0.0
    %4280 = vmatpush1.msra.mxu0 0.0
    %4281 = vmatprep.subr.mxu0 0.0
    %4282 = vmatpush1.msra.mxu0 0.0
    %4283 = vmatprep.subr.mxu0 0.0
    %4284 = vmatpush1.msra.mxu0 0.0
    %4285 = vmatprep.subr.mxu0 0.0
    %4286 = vmatpush1.msra.mxu0 0.0
    %4287 = vmatprep.subr.mxu0 0.0
    %4288 = vmatpush1.msra.mxu0 0.0
    %4289 = vmatprep.mubr.f32.mxu0 0.0
    %4290 = vmatmul.mubr.f32.gmra.mrb[0].mxu0 %v4127
    %v4291 = vpop.f32.mrb[0].mxu0
    %v4292 = vadd.f32 0.0, %v4291
    %v4293 = vpop.f32.mrb[0].mxu0
    %v4294 = vadd.f32 0.0, %v4293
    %4295 = vdwg.mxu0
    %4296 = vmatprep.subr.mxu0 %v4132
    %4297 = vmatpush1.msra.mxu0 %v4131
    %4298 = vmatprep.subr.mxu0 %v4138
    %4299 = vmatpush1.msra.mxu0 %v4137
    %4300 = vmatprep.subr.mxu0 %v4144
    %4301 = vmatpush1.msra.mxu0 %v4143
    %4302 = vmatprep.subr.mxu0 %v4150
    %4303 = vmatpush1.msra.mxu0 %v4149
    %4304 = vmatprep.subr.mxu0 %v4156
    %4305 = vmatpush1.msra.mxu0 %v4155
    %4306 = vmatprep.subr.mxu0 %v4162
    %4307 = vmatpush1.msra.mxu0 %v4161
    %4308 = vmatprep.subr.mxu0 %v4168
    %4309 = vmatpush1.msra.mxu0 %v4167
    %4310 = vmatprep.subr.mxu0 %v4174
    %4311 = vmatpush1.msra.mxu0 %v4173
    %4312 = vmatprep.subr.mxu0 %v4180
    %4313 = vmatpush1.msra.mxu0 %v4179
    %4314 = vmatprep.subr.mxu0 %v4186
    %4315 = vmatpush1.msra.mxu0 %v4185
    %4316 = vmatprep.subr.mxu0 %v4192
    %4317 = vmatpush1.msra.mxu0 %v4191
    %4318 = vmatprep.subr.mxu0 %v4198
    %4319 = vmatpush1.msra.mxu0 %v4197
    %4320 = vmatprep.subr.mxu0 %v4204
    %4321 = vmatpush1.msra.mxu0 %v4203
    %4322 = vmatprep.subr.mxu0 %v4210
    %4323 = vmatpush1.msra.mxu0 %v4209
    %4324 = vmatprep.subr.mxu0 %v4216
    %4325 = vmatpush1.msra.mxu0 %v4215
    %4326 = vmatprep.subr.mxu0 %v4222
    %4327 = vmatpush1.msra.mxu0 %v4221
    %4328 = vmatprep.subr.mxu0 0.0
    %4329 = vmatpush1.msra.mxu0 0.0
    %4330 = vmatprep.subr.mxu0 0.0
    %4331 = vmatpush1.msra.mxu0 0.0
    %4332 = vmatprep.subr.mxu0 0.0
    %4333 = vmatpush1.msra.mxu0 0.0
    %4334 = vmatprep.subr.mxu0 0.0
    %4335 = vmatpush1.msra.mxu0 0.0
    %4336 = vmatprep.subr.mxu0 0.0
    %4337 = vmatpush1.msra.mxu0 0.0
    %4338 = vmatprep.subr.mxu0 0.0
    %4339 = vmatpush1.msra.mxu0 0.0
    %4340 = vmatprep.subr.mxu0 0.0
    %4341 = vmatpush1.msra.mxu0 0.0
    %4342 = vmatprep.subr.mxu0 0.0
    %4343 = vmatpush1.msra.mxu0 0.0
    %4344 = vmatprep.subr.mxu0 0.0
    %4345 = vmatpush1.msra.mxu0 0.0
    %4346 = vmatprep.subr.mxu0 0.0
    %4347 = vmatpush1.msra.mxu0 0.0
    %4348 = vmatprep.subr.mxu0 0.0
    %4349 = vmatpush1.msra.mxu0 0.0
    %4350 = vmatprep.subr.mxu0 0.0
    %4351 = vmatpush1.msra.mxu0 0.0
    %4352 = vmatprep.subr.mxu0 0.0
    %4353 = vmatpush1.msra.mxu0 0.0
    %4354 = vmatprep.subr.mxu0 0.0
    %4355 = vmatpush1.msra.mxu0 0.0
    %4356 = vmatprep.subr.mxu0 0.0
    %4357 = vmatpush1.msra.mxu0 0.0
    %4358 = vmatprep.subr.mxu0 0.0
    %4359 = vmatpush1.msra.mxu0 0.0
    %4360 = vmatprep.mubr.f32.mxu0 0.0
    %4361 = vmatmul.mubr.f32.gmra.mrb[0].mxu0 %v4127
    %v4362 = vpop.f32.mrb[0].mxu0
    %v4363 = vadd.f32 0.0, %v4362
    %v4364 = vpop.f32.mrb[0].mxu0
    %v4365 = vadd.f32 0.0, %v4364
    %4366 = vdwg.mxu0
    %4367 = vmatprep.subr.mxu0 %v4134
    %4368 = vmatpush1.msra.mxu0 %v4133
    %4369 = vmatprep.subr.mxu0 %v4140
    %4370 = vmatpush1.msra.mxu0 %v4139
    %4371 = vmatprep.subr.mxu0 %v4146
    %4372 = vmatpush1.msra.mxu0 %v4145
    %4373 = vmatprep.subr.mxu0 %v4152
    %4374 = vmatpush1.msra.mxu0 %v4151
    %4375 = vmatprep.subr.mxu0 %v4158
    %4376 = vmatpush1.msra.mxu0 %v4157
    %4377 = vmatprep.subr.mxu0 %v4164
    %4378 = vmatpush1.msra.mxu0 %v4163
    %4379 = vmatprep.subr.mxu0 %v4170
    %4380 = vmatpush1.msra.mxu0 %v4169
    %4381 = vmatprep.subr.mxu0 %v4176
    %4382 = vmatpush1.msra.mxu0 %v4175
    %4383 = vmatprep.subr.mxu0 %v4182
    %4384 = vmatpush1.msra.mxu0 %v4181
    %4385 = vmatprep.subr.mxu0 %v4188
    %4386 = vmatpush1.msra.mxu0 %v4187
    %4387 = vmatprep.subr.mxu0 %v4194
    %4388 = vmatpush1.msra.mxu0 %v4193
    %4389 = vmatprep.subr.mxu0 %v4200
    %4390 = vmatpush1.msra.mxu0 %v4199
    %4391 = vmatprep.subr.mxu0 %v4206
    %4392 = vmatpush1.msra.mxu0 %v4205
    %4393 = vmatprep.subr.mxu0 %v4212
    %4394 = vmatpush1.msra.mxu0 %v4211
    %4395 = vmatprep.subr.mxu0 %v4218
    %4396 = vmatpush1.msra.mxu0 %v4217
    %4397 = vmatprep.subr.mxu0 %v4224
    %4398 = vmatpush1.msra.mxu0 %v4223
    %4399 = vmatprep.subr.mxu0 0.0
    %4400 = vmatpush1.msra.mxu0 0.0
    %4401 = vmatprep.subr.mxu0 0.0
    %4402 = vmatpush1.msra.mxu0 0.0
    %4403 = vmatprep.subr.mxu0 0.0
    %4404 = vmatpush1.msra.mxu0 0.0
    %4405 = vmatprep.subr.mxu0 0.0
    %4406 = vmatpush1.msra.mxu0 0.0
    %4407 = vmatprep.subr.mxu0 0.0
    %4408 = vmatpush1.msra.mxu0 0.0
    %4409 = vmatprep.subr.mxu0 0.0
    %4410 = vmatpush1.msra.mxu0 0.0
    %4411 = vmatprep.subr.mxu0 0.0
    %4412 = vmatpush1.msra.mxu0 0.0
    %4413 = vmatprep.subr.mxu0 0.0
    %4414 = vmatpush1.msra.mxu0 0.0
    %4415 = vmatprep.subr.mxu0 0.0
    %4416 = vmatpush1.msra.mxu0 0.0
    %4417 = vmatprep.subr.mxu0 0.0
    %4418 = vmatpush1.msra.mxu0 0.0
    %4419 = vmatprep.subr.mxu0 0.0
    %4420 = vmatpush1.msra.mxu0 0.0
    %4421 = vmatprep.subr.mxu0 0.0
    %4422 = vmatpush1.msra.mxu0 0.0
    %4423 = vmatprep.subr.mxu0 0.0
    %4424 = vmatpush1.msra.mxu0 0.0
    %4425 = vmatprep.subr.mxu0 0.0
    %4426 = vmatpush1.msra.mxu0 0.0
    %4427 = vmatprep.subr.mxu0 0.0
    %4428 = vmatpush1.msra.mxu0 0.0
    %4429 = vmatprep.subr.mxu0 0.0
    %4430 = vmatpush1.msra.mxu0 0.0
    %4431 = vmatprep.mubr.f32.mxu0 0.0
    %4432 = vmatmul.mubr.f32.gmra.mrb[0].mxu0 %v4127
    %v4433 = vpop.f32.mrb[0].mxu0
    %v4434 = vadd.f32 0.0, %v4433
    %v4435 = vpop.f32.mrb[0].mxu0
    %v4436 = vadd.f32 0.0, %v4435
    %4437 = vdwg.mxu0
    %v4438 = vadd.f32 %v4365, %v89
    %v4439 = vadd.f32 %v4434, %v93
    %v4440 = vadd.f32 %v4436, %v97
    %v4441 = vadd.f32 %v4438, %v4292
    %v4442 = vxor.u32 %v4441, 2147483648
    %v4443 = vmul.f32 %v4442, 1.442695
    %v4444 = vpow.pop %v4443
    %v4445 = vadd.f32 %v4444, 1.0
    %v4446 = vrcp.pop %v4445
    %v4447 = vmul.f32 1.0, %v4446
    %v4448 = vadd.f32 %v4439, %v4294
    %v4449 = vxor.u32 %v4448, 2147483648
    %v4450 = vmul.f32 %v4449, 1.442695
    %v4451 = vpow.pop %v4450
    %v4452 = vadd.f32 %v4451, 1.0
    %v4453 = vrcp.pop %v4452
    %v4454 = vmul.f32 1.0, %v4453
    %v4455 = vadd.f32 %v4363, %v82
    %v4456 = vmul.f32 %v4447, %v4455
    %v4457 = vadd.f32 %v4440, %v4456
    %v4458 = vtanh.pop %v4457
    %v4459 = vsub.f32 %v4127, %v4458
    %v4460 = vmul.f32 %v4454, %v4459
    %v4461 = vadd.f32 %v4458, %v4460
    %4462 = vst [vmem:[#allocation2 + $0x38] sm:$0xff] %v4461
    %v4463 = vld [vmem:[#allocation2] sm:$0xff]
    %v4464 = vld [vmem:[#allocation2 + $0x8] sm:$0xff]
    %v4465 = vld [vmem:[#allocation2 + $0x10] sm:$0xff]
    %v4466 = vld [vmem:[#allocation2 + $0x18] sm:$0xff]
    %v4467 = vld [vmem:[#allocation2 + $0x20] sm:$0xff]
    %v4468 = vld [vmem:[#allocation2 + $0x28] sm:$0xff]
    %v4469 = vld [vmem:[#allocation2 + $0x30] sm:$0xff]
    %v4470 = vld [vmem:[#allocation2 + $0x38] sm:$0xff]
    %v4471 = vld [vmem:[%s10] sm:$0xff]
    %v4472 = vld [vmem:[%s10 + $0x8] sm:$0xff]
    %v4473 = vld [vmem:[%s10 + $0x10] sm:$0xff]
    %v4474 = vld [vmem:[%s10 + $0x18] sm:$0xff]
    %v4475 = vld [vmem:[%s10 + $0x20] sm:$0xff]
    %v4476 = vld [vmem:[%s10 + $0x28] sm:$0xff]
    %v4477 = vld [vmem:[%s10 + $0x30] sm:$0xff]
    %v4478 = vld [vmem:[%s10 + $0x38] sm:$0xff]
    %v4479 = vld [vmem:[%s10 + $0x40] sm:$0xff]
    %v4480 = vld [vmem:[%s10 + $0x48] sm:$0xff]
    %v4481 = vld [vmem:[%s10 + $0x50] sm:$0xff]
    %v4482 = vld [vmem:[%s10 + $0x58] sm:$0xff]
    %v4483 = vld [vmem:[%s10 + $0x60] sm:$0xff]
    %v4484 = vld [vmem:[%s10 + $0x68] sm:$0xff]
    %v4485 = vld [vmem:[%s10 + $0x70] sm:$0xff]
    %v4486 = vld [vmem:[%s10 + $0x78] sm:$0xff]
    %v4487 = vld [vmem:[%s11] sm:$0x1]
    %v4489 = vlaneseq
    %v4490 = vshrl.u32 %v4489, 7
    %v4491 = vsub.s32 0, %v4490
    %v4492 = vrot.slane %v4487, %v4491
    %4494 = vmatprep.subr.mxu0 0.0
    %4495 = vmatpush1.msra.mxu0 %v4471
    %4496 = vmatprep.subr.mxu0 0.0
    %4497 = vmatpush1.msra.mxu0 %v4472
    %4498 = vmatprep.subr.mxu0 0.0
    %4499 = vmatpush1.msra.mxu0 %v4473
    %4500 = vmatprep.subr.mxu0 0.0
    %4501 = vmatpush1.msra.mxu0 %v4474
    %4502 = vmatprep.subr.mxu0 0.0
    %4503 = vmatpush1.msra.mxu0 %v4475
    %4504 = vmatprep.subr.mxu0 0.0
    %4505 = vmatpush1.msra.mxu0 %v4476
    %4506 = vmatprep.subr.mxu0 0.0
    %4507 = vmatpush1.msra.mxu0 %v4477
    %4508 = vmatprep.subr.mxu0 0.0
    %4509 = vmatpush1.msra.mxu0 %v4478
    %4510 = vmatprep.subr.mxu0 0.0
    %4511 = vmatpush1.msra.mxu0 %v4479
    %4512 = vmatprep.subr.mxu0 0.0
    %4513 = vmatpush1.msra.mxu0 %v4480
    %4514 = vmatprep.subr.mxu0 0.0
    %4515 = vmatpush1.msra.mxu0 %v4481
    %4516 = vmatprep.subr.mxu0 0.0
    %4517 = vmatpush1.msra.mxu0 %v4482
    %4518 = vmatprep.subr.mxu0 0.0
    %4519 = vmatpush1.msra.mxu0 %v4483
    %4520 = vmatprep.subr.mxu0 0.0
    %4521 = vmatpush1.msra.mxu0 %v4484
    %4522 = vmatprep.subr.mxu0 0.0
    %4523 = vmatpush1.msra.mxu0 %v4485
    %4524 = vmatprep.subr.mxu0 0.0
    %4525 = vmatpush1.msra.mxu0 %v4486
    %4526 = vmatprep.subr.mxu0 0.0
    %4527 = vmatpush1.msra.mxu0 0.0
    %4528 = vmatprep.subr.mxu0 0.0
    %4529 = vmatpush1.msra.mxu0 0.0
    %4530 = vmatprep.subr.mxu0 0.0
    %4531 = vmatpush1.msra.mxu0 0.0
    %4532 = vmatprep.subr.mxu0 0.0
    %4533 = vmatpush1.msra.mxu0 0.0
    %4534 = vmatprep.subr.mxu0 0.0
    %4535 = vmatpush1.msra.mxu0 0.0
    %4536 = vmatprep.subr.mxu0 0.0
    %4537 = vmatpush1.msra.mxu0 0.0
    %4538 = vmatprep.subr.mxu0 0.0
    %4539 = vmatpush1.msra.mxu0 0.0
    %4540 = vmatprep.subr.mxu0 0.0
    %4541 = vmatpush1.msra.mxu0 0.0
    %4542 = vmatprep.subr.mxu0 0.0
    %4543 = vmatpush1.msra.mxu0 0.0
    %4544 = vmatprep.subr.mxu0 0.0
    %4545 = vmatpush1.msra.mxu0 0.0
    %4546 = vmatprep.subr.mxu0 0.0
    %4547 = vmatpush1.msra.mxu0 0.0
    %4548 = vmatprep.subr.mxu0 0.0
    %4549 = vmatpush1.msra.mxu0 0.0
    %4550 = vmatprep.subr.mxu0 0.0
    %4551 = vmatpush1.msra.mxu0 0.0
    %4552 = vmatprep.subr.mxu0 0.0
    %4553 = vmatpush1.msra.mxu0 0.0
    %4554 = vmatprep.subr.mxu0 0.0
    %4555 = vmatpush1.msra.mxu0 0.0
    %4556 = vmatprep.subr.mxu0 0.0
    %4557 = vmatpush1.msra.mxu0 0.0
    %4558 = vmatprep.mubr.f32.mxu0 0.0
    %4559 = vmatmul.mubr.f32.gmra.mrb[0].mxu0 %v4463
    %v4560 = vpop.f32.mrb[0].mxu0
    %v4561 = vadd.f32 %v4492, %v4560
    %v4562 = vpop.f32.mrb[0].mxu0
    %4563 = vmatprep.mubr.f32.mxu0 0.0
    %4564 = vmatmul.mubr.f32.gmra.mrb[0].mxu0 %v4464
    %v4565 = vpop.f32.mrb[0].mxu0
    %v4566 = vadd.f32 %v4492, %v4565
    %v4567 = vpop.f32.mrb[0].mxu0
    %4568 = vmatprep.mubr.f32.mxu0 0.0
    %4569 = vmatmul.mubr.f32.gmra.mrb[0].mxu0 %v4465
    %v4570 = vpop.f32.mrb[0].mxu0
    %v4571 = vadd.f32 %v4492, %v4570
    %v4572 = vpop.f32.mrb[0].mxu0
    %4573 = vmatprep.mubr.f32.mxu0 0.0
    %4574 = vmatmul.mubr.f32.gmra.mrb[0].mxu0 %v4466
    %v4575 = vpop.f32.mrb[0].mxu0
    %v4576 = vadd.f32 %v4492, %v4575
    %v4577 = vpop.f32.mrb[0].mxu0
    %4578 = vmatprep.mubr.f32.mxu0 0.0
    %4579 = vmatmul.mubr.f32.gmra.mrb[0].mxu0 %v4467
    %v4580 = vpop.f32.mrb[0].mxu0
    %v4581 = vadd.f32 %v4492, %v4580
    %v4582 = vpop.f32.mrb[0].mxu0
    %4583 = vmatprep.mubr.f32.mxu0 0.0
    %4584 = vmatmul.mubr.f32.gmra.mrb[0].mxu0 %v4468
    %v4585 = vpop.f32.mrb[0].mxu0
    %v4586 = vadd.f32 %v4492, %v4585
    %v4587 = vpop.f32.mrb[0].mxu0
    %4588 = vmatprep.mubr.f32.mxu0 0.0
    %4589 = vmatmul.mubr.f32.gmra.mrb[0].mxu0 %v4469
    %v4590 = vpop.f32.mrb[0].mxu0
    %v4591 = vadd.f32 %v4492, %v4590
    %v4592 = vpop.f32.mrb[0].mxu0
    %4593 = vmatprep.mubr.f32.mxu0 0.0
    %4594 = vmatmul.mubr.f32.gmra.mrb[0].mxu0 %v4470
    %v4595 = vpop.f32.mrb[0].mxu0
    %v4596 = vadd.f32 %v4492, %v4595
    %v4597 = vpop.f32.mrb[0].mxu0
    %4598 = vdwg.mxu0
    %4599 = vst [vmem:[#allocation8] sm:$0xff] %v4561
    %4600 = vst [vmem:[#allocation8 + $0x8] sm:$0xff] %v4566
    %4601 = vst [vmem:[#allocation8 + $0x10] sm:$0xff] %v4571
    %4602 = vst [vmem:[#allocation8 + $0x18] sm:$0xff] %v4576
    %4603 = vst [vmem:[#allocation8 + $0x20] sm:$0xff] %v4581
    %4604 = vst [vmem:[#allocation8 + $0x28] sm:$0xff] %v4586
    %4605 = vst [vmem:[#allocation8 + $0x30] sm:$0xff] %v4591
    %4606 = vst [vmem:[#allocation8 + $0x38] sm:$0xff] %v4596
    // Predicated region
    $region58: #{tpu_custom_call.1} parent=1 // pred_check
      _
    $region59: #{tpu_custom_call.1} parent=1 // pred_check_branch
      %4608 = sbr.rel (0) target = $region61
    $region60: #{tpu_custom_call.1} parent=1 // pred_region
      %s4610 = ssub.s32 1024, 1024
      %4611 = vsyncadd [#allocation5], %s4610
      %s4612 = sshll.u32 [#allocation8], 4
      %s4613 = int_to_ptr.vmem [resolvable:$true] %s4612
      %4618 = dma.vmem_to_hbm [thread:$0]  %s4613, 1024, %s12, [#allocation5], 128, 128, 8
    $region61: #{tpu_custom_call.1} parent=1 // pred_fallthru
      _
    // Predicated region
    $region62: #{tpu_custom_call.1} parent=1 // pred_check
      _
    $region63: #{tpu_custom_call.1} parent=1 // pred_check_branch
      %4620 = sbr.rel (0) target = $region65
    $region64: #{tpu_custom_call.1} parent=1 // pred_region
      %4621 = dma.done [#allocation5], 1024
    $region65: #{tpu_custom_call.1} parent=1 // pred_fallthru
      _
    %4622 = vsyncpa [#allocation4], 1
    %4623 = vsyncpa [#allocation7], 1
    %4624 = vsyncpa [#allocation5], 1

</llo_original>
